<compile_context>
chip_gen: v7x
topology: tpu7x:2x2x1
jax: 0.10.0
libtpu: 0.0.40
codegen_flags: <defaults>
</compile_context>

<pallas_src>
import math

import jax
import jax.numpy as jnp
from jax import lax
from jax.experimental import pallas as pl
from jax.experimental.pallas import tpu as pltpu  # noqa: F401  (TPU backend)

# ----------------------- config -----------------------
B, S = 2, 8              # batch, sequence length
T = B * S                # total tokens
H = 32                   # hidden size
NH, DH = 4, 8            # heads, head dim (NH*DH == H)
INTER = 64               # intermediate (FFN) size
LAYERS = 2               # encoder layers
VOCAB = 50
MAX_POS = 16
TYPE_VOCAB = 2
PROJ = 128               # contrastive projection dim (lane-dense output)
LORA_R = 8
LORA_ALPHA = 16
LORA_SCALE = LORA_ALPHA / LORA_R
LN_EPS = 1e-12
ATT_SCALE = 1.0 / math.sqrt(DH)
QKV_COLS = 128           # padded width of the fused [Wq|Wk|Wv|Aq|Av] output
assert 3 * H + 2 * LORA_R <= QKV_COLS


# ----------------------- in-kernel math helpers -----------------------

def _layernorm(x, g, b):
    mean = jnp.mean(x, axis=-1, keepdims=True)
    var = jnp.mean(jnp.square(x - mean), axis=-1, keepdims=True)
    return (x - mean) * lax.rsqrt(var + LN_EPS) * g + b


def _gelu(y):
    # TODO(synk): HF BERT default is exact erf-GELU; tanh approximation used here.
    c = math.sqrt(2.0 / math.pi)
    return 0.5 * y * (1.0 + jnp.tanh(c * (y + 0.044715 * y * y * y)))


# ----------------------- fused encoder kernel -----------------------

def _encoder_kernel(
    x_emb_ref, bias_ref, eg_ref, eb_ref,
    qkvw_ref,      # (LAYERS, H, 128) bf16   fused [Wq|Wk|Wv|Aq|Av|pad]
    lora_bT_ref,   # (LAYERS, 2H, 2R) bf16   block-diag [Bq^T 0; 0 Bv^T]
    aow_ref,       # (LAYERS, NH, DH, H) bf16
    iw_ref,        # (LAYERS, H, INTER) bf16
    ow_ref,        # (LAYERS, INTER, H) bf16
    vec_ref,       # (LAYERS, 8, 128) f32   packed per-layer 1-row operands
    pw_ref,        # (H, PROJ) bf16
    pb_ref,        # (1, PROJ) f32
    out_ref,       # (B, PROJ) f32
):
    bf16 = jnp.bfloat16

    # Loaded / computed once (not per layer).
    bias = bias_ref[...]                                           # (T, T) f32
    x0 = _layernorm(x_emb_ref[...], eg_ref[...], eb_ref[...])      # (T, H) f32

    def layer_body(l, x):
        vecs = vec_ref[l]                                          # (8, 128) f32
        xb = x.astype(bf16)

        # ---- one fused matmul: [Q | K | V | x@Aq | x@Av | pad]  (T, 128) ----
        qkvl = jnp.dot(xb, qkvw_ref[l],
                       preferred_element_type=jnp.float32) + vecs[0:1, :]

        # Feature-major view: sublane slices only from here on.
        qkvlT = qkvl.T                                             # (128, T)
        xaT = qkvlT[3 * H:3 * H + 2 * LORA_R, :]                   # (2R, T)
        updT = LORA_SCALE * jnp.dot(lora_bT_ref[l], xaT.astype(bf16),
                                    preferred_element_type=jnp.float32)  # (2H, T)

        qT = qkvlT[0:H, :] + updT[0:H, :]                          # (H, T)
        kT = qkvlT[H:2 * H, :]
        vT = qkvlT[2 * H:3 * H, :] + updT[H:2 * H, :]

        # ---- batched multi-head attention (all heads / all tokens at once) ----
        q3 = jnp.transpose(qT.reshape(NH, DH, T), (0, 2, 1))       # (NH, T, DH)
        k3 = kT.reshape(NH, DH, T)                                 # (NH, DH, T)
        v3 = vT.reshape(NH, DH, T)                                 # (NH, DH, T)

        s = jnp.einsum('hqd,hdk->hqk', q3.astype(bf16), k3.astype(bf16),
                       preferred_element_type=jnp.float32) * ATT_SCALE + bias
        s = s - jnp.max(s, axis=-1, keepdims=True)
        p = jnp.exp(s)
        p = p * pl.reciprocal(jnp.sum(p, axis=-1, keepdims=True), approx=True)

        ctx = jnp.einsum('hqk,hdk->hqd', p.astype(bf16), v3.astype(bf16),
                         preferred_element_type=jnp.float32)       # (NH, T, DH)

        # Attention-output projection folded per head block of Wo, summed over heads:
        # sum_h ctx_h @ Wo[h*DH:(h+1)*DH, :] == concat_h(ctx_h) @ Wo
        attn = jnp.sum(
            jnp.einsum('hqd,hdo->hqo', ctx.astype(bf16), aow_ref[l],
                       preferred_element_type=jnp.float32),
            axis=0) + vecs[1:2, 0:H]                               # (T, H)

        # ---- add & norm, FFN, add & norm (all f32 elementwise) ----
        x1 = _layernorm(attn + x, vecs[2:3, 0:H], vecs[3:4, 0:H])
        inter = _gelu(jnp.dot(x1.astype(bf16), iw_ref[l],
                              preferred_element_type=jnp.float32) + vecs[4:5, 0:INTER])
        ffn = jnp.dot(inter.astype(bf16), ow_ref[l],
                      preferred_element_type=jnp.float32) + vecs[5:6, 0:H]
        return _layernorm(ffn + x1, vecs[6:7, 0:H], vecs[7:8, 0:H])

    xf = lax.fori_loop(0, LAYERS, layer_body, x0, unroll=True)     # (T, H) f32

    # ---- CLS rows -> single (B, H) @ (H, 128) matmul, one lane-dense store ----
    cls = jnp.concatenate([xf[b * S:b * S + 1, :] for b in range(B)], axis=0)  # (B, H)
    out_ref[...] = (jnp.dot(cls.astype(bf16), pw_ref[...],
                            preferred_element_type=jnp.float32)
                    + pb_ref[...]).astype(out_ref.dtype)


# ----------------------- wrapper -----------------------

def prepare_params(p):
    """Pack raw per-layer weights into the fused / lane-dense layout the kernel wants."""
    bf16 = jnp.bfloat16

    # Fused QKV + LoRA-A weight, padded to 128 output lanes.
    big_w = jnp.concatenate([p["qkv_w"], p["q_lora_a"], p["v_lora_a"]], axis=2)
    big_w = jnp.pad(big_w, ((0, 0), (0, 0), (0, QKV_COLS - big_w.shape[2])))

    # Block-diagonal fused LoRA-B, stored transposed: (LAYERS, 2H, 2R).
    zR = jnp.zeros((LAYERS, H, LORA_R), jnp.float32)
    lora_bT = jnp.concatenate([
        jnp.concatenate([jnp.swapaxes(p["q_lora_b"], 1, 2), zR], axis=2),
        jnp.concatenate([zR, jnp.swapaxes(p["v_lora_b"], 1, 2)], axis=2),
    ], axis=1)

    # Packed per-layer 1-row operands -> (LAYERS, 8, 128).
    def row(v):
        return jnp.pad(v, ((0, 0), (0, 0), (0, 128 - v.shape[2])))
    layer_vecs = jnp.concatenate([
        row(p["qkv_b"]), row(p["ao_b"]), row(p["ln1_g"]), row(p["ln1_b"]),
        row(p["i_b"]), row(p["o_b"]), row(p["ln2_g"]), row(p["ln2_b"]),
    ], axis=1).astype(jnp.float32)

    return {
        "word_emb": p["word_emb"], "pos_emb": p["pos_emb"], "type_emb": p["type_emb"],
        "emb_ln_g": p["emb_ln_g"], "emb_ln_b": p["emb_ln_b"],
        "qkv_lora_w": big_w.astype(bf16),
        "lora_bT": lora_bT.astype(bf16),
        "ao_w4": p["ao_w"].reshape(LAYERS, NH, DH, H).astype(bf16),
        "i_w": p["i_w"].astype(bf16),
        "o_w": p["o_w"].astype(bf16),
        "layer_vecs": layer_vecs,
        "proj_w": p["proj_w"].astype(bf16),
        "proj_b": p["proj_b"].astype(jnp.float32),
    }


def sentence_bert_contrastive(packed, input_ids, attention_mask):
    # Embedding gathers are XLA glue (data-dependent lookup); everything else
    # runs inside one fused pallas_call.
    token_type_ids = jnp.zeros_like(input_ids)
    we = packed["word_emb"][input_ids]                       # (B, S, H)
    pe = packed["pos_emb"][jnp.arange(S)][None, :, :]        # (1, S, H)
    te = packed["type_emb"][token_type_ids]                  # (B, S, H)
    x_emb = (we + pe + te).reshape(T, H).astype(jnp.float32)

    # Precomputed additive mask (HF -10000 style) combining key-padding and a
    # block-diagonal batch mask so all B*S tokens can attend in one batched softmax.
    pos = jnp.arange(T)
    same_batch = (pos[:, None] // S) == (pos[None, :] // S)
    key_keep = attention_mask.reshape(T).astype(bool)
    attn_bias = jnp.where(same_batch & key_keep[None, :], 0.0, -10000.0
                          ).astype(jnp.float32)              # (T, T)

    # Single invocation, no grid: every operand fits whole in VMEM at these shapes.
    return pl.pallas_call(
        _encoder_kernel,
        out_shape=jax.ShapeDtypeStruct((B, PROJ), jnp.float32),
    )(
        x_emb, attn_bias, packed["emb_ln_g"], packed["emb_ln_b"],
        packed["qkv_lora_w"], packed["lora_bT"], packed["ao_w4"],
        packed["i_w"], packed["o_w"], packed["layer_vecs"],
        packed["proj_w"], packed["proj_b"],
    )


# ----------------------- parameter init -----------------------

def init_params(key):
    keys = iter(jax.random.split(key, 32))

    def nrm(k, shape):
        return 0.02 * jax.random.normal(k, shape, dtype=jnp.float32)

    p = {}
    p["word_emb"] = nrm(next(keys), (VOCAB, H))
    p["pos_emb"] = nrm(next(keys), (MAX_POS, H))
    p["type_emb"] = nrm(next(keys), (TYPE_VOCAB, H))
    p["emb_ln_g"] = jnp.ones((1, H), jnp.float32)
    p["emb_ln_b"] = jnp.zeros((1, H), jnp.float32)

    # Per-layer weights stacked on a leading LAYERS axis; stored [in, out]
    # (transpose of torch Linear storage). Q/K/V fused into one [H, 3H] weight.
    p["qkv_w"] = nrm(next(keys), (LAYERS, H, 3 * H))
    p["qkv_b"] = jnp.zeros((LAYERS, 1, 3 * H), jnp.float32)
    # LoRA adapters on query and value (PEFT inits B to zeros; small random
    # values used here so the low-rank path is numerically exercised).
    p["q_lora_a"] = nrm(next(keys), (LAYERS, H, LORA_R))
    p["q_lora_b"] = nrm(next(keys), (LAYERS, LORA_R, H))
    p["v_lora_a"] = nrm(next(keys), (LAYERS, H, LORA_R))
    p["v_lora_b"] = nrm(next(keys), (LAYERS, LORA_R, H))
    p["ao_w"] = nrm(next(keys), (LAYERS, H, H))
    p["ao_b"] = jnp.zeros((LAYERS, 1, H), jnp.float32)
    p["ln1_g"] = jnp.ones((LAYERS, 1, H), jnp.float32)
    p["ln1_b"] = jnp.zeros((LAYERS, 1, H), jnp.float32)
    p["i_w"] = nrm(next(keys), (LAYERS, H, INTER))
    p["i_b"] = jnp.zeros((LAYERS, 1, INTER), jnp.float32)
    p["o_w"] = nrm(next(keys), (LAYERS, INTER, H))
    p["o_b"] = jnp.zeros((LAYERS, 1, H), jnp.float32)
    p["ln2_g"] = jnp.ones((LAYERS, 1, H), jnp.float32)
    p["ln2_b"] = jnp.zeros((LAYERS, 1, H), jnp.float32)

    p["proj_w"] = nrm(next(keys), (H, PROJ))
    p["proj_b"] = jnp.zeros((1, PROJ), jnp.float32)
    return p


# ----------------------- main -----------------------

if __name__ == "__main__":
    root = jax.random.PRNGKey(0)
    k_param, k_ids = jax.random.split(root)

    params = prepare_params(init_params(k_param))

    input_ids = jax.random.randint(k_ids, (B, S), 0, VOCAB, dtype=jnp.int32)
    # Mask out the tail of the second example (padding tokens).
    attention_mask = jnp.array(
        [[1, 1, 1, 1, 1, 1, 1, 1],
         [1, 1, 1, 1, 1, 0, 0, 0]], dtype=jnp.int32)

    emb = sentence_bert_contrastive(params, input_ids, attention_mask)
    emb = jax.block_until_ready(emb)

    assert emb.shape == (B, PROJ), emb.shape
    assert bool(jnp.all(jnp.isfinite(emb)))
    print("KERNEL_OK")
</pallas_src>

<mosaic_0001>
module attributes {stable_mosaic.version = 11 : i64} {
  func.func @_encoder_kernel(%arg0: memref<16x32xf32, #tpu.memory_space<vmem>>, %arg1: memref<16x16xf32, #tpu.memory_space<vmem>>, %arg2: memref<1x32xf32, #tpu.memory_space<vmem>>, %arg3: memref<1x32xf32, #tpu.memory_space<vmem>>, %arg4: memref<2x32x128xbf16, #tpu.memory_space<vmem>>, %arg5: memref<2x64x16xbf16, #tpu.memory_space<vmem>>, %arg6: memref<2x4x8x32xbf16, #tpu.memory_space<vmem>>, %arg7: memref<2x32x64xbf16, #tpu.memory_space<vmem>>, %arg8: memref<2x64x32xbf16, #tpu.memory_space<vmem>>, %arg9: memref<2x8x128xf32, #tpu.memory_space<vmem>>, %arg10: memref<32x128xbf16, #tpu.memory_space<vmem>>, %arg11: memref<1x128xf32, #tpu.memory_space<vmem>>, %arg12: memref<2x128xf32, #tpu.memory_space<vmem>>) attributes {dimension_semantics = [], scalar_prefetch = 0 : i64, scratch_operands = 0 : i64, tpu.core_type = #tpu.core_type<tc>} {
    %c0 = arith.constant 0 : index
    %c0_0 = arith.constant 0 : index
    %0 = vector.load %arg1[%c0, %c0_0] : memref<16x16xf32, #tpu.memory_space<vmem>>, vector<16x16xf32>
    %c0_1 = arith.constant 0 : index
    %c0_2 = arith.constant 0 : index
    %1 = vector.load %arg0[%c0_1, %c0_2] : memref<16x32xf32, #tpu.memory_space<vmem>>, vector<16x32xf32>
    %c0_3 = arith.constant 0 : index
    %c0_4 = arith.constant 0 : index
    %2 = vector.load %arg2[%c0_3, %c0_4] : memref<1x32xf32, #tpu.memory_space<vmem>>, vector<1x32xf32>
    %c0_5 = arith.constant 0 : index
    %c0_6 = arith.constant 0 : index
    %3 = vector.load %arg3[%c0_5, %c0_6] : memref<1x32xf32, #tpu.memory_space<vmem>>, vector<1x32xf32>
    %cst = arith.constant dense<0.000000e+00> : vector<16xf32>
    %4 = vector.multi_reduction <add>, %1, %cst [1] : vector<16x32xf32> to vector<16xf32>
    %5 = vector.shape_cast %4 : vector<16xf32> to vector<16x1xf32>
    %cst_7 = arith.constant 3.200000e+01 : f32
    %6 = vector.broadcast %cst_7 : f32 to vector<16x1xf32>
    %7 = arith.divf %5, %6 : vector<16x1xf32>
    %8 = vector.broadcast %7 : vector<16x1xf32> to vector<16x32xf32>
    %9 = arith.subf %1, %8 : vector<16x32xf32>
    %10 = arith.mulf %9, %9 : vector<16x32xf32>
    %cst_8 = arith.constant dense<0.000000e+00> : vector<16xf32>
    %11 = vector.multi_reduction <add>, %10, %cst_8 [1] : vector<16x32xf32> to vector<16xf32>
    %12 = vector.shape_cast %11 : vector<16xf32> to vector<16x1xf32>
    %cst_9 = arith.constant 3.200000e+01 : f32
    %13 = vector.broadcast %cst_9 : f32 to vector<16x1xf32>
    %14 = arith.divf %12, %13 : vector<16x1xf32>
    %15 = vector.broadcast %7 : vector<16x1xf32> to vector<16x32xf32>
    %16 = arith.subf %1, %15 : vector<16x32xf32>
    %cst_10 = arith.constant 9.99999996E-13 : f32
    %17 = vector.broadcast %cst_10 : f32 to vector<16x1xf32>
    %18 = arith.addf %14, %17 : vector<16x1xf32>
    %19 = math.rsqrt %18 : vector<16x1xf32>
    %20 = vector.broadcast %19 : vector<16x1xf32> to vector<16x32xf32>
    %21 = arith.mulf %16, %20 : vector<16x32xf32>
    %22 = vector.broadcast %2 : vector<1x32xf32> to vector<16x32xf32>
    %23 = arith.mulf %21, %22 : vector<16x32xf32>
    %24 = vector.broadcast %3 : vector<1x32xf32> to vector<16x32xf32>
    %25 = arith.addf %23, %24 : vector<16x32xf32>
    %c0_i32 = arith.constant 0 : i32
    %26 = arith.index_cast %c0_i32 : i32 to index
    %c0_11 = arith.constant 0 : index
    %c0_12 = arith.constant 0 : index
    %27 = vector.load %arg9[%26, %c0_11, %c0_12] : memref<2x8x128xf32, #tpu.memory_space<vmem>>, vector<1x8x128xf32>
    %28 = vector.shape_cast %27 : vector<1x8x128xf32> to vector<8x128xf32>
    %29 = arith.truncf %25 : vector<16x32xf32> to vector<16x32xbf16>
    %30 = arith.index_cast %c0_i32 : i32 to index
    %c0_13 = arith.constant 0 : index
    %c0_14 = arith.constant 0 : index
    %31 = vector.load %arg4[%30, %c0_13, %c0_14] : memref<2x32x128xbf16, #tpu.memory_space<vmem>>, vector<1x32x128xbf16>
    %32 = vector.shape_cast %31 : vector<1x32x128xbf16> to vector<32x128xbf16>
    %cst_15 = arith.constant dense<0.000000e+00> : vector<16x128xf32>
    %33 = tpu.matmul %29, %32, %cst_15 {dimension_numbers = #tpu.dot_dimension_numbers<[1], [0], [0], [1], [0, 0, 1, 1], [], []>} : vector<16x32xbf16>, vector<32x128xbf16>, vector<16x128xf32> -> vector<16x128xf32>
    %34 = vector.extract_strided_slice %28 {offsets = [0, 0], sizes = [1, 128], strides = [1, 1]} : vector<8x128xf32> to vector<1x128xf32>
    %35 = vector.broadcast %34 : vector<1x128xf32> to vector<16x128xf32>
    %36 = arith.addf %33, %35 : vector<16x128xf32>
    %37 = tpu.transpose %36, [1, 0] : vector<16x128xf32> -> vector<128x16xf32>
    %38 = vector.extract_strided_slice %37 {offsets = [96, 0], sizes = [16, 16], strides = [1, 1]} : vector<128x16xf32> to vector<16x16xf32>
    %39 = arith.index_cast %c0_i32 : i32 to index
    %c0_16 = arith.constant 0 : index
    %c0_17 = arith.constant 0 : index
    %40 = vector.load %arg5[%39, %c0_16, %c0_17] : memref<2x64x16xbf16, #tpu.memory_space<vmem>>, vector<1x64x16xbf16>
    %41 = vector.shape_cast %40 : vector<1x64x16xbf16> to vector<64x16xbf16>
    %42 = arith.truncf %38 : vector<16x16xf32> to vector<16x16xbf16>
    %cst_18 = arith.constant dense<0.000000e+00> : vector<64x16xf32>
    %43 = tpu.matmul %41, %42, %cst_18 {dimension_numbers = #tpu.dot_dimension_numbers<[1], [0], [0], [1], [0, 0, 1, 1], [], []>} : vector<64x16xbf16>, vector<16x16xbf16>, vector<64x16xf32> -> vector<64x16xf32>
    %cst_19 = arith.constant 2.000000e+00 : f32
    %44 = vector.broadcast %cst_19 : f32 to vector<64x16xf32>
    %45 = arith.mulf %44, %43 : vector<64x16xf32>
    %46 = vector.extract_strided_slice %37 {offsets = [0, 0], sizes = [32, 16], strides = [1, 1]} : vector<128x16xf32> to vector<32x16xf32>
    %47 = vector.extract_strided_slice %45 {offsets = [0, 0], sizes = [32, 16], strides = [1, 1]} : vector<64x16xf32> to vector<32x16xf32>
    %48 = arith.addf %46, %47 : vector<32x16xf32>
    %49 = vector.extract_strided_slice %37 {offsets = [32, 0], sizes = [32, 16], strides = [1, 1]} : vector<128x16xf32> to vector<32x16xf32>
    %50 = vector.extract_strided_slice %37 {offsets = [64, 0], sizes = [32, 16], strides = [1, 1]} : vector<128x16xf32> to vector<32x16xf32>
    %51 = vector.extract_strided_slice %45 {offsets = [32, 0], sizes = [32, 16], strides = [1, 1]} : vector<64x16xf32> to vector<32x16xf32>
    %52 = arith.addf %50, %51 : vector<32x16xf32>
    %53 = vector.shape_cast %48 : vector<32x16xf32> to vector<4x8x16xf32>
    %54 = tpu.transpose %53, [0, 2, 1] : vector<4x8x16xf32> -> vector<4x16x8xf32>
    %55 = vector.shape_cast %49 : vector<32x16xf32> to vector<4x8x16xf32>
    %56 = vector.shape_cast %52 : vector<32x16xf32> to vector<4x8x16xf32>
    %57 = arith.truncf %54 : vector<4x16x8xf32> to vector<4x16x8xbf16>
    %58 = arith.truncf %55 : vector<4x8x16xf32> to vector<4x8x16xbf16>
    "tpu.trace_start"() <{level = 10 : i32, message = "hqd,hdk->hqk"}> : () -> ()
    %cst_20 = arith.constant dense<0.000000e+00> : vector<4x16x16xf32>
    %59 = tpu.matmul %57, %58, %cst_20 {dimension_numbers = #tpu.dot_dimension_numbers<[2], [1], [1], [2], [0, 0, 0, 1, 1, 2], [0], [0]>} : vector<4x16x8xbf16>, vector<4x8x16xbf16>, vector<4x16x16xf32> -> vector<4x16x16xf32>
    "tpu.trace_stop"() : () -> ()
    %cst_21 = arith.constant 0.353553385 : f32
    %60 = vector.broadcast %cst_21 : f32 to vector<4x16x16xf32>
    %61 = arith.mulf %59, %60 : vector<4x16x16xf32>
    %62 = vector.shape_cast %0 : vector<16x16xf32> to vector<1x16x16xf32>
    %63 = vector.broadcast %62 : vector<1x16x16xf32> to vector<4x16x16xf32>
    %64 = arith.addf %61, %63 : vector<4x16x16xf32>
    %cst_22 = arith.constant dense<0xFF800000> : vector<4x16xf32>
    %65 = vector.multi_reduction <maximumf>, %64, %cst_22 [2] : vector<4x16x16xf32> to vector<4x16xf32>
    %66 = vector.shape_cast %65 : vector<4x16xf32> to vector<4x16x1xf32>
    %67 = vector.broadcast %66 : vector<4x16x1xf32> to vector<4x16x16xf32>
    %68 = arith.subf %64, %67 : vector<4x16x16xf32>
    %69 = math.exp %68 : vector<4x16x16xf32>
    %cst_23 = arith.constant dense<0.000000e+00> : vector<4x16xf32>
    %70 = vector.multi_reduction <add>, %69, %cst_23 [2] : vector<4x16x16xf32> to vector<4x16xf32>
    %71 = vector.shape_cast %70 : vector<4x16xf32> to vector<4x16x1xf32>
    %72 = tpu.reciprocal %71 {approx = true} : vector<4x16x1xf32> -> vector<4x16x1xf32>
    %73 = vector.broadcast %72 : vector<4x16x1xf32> to vector<4x16x16xf32>
    %74 = arith.mulf %69, %73 : vector<4x16x16xf32>
    %75 = arith.truncf %74 : vector<4x16x16xf32> to vector<4x16x16xbf16>
    %76 = arith.truncf %56 : vector<4x8x16xf32> to vector<4x8x16xbf16>
    "tpu.trace_start"() <{level = 10 : i32, message = "hqk,hdk->hqd"}> : () -> ()
    %cst_24 = arith.constant dense<0.000000e+00> : vector<4x16x8xf32>
    %77 = tpu.matmul %75, %76, %cst_24 {dimension_numbers = #tpu.dot_dimension_numbers<[2], [2], [1], [1], [0, 0, 0, 1, 1, 1], [0], [0]>} : vector<4x16x16xbf16>, vector<4x8x16xbf16>, vector<4x16x8xf32> -> vector<4x16x8xf32>
    "tpu.trace_stop"() : () -> ()
    %78 = arith.truncf %77 : vector<4x16x8xf32> to vector<4x16x8xbf16>
    %79 = arith.index_cast %c0_i32 : i32 to index
    %c0_25 = arith.constant 0 : index
    %c0_26 = arith.constant 0 : index
    %c0_27 = arith.constant 0 : index
    %80 = vector.load %arg6[%79, %c0_25, %c0_26, %c0_27] : memref<2x4x8x32xbf16, #tpu.memory_space<vmem>>, vector<1x4x8x32xbf16>
    %81 = vector.shape_cast %80 : vector<1x4x8x32xbf16> to vector<4x8x32xbf16>
    "tpu.trace_start"() <{level = 10 : i32, message = "hqd,hdo->hqo"}> : () -> ()
    %cst_28 = arith.constant dense<0.000000e+00> : vector<4x16x32xf32>
    %82 = tpu.matmul %78, %81, %cst_28 {dimension_numbers = #tpu.dot_dimension_numbers<[2], [1], [1], [2], [0, 0, 0, 1, 1, 2], [0], [0]>} : vector<4x16x8xbf16>, vector<4x8x32xbf16>, vector<4x16x32xf32> -> vector<4x16x32xf32>
    "tpu.trace_stop"() : () -> ()
    %cst_29 = arith.constant dense<0.000000e+00> : vector<16x32xf32>
    %83 = vector.multi_reduction <add>, %82, %cst_29 [0] : vector<4x16x32xf32> to vector<16x32xf32>
    %84 = vector.extract_strided_slice %28 {offsets = [1, 0], sizes = [1, 32], strides = [1, 1]} : vector<8x128xf32> to vector<1x32xf32>
    %85 = vector.broadcast %84 : vector<1x32xf32> to vector<16x32xf32>
    %86 = arith.addf %83, %85 : vector<16x32xf32>
    %87 = arith.addf %86, %25 : vector<16x32xf32>
    %88 = vector.extract_strided_slice %28 {offsets = [2, 0], sizes = [1, 32], strides = [1, 1]} : vector<8x128xf32> to vector<1x32xf32>
    %89 = vector.extract_strided_slice %28 {offsets = [3, 0], sizes = [1, 32], strides = [1, 1]} : vector<8x128xf32> to vector<1x32xf32>
    %cst_30 = arith.constant dense<0.000000e+00> : vector<16xf32>
    %90 = vector.multi_reduction <add>, %87, %cst_30 [1] : vector<16x32xf32> to vector<16xf32>
    %91 = vector.shape_cast %90 : vector<16xf32> to vector<16x1xf32>
    %cst_31 = arith.constant 3.200000e+01 : f32
    %92 = vector.broadcast %cst_31 : f32 to vector<16x1xf32>
    %93 = arith.divf %91, %92 : vector<16x1xf32>
    %94 = vector.broadcast %93 : vector<16x1xf32> to vector<16x32xf32>
    %95 = arith.subf %87, %94 : vector<16x32xf32>
    %96 = arith.mulf %95, %95 : vector<16x32xf32>
    %cst_32 = arith.constant dense<0.000000e+00> : vector<16xf32>
    %97 = vector.multi_reduction <add>, %96, %cst_32 [1] : vector<16x32xf32> to vector<16xf32>
    %98 = vector.shape_cast %97 : vector<16xf32> to vector<16x1xf32>
    %cst_33 = arith.constant 3.200000e+01 : f32
    %99 = vector.broadcast %cst_33 : f32 to vector<16x1xf32>
    %100 = arith.divf %98, %99 : vector<16x1xf32>
    %101 = vector.broadcast %93 : vector<16x1xf32> to vector<16x32xf32>
    %102 = arith.subf %87, %101 : vector<16x32xf32>
    %cst_34 = arith.constant 9.99999996E-13 : f32
    %103 = vector.broadcast %cst_34 : f32 to vector<16x1xf32>
    %104 = arith.addf %100, %103 : vector<16x1xf32>
    %105 = math.rsqrt %104 : vector<16x1xf32>
    %106 = vector.broadcast %105 : vector<16x1xf32> to vector<16x32xf32>
    %107 = arith.mulf %102, %106 : vector<16x32xf32>
    %108 = vector.broadcast %88 : vector<1x32xf32> to vector<16x32xf32>
    %109 = arith.mulf %107, %108 : vector<16x32xf32>
    %110 = vector.broadcast %89 : vector<1x32xf32> to vector<16x32xf32>
    %111 = arith.addf %109, %110 : vector<16x32xf32>
    %112 = arith.truncf %111 : vector<16x32xf32> to vector<16x32xbf16>
    %113 = arith.index_cast %c0_i32 : i32 to index
    %c0_35 = arith.constant 0 : index
    %c0_36 = arith.constant 0 : index
    %114 = vector.load %arg7[%113, %c0_35, %c0_36] : memref<2x32x64xbf16, #tpu.memory_space<vmem>>, vector<1x32x64xbf16>
    %115 = vector.shape_cast %114 : vector<1x32x64xbf16> to vector<32x64xbf16>
    %cst_37 = arith.constant dense<0.000000e+00> : vector<16x64xf32>
    %116 = tpu.matmul %112, %115, %cst_37 {dimension_numbers = #tpu.dot_dimension_numbers<[1], [0], [0], [1], [0, 0, 1, 1], [], []>} : vector<16x32xbf16>, vector<32x64xbf16>, vector<16x64xf32> -> vector<16x64xf32>
    %117 = vector.extract_strided_slice %28 {offsets = [4, 0], sizes = [1, 64], strides = [1, 1]} : vector<8x128xf32> to vector<1x64xf32>
    %118 = vector.broadcast %117 : vector<1x64xf32> to vector<16x64xf32>
    %119 = arith.addf %116, %118 : vector<16x64xf32>
    %cst_38 = arith.constant 5.000000e-01 : f32
    %120 = vector.broadcast %cst_38 : f32 to vector<16x64xf32>
    %121 = arith.mulf %120, %119 : vector<16x64xf32>
    %cst_39 = arith.constant 4.471500e-02 : f32
    %122 = vector.broadcast %cst_39 : f32 to vector<16x64xf32>
    %123 = arith.mulf %122, %119 : vector<16x64xf32>
    %124 = arith.mulf %123, %119 : vector<16x64xf32>
    %125 = arith.mulf %124, %119 : vector<16x64xf32>
    %126 = arith.addf %119, %125 : vector<16x64xf32>
    %cst_40 = arith.constant 0.797884583 : f32
    %127 = vector.broadcast %cst_40 : f32 to vector<16x64xf32>
    %128 = arith.mulf %127, %126 : vector<16x64xf32>
    %129 = math.tanh %128 : vector<16x64xf32>
    %cst_41 = arith.constant 1.000000e+00 : f32
    %130 = vector.broadcast %cst_41 : f32 to vector<16x64xf32>
    %131 = arith.addf %130, %129 : vector<16x64xf32>
    %132 = arith.mulf %121, %131 : vector<16x64xf32>
    %133 = arith.truncf %132 : vector<16x64xf32> to vector<16x64xbf16>
    %134 = arith.index_cast %c0_i32 : i32 to index
    %c0_42 = arith.constant 0 : index
    %c0_43 = arith.constant 0 : index
    %135 = vector.load %arg8[%134, %c0_42, %c0_43] : memref<2x64x32xbf16, #tpu.memory_space<vmem>>, vector<1x64x32xbf16>
    %136 = vector.shape_cast %135 : vector<1x64x32xbf16> to vector<64x32xbf16>
    %cst_44 = arith.constant dense<0.000000e+00> : vector<16x32xf32>
    %137 = tpu.matmul %133, %136, %cst_44 {dimension_numbers = #tpu.dot_dimension_numbers<[1], [0], [0], [1], [0, 0, 1, 1], [], []>} : vector<16x64xbf16>, vector<64x32xbf16>, vector<16x32xf32> -> vector<16x32xf32>
    %138 = vector.extract_strided_slice %28 {offsets = [5, 0], sizes = [1, 32], strides = [1, 1]} : vector<8x128xf32> to vector<1x32xf32>
    %139 = vector.broadcast %138 : vector<1x32xf32> to vector<16x32xf32>
    %140 = arith.addf %137, %139 : vector<16x32xf32>
    %141 = arith.addf %140, %111 : vector<16x32xf32>
    %142 = vector.extract_strided_slice %28 {offsets = [6, 0], sizes = [1, 32], strides = [1, 1]} : vector<8x128xf32> to vector<1x32xf32>
    %143 = vector.extract_strided_slice %28 {offsets = [7, 0], sizes = [1, 32], strides = [1, 1]} : vector<8x128xf32> to vector<1x32xf32>
    %cst_45 = arith.constant dense<0.000000e+00> : vector<16xf32>
    %144 = vector.multi_reduction <add>, %141, %cst_45 [1] : vector<16x32xf32> to vector<16xf32>
    %145 = vector.shape_cast %144 : vector<16xf32> to vector<16x1xf32>
    %cst_46 = arith.constant 3.200000e+01 : f32
    %146 = vector.broadcast %cst_46 : f32 to vector<16x1xf32>
    %147 = arith.divf %145, %146 : vector<16x1xf32>
    %148 = vector.broadcast %147 : vector<16x1xf32> to vector<16x32xf32>
    %149 = arith.subf %141, %148 : vector<16x32xf32>
    %150 = arith.mulf %149, %149 : vector<16x32xf32>
    %cst_47 = arith.constant dense<0.000000e+00> : vector<16xf32>
    %151 = vector.multi_reduction <add>, %150, %cst_47 [1] : vector<16x32xf32> to vector<16xf32>
    %152 = vector.shape_cast %151 : vector<16xf32> to vector<16x1xf32>
    %cst_48 = arith.constant 3.200000e+01 : f32
    %153 = vector.broadcast %cst_48 : f32 to vector<16x1xf32>
    %154 = arith.divf %152, %153 : vector<16x1xf32>
    %155 = vector.broadcast %147 : vector<16x1xf32> to vector<16x32xf32>
    %156 = arith.subf %141, %155 : vector<16x32xf32>
    %cst_49 = arith.constant 9.99999996E-13 : f32
    %157 = vector.broadcast %cst_49 : f32 to vector<16x1xf32>
    %158 = arith.addf %154, %157 : vector<16x1xf32>
    %159 = math.rsqrt %158 : vector<16x1xf32>
    %160 = vector.broadcast %159 : vector<16x1xf32> to vector<16x32xf32>
    %161 = arith.mulf %156, %160 : vector<16x32xf32>
    %162 = vector.broadcast %142 : vector<1x32xf32> to vector<16x32xf32>
    %163 = arith.mulf %161, %162 : vector<16x32xf32>
    %164 = vector.broadcast %143 : vector<1x32xf32> to vector<16x32xf32>
    %165 = arith.addf %163, %164 : vector<16x32xf32>
    %c1_i32 = arith.constant 1 : i32
    %166 = arith.index_cast %c1_i32 : i32 to index
    %c0_50 = arith.constant 0 : index
    %c0_51 = arith.constant 0 : index
    %167 = vector.load %arg9[%166, %c0_50, %c0_51] : memref<2x8x128xf32, #tpu.memory_space<vmem>>, vector<1x8x128xf32>
    %168 = vector.shape_cast %167 : vector<1x8x128xf32> to vector<8x128xf32>
    %169 = arith.truncf %165 : vector<16x32xf32> to vector<16x32xbf16>
    %170 = arith.index_cast %c1_i32 : i32 to index
    %c0_52 = arith.constant 0 : index
    %c0_53 = arith.constant 0 : index
    %171 = vector.load %arg4[%170, %c0_52, %c0_53] : memref<2x32x128xbf16, #tpu.memory_space<vmem>>, vector<1x32x128xbf16>
    %172 = vector.shape_cast %171 : vector<1x32x128xbf16> to vector<32x128xbf16>
    %cst_54 = arith.constant dense<0.000000e+00> : vector<16x128xf32>
    %173 = tpu.matmul %169, %172, %cst_54 {dimension_numbers = #tpu.dot_dimension_numbers<[1], [0], [0], [1], [0, 0, 1, 1], [], []>} : vector<16x32xbf16>, vector<32x128xbf16>, vector<16x128xf32> -> vector<16x128xf32>
    %174 = vector.extract_strided_slice %168 {offsets = [0, 0], sizes = [1, 128], strides = [1, 1]} : vector<8x128xf32> to vector<1x128xf32>
    %175 = vector.broadcast %174 : vector<1x128xf32> to vector<16x128xf32>
    %176 = arith.addf %173, %175 : vector<16x128xf32>
    %177 = tpu.transpose %176, [1, 0] : vector<16x128xf32> -> vector<128x16xf32>
    %178 = vector.extract_strided_slice %177 {offsets = [96, 0], sizes = [16, 16], strides = [1, 1]} : vector<128x16xf32> to vector<16x16xf32>
    %179 = arith.index_cast %c1_i32 : i32 to index
    %c0_55 = arith.constant 0 : index
    %c0_56 = arith.constant 0 : index
    %180 = vector.load %arg5[%179, %c0_55, %c0_56] : memref<2x64x16xbf16, #tpu.memory_space<vmem>>, vector<1x64x16xbf16>
    %181 = vector.shape_cast %180 : vector<1x64x16xbf16> to vector<64x16xbf16>
    %182 = arith.truncf %178 : vector<16x16xf32> to vector<16x16xbf16>
    %cst_57 = arith.constant dense<0.000000e+00> : vector<64x16xf32>
    %183 = tpu.matmul %181, %182, %cst_57 {dimension_numbers = #tpu.dot_dimension_numbers<[1], [0], [0], [1], [0, 0, 1, 1], [], []>} : vector<64x16xbf16>, vector<16x16xbf16>, vector<64x16xf32> -> vector<64x16xf32>
    %cst_58 = arith.constant 2.000000e+00 : f32
    %184 = vector.broadcast %cst_58 : f32 to vector<64x16xf32>
    %185 = arith.mulf %184, %183 : vector<64x16xf32>
    %186 = vector.extract_strided_slice %177 {offsets = [0, 0], sizes = [32, 16], strides = [1, 1]} : vector<128x16xf32> to vector<32x16xf32>
    %187 = vector.extract_strided_slice %185 {offsets = [0, 0], sizes = [32, 16], strides = [1, 1]} : vector<64x16xf32> to vector<32x16xf32>
    %188 = arith.addf %186, %187 : vector<32x16xf32>
    %189 = vector.extract_strided_slice %177 {offsets = [32, 0], sizes = [32, 16], strides = [1, 1]} : vector<128x16xf32> to vector<32x16xf32>
    %190 = vector.extract_strided_slice %177 {offsets = [64, 0], sizes = [32, 16], strides = [1, 1]} : vector<128x16xf32> to vector<32x16xf32>
    %191 = vector.extract_strided_slice %185 {offsets = [32, 0], sizes = [32, 16], strides = [1, 1]} : vector<64x16xf32> to vector<32x16xf32>
    %192 = arith.addf %190, %191 : vector<32x16xf32>
    %193 = vector.shape_cast %188 : vector<32x16xf32> to vector<4x8x16xf32>
    %194 = tpu.transpose %193, [0, 2, 1] : vector<4x8x16xf32> -> vector<4x16x8xf32>
    %195 = vector.shape_cast %189 : vector<32x16xf32> to vector<4x8x16xf32>
    %196 = vector.shape_cast %192 : vector<32x16xf32> to vector<4x8x16xf32>
    %197 = arith.truncf %194 : vector<4x16x8xf32> to vector<4x16x8xbf16>
    %198 = arith.truncf %195 : vector<4x8x16xf32> to vector<4x8x16xbf16>
    "tpu.trace_start"() <{level = 10 : i32, message = "hqd,hdk->hqk"}> : () -> ()
    %cst_59 = arith.constant dense<0.000000e+00> : vector<4x16x16xf32>
    %199 = tpu.matmul %197, %198, %cst_59 {dimension_numbers = #tpu.dot_dimension_numbers<[2], [1], [1], [2], [0, 0, 0, 1, 1, 2], [0], [0]>} : vector<4x16x8xbf16>, vector<4x8x16xbf16>, vector<4x16x16xf32> -> vector<4x16x16xf32>
    "tpu.trace_stop"() : () -> ()
    %cst_60 = arith.constant 0.353553385 : f32
    %200 = vector.broadcast %cst_60 : f32 to vector<4x16x16xf32>
    %201 = arith.mulf %199, %200 : vector<4x16x16xf32>
    %202 = vector.shape_cast %0 : vector<16x16xf32> to vector<1x16x16xf32>
    %203 = vector.broadcast %202 : vector<1x16x16xf32> to vector<4x16x16xf32>
    %204 = arith.addf %201, %203 : vector<4x16x16xf32>
    %cst_61 = arith.constant dense<0xFF800000> : vector<4x16xf32>
    %205 = vector.multi_reduction <maximumf>, %204, %cst_61 [2] : vector<4x16x16xf32> to vector<4x16xf32>
    %206 = vector.shape_cast %205 : vector<4x16xf32> to vector<4x16x1xf32>
    %207 = vector.broadcast %206 : vector<4x16x1xf32> to vector<4x16x16xf32>
    %208 = arith.subf %204, %207 : vector<4x16x16xf32>
    %209 = math.exp %208 : vector<4x16x16xf32>
    %cst_62 = arith.constant dense<0.000000e+00> : vector<4x16xf32>
    %210 = vector.multi_reduction <add>, %209, %cst_62 [2] : vector<4x16x16xf32> to vector<4x16xf32>
    %211 = vector.shape_cast %210 : vector<4x16xf32> to vector<4x16x1xf32>
    %212 = tpu.reciprocal %211 {approx = true} : vector<4x16x1xf32> -> vector<4x16x1xf32>
    %213 = vector.broadcast %212 : vector<4x16x1xf32> to vector<4x16x16xf32>
    %214 = arith.mulf %209, %213 : vector<4x16x16xf32>
    %215 = arith.truncf %214 : vector<4x16x16xf32> to vector<4x16x16xbf16>
    %216 = arith.truncf %196 : vector<4x8x16xf32> to vector<4x8x16xbf16>
    "tpu.trace_start"() <{level = 10 : i32, message = "hqk,hdk->hqd"}> : () -> ()
    %cst_63 = arith.constant dense<0.000000e+00> : vector<4x16x8xf32>
    %217 = tpu.matmul %215, %216, %cst_63 {dimension_numbers = #tpu.dot_dimension_numbers<[2], [2], [1], [1], [0, 0, 0, 1, 1, 1], [0], [0]>} : vector<4x16x16xbf16>, vector<4x8x16xbf16>, vector<4x16x8xf32> -> vector<4x16x8xf32>
    "tpu.trace_stop"() : () -> ()
    %218 = arith.truncf %217 : vector<4x16x8xf32> to vector<4x16x8xbf16>
    %219 = arith.index_cast %c1_i32 : i32 to index
    %c0_64 = arith.constant 0 : index
    %c0_65 = arith.constant 0 : index
    %c0_66 = arith.constant 0 : index
    %220 = vector.load %arg6[%219, %c0_64, %c0_65, %c0_66] : memref<2x4x8x32xbf16, #tpu.memory_space<vmem>>, vector<1x4x8x32xbf16>
    %221 = vector.shape_cast %220 : vector<1x4x8x32xbf16> to vector<4x8x32xbf16>
    "tpu.trace_start"() <{level = 10 : i32, message = "hqd,hdo->hqo"}> : () -> ()
    %cst_67 = arith.constant dense<0.000000e+00> : vector<4x16x32xf32>
    %222 = tpu.matmul %218, %221, %cst_67 {dimension_numbers = #tpu.dot_dimension_numbers<[2], [1], [1], [2], [0, 0, 0, 1, 1, 2], [0], [0]>} : vector<4x16x8xbf16>, vector<4x8x32xbf16>, vector<4x16x32xf32> -> vector<4x16x32xf32>
    "tpu.trace_stop"() : () -> ()
    %cst_68 = arith.constant dense<0.000000e+00> : vector<16x32xf32>
    %223 = vector.multi_reduction <add>, %222, %cst_68 [0] : vector<4x16x32xf32> to vector<16x32xf32>
    %224 = vector.extract_strided_slice %168 {offsets = [1, 0], sizes = [1, 32], strides = [1, 1]} : vector<8x128xf32> to vector<1x32xf32>
    %225 = vector.broadcast %224 : vector<1x32xf32> to vector<16x32xf32>
    %226 = arith.addf %223, %225 : vector<16x32xf32>
    %227 = arith.addf %226, %165 : vector<16x32xf32>
    %228 = vector.extract_strided_slice %168 {offsets = [2, 0], sizes = [1, 32], strides = [1, 1]} : vector<8x128xf32> to vector<1x32xf32>
    %229 = vector.extract_strided_slice %168 {offsets = [3, 0], sizes = [1, 32], strides = [1, 1]} : vector<8x128xf32> to vector<1x32xf32>
    %cst_69 = arith.constant dense<0.000000e+00> : vector<16xf32>
    %230 = vector.multi_reduction <add>, %227, %cst_69 [1] : vector<16x32xf32> to vector<16xf32>
    %231 = vector.shape_cast %230 : vector<16xf32> to vector<16x1xf32>
    %cst_70 = arith.constant 3.200000e+01 : f32
    %232 = vector.broadcast %cst_70 : f32 to vector<16x1xf32>
    %233 = arith.divf %231, %232 : vector<16x1xf32>
    %234 = vector.broadcast %233 : vector<16x1xf32> to vector<16x32xf32>
    %235 = arith.subf %227, %234 : vector<16x32xf32>
    %236 = arith.mulf %235, %235 : vector<16x32xf32>
    %cst_71 = arith.constant dense<0.000000e+00> : vector<16xf32>
    %237 = vector.multi_reduction <add>, %236, %cst_71 [1] : vector<16x32xf32> to vector<16xf32>
    %238 = vector.shape_cast %237 : vector<16xf32> to vector<16x1xf32>
    %cst_72 = arith.constant 3.200000e+01 : f32
    %239 = vector.broadcast %cst_72 : f32 to vector<16x1xf32>
    %240 = arith.divf %238, %239 : vector<16x1xf32>
    %241 = vector.broadcast %233 : vector<16x1xf32> to vector<16x32xf32>
    %242 = arith.subf %227, %241 : vector<16x32xf32>
    %cst_73 = arith.constant 9.99999996E-13 : f32
    %243 = vector.broadcast %cst_73 : f32 to vector<16x1xf32>
    %244 = arith.addf %240, %243 : vector<16x1xf32>
    %245 = math.rsqrt %244 : vector<16x1xf32>
    %246 = vector.broadcast %245 : vector<16x1xf32> to vector<16x32xf32>
    %247 = arith.mulf %242, %246 : vector<16x32xf32>
    %248 = vector.broadcast %228 : vector<1x32xf32> to vector<16x32xf32>
    %249 = arith.mulf %247, %248 : vector<16x32xf32>
    %250 = vector.broadcast %229 : vector<1x32xf32> to vector<16x32xf32>
    %251 = arith.addf %249, %250 : vector<16x32xf32>
    %252 = arith.truncf %251 : vector<16x32xf32> to vector<16x32xbf16>
    %253 = arith.index_cast %c1_i32 : i32 to index
    %c0_74 = arith.constant 0 : index
    %c0_75 = arith.constant 0 : index
    %254 = vector.load %arg7[%253, %c0_74, %c0_75] : memref<2x32x64xbf16, #tpu.memory_space<vmem>>, vector<1x32x64xbf16>
    %255 = vector.shape_cast %254 : vector<1x32x64xbf16> to vector<32x64xbf16>
    %cst_76 = arith.constant dense<0.000000e+00> : vector<16x64xf32>
    %256 = tpu.matmul %252, %255, %cst_76 {dimension_numbers = #tpu.dot_dimension_numbers<[1], [0], [0], [1], [0, 0, 1, 1], [], []>} : vector<16x32xbf16>, vector<32x64xbf16>, vector<16x64xf32> -> vector<16x64xf32>
    %257 = vector.extract_strided_slice %168 {offsets = [4, 0], sizes = [1, 64], strides = [1, 1]} : vector<8x128xf32> to vector<1x64xf32>
    %258 = vector.broadcast %257 : vector<1x64xf32> to vector<16x64xf32>
    %259 = arith.addf %256, %258 : vector<16x64xf32>
    %cst_77 = arith.constant 5.000000e-01 : f32
    %260 = vector.broadcast %cst_77 : f32 to vector<16x64xf32>
    %261 = arith.mulf %260, %259 : vector<16x64xf32>
    %cst_78 = arith.constant 4.471500e-02 : f32
    %262 = vector.broadcast %cst_78 : f32 to vector<16x64xf32>
    %263 = arith.mulf %262, %259 : vector<16x64xf32>
    %264 = arith.mulf %263, %259 : vector<16x64xf32>
    %265 = arith.mulf %264, %259 : vector<16x64xf32>
    %266 = arith.addf %259, %265 : vector<16x64xf32>
    %cst_79 = arith.constant 0.797884583 : f32
    %267 = vector.broadcast %cst_79 : f32 to vector<16x64xf32>
    %268 = arith.mulf %267, %266 : vector<16x64xf32>
    %269 = math.tanh %268 : vector<16x64xf32>
    %cst_80 = arith.constant 1.000000e+00 : f32
    %270 = vector.broadcast %cst_80 : f32 to vector<16x64xf32>
    %271 = arith.addf %270, %269 : vector<16x64xf32>
    %272 = arith.mulf %261, %271 : vector<16x64xf32>
    %273 = arith.truncf %272 : vector<16x64xf32> to vector<16x64xbf16>
    %274 = arith.index_cast %c1_i32 : i32 to index
    %c0_81 = arith.constant 0 : index
    %c0_82 = arith.constant 0 : index
    %275 = vector.load %arg8[%274, %c0_81, %c0_82] : memref<2x64x32xbf16, #tpu.memory_space<vmem>>, vector<1x64x32xbf16>
    %276 = vector.shape_cast %275 : vector<1x64x32xbf16> to vector<64x32xbf16>
    %cst_83 = arith.constant dense<0.000000e+00> : vector<16x32xf32>
    %277 = tpu.matmul %273, %276, %cst_83 {dimension_numbers = #tpu.dot_dimension_numbers<[1], [0], [0], [1], [0, 0, 1, 1], [], []>} : vector<16x64xbf16>, vector<64x32xbf16>, vector<16x32xf32> -> vector<16x32xf32>
    %278 = vector.extract_strided_slice %168 {offsets = [5, 0], sizes = [1, 32], strides = [1, 1]} : vector<8x128xf32> to vector<1x32xf32>
    %279 = vector.broadcast %278 : vector<1x32xf32> to vector<16x32xf32>
    %280 = arith.addf %277, %279 : vector<16x32xf32>
    %281 = arith.addf %280, %251 : vector<16x32xf32>
    %282 = vector.extract_strided_slice %168 {offsets = [6, 0], sizes = [1, 32], strides = [1, 1]} : vector<8x128xf32> to vector<1x32xf32>
    %283 = vector.extract_strided_slice %168 {offsets = [7, 0], sizes = [1, 32], strides = [1, 1]} : vector<8x128xf32> to vector<1x32xf32>
    %cst_84 = arith.constant dense<0.000000e+00> : vector<16xf32>
    %284 = vector.multi_reduction <add>, %281, %cst_84 [1] : vector<16x32xf32> to vector<16xf32>
    %285 = vector.shape_cast %284 : vector<16xf32> to vector<16x1xf32>
    %cst_85 = arith.constant 3.200000e+01 : f32
    %286 = vector.broadcast %cst_85 : f32 to vector<16x1xf32>
    %287 = arith.divf %285, %286 : vector<16x1xf32>
    %288 = vector.broadcast %287 : vector<16x1xf32> to vector<16x32xf32>
    %289 = arith.subf %281, %288 : vector<16x32xf32>
    %290 = arith.mulf %289, %289 : vector<16x32xf32>
    %cst_86 = arith.constant dense<0.000000e+00> : vector<16xf32>
    %291 = vector.multi_reduction <add>, %290, %cst_86 [1] : vector<16x32xf32> to vector<16xf32>
    %292 = vector.shape_cast %291 : vector<16xf32> to vector<16x1xf32>
    %cst_87 = arith.constant 3.200000e+01 : f32
    %293 = vector.broadcast %cst_87 : f32 to vector<16x1xf32>
    %294 = arith.divf %292, %293 : vector<16x1xf32>
    %295 = vector.broadcast %287 : vector<16x1xf32> to vector<16x32xf32>
    %296 = arith.subf %281, %295 : vector<16x32xf32>
    %cst_88 = arith.constant 9.99999996E-13 : f32
    %297 = vector.broadcast %cst_88 : f32 to vector<16x1xf32>
    %298 = arith.addf %294, %297 : vector<16x1xf32>
    %299 = math.rsqrt %298 : vector<16x1xf32>
    %300 = vector.broadcast %299 : vector<16x1xf32> to vector<16x32xf32>
    %301 = arith.mulf %296, %300 : vector<16x32xf32>
    %302 = vector.broadcast %282 : vector<1x32xf32> to vector<16x32xf32>
    %303 = arith.mulf %301, %302 : vector<16x32xf32>
    %304 = vector.broadcast %283 : vector<1x32xf32> to vector<16x32xf32>
    %305 = arith.addf %303, %304 : vector<16x32xf32>
    %c2_i32 = arith.constant 2 : i32
    %306 = vector.extract_strided_slice %305 {offsets = [0, 0], sizes = [1, 32], strides = [1, 1]} : vector<16x32xf32> to vector<1x32xf32>
    %307 = vector.extract_strided_slice %305 {offsets = [8, 0], sizes = [1, 32], strides = [1, 1]} : vector<16x32xf32> to vector<1x32xf32>
    %308 = tpu.concatenate %306, %307 in 0 : vector<1x32xf32>, vector<1x32xf32> -> vector<2x32xf32>
    %309 = arith.truncf %308 : vector<2x32xf32> to vector<2x32xbf16>
    %c0_89 = arith.constant 0 : index
    %c0_90 = arith.constant 0 : index
    %310 = vector.load %arg10[%c0_89, %c0_90] : memref<32x128xbf16, #tpu.memory_space<vmem>>, vector<32x128xbf16>
    %cst_91 = arith.constant dense<0.000000e+00> : vector<2x128xf32>
    %311 = tpu.matmul %309, %310, %cst_91 {dimension_numbers = #tpu.dot_dimension_numbers<[1], [0], [0], [1], [0, 0, 1, 1], [], []>} : vector<2x32xbf16>, vector<32x128xbf16>, vector<2x128xf32> -> vector<2x128xf32>
    %c0_92 = arith.constant 0 : index
    %c0_93 = arith.constant 0 : index
    %312 = vector.load %arg11[%c0_92, %c0_93] : memref<1x128xf32, #tpu.memory_space<vmem>>, vector<1x128xf32>
    %313 = vector.broadcast %312 : vector<1x128xf32> to vector<2x128xf32>
    %314 = arith.addf %311, %313 : vector<2x128xf32>
    %c0_94 = arith.constant 0 : index
    %c0_95 = arith.constant 0 : index
    %315 = vector.load %arg12[%c0_94, %c0_95] : memref<2x128xf32, #tpu.memory_space<vmem>>, vector<2x128xf32>
    tpu.vector_store %arg12[%c0_94, %c0_95], %314 {strides = array<i32>} : memref<2x128xf32, #tpu.memory_space<vmem>>, vector<2x128xf32>,
    return
  }
}

</mosaic_0001>

<llo_original>
// kernel: tpu_custom_call.1
$region0: #{tpu_custom_call.1}
  #allocation0 [shape = 'u32[]', space=smem, size = 0x4, offset = 0x4, fixed_abs, tag = 'smem constant byte address 0x4 - core index']
  #allocation1 [shape = 'u32[144,128]{1,0:T(1,128)}', space=vmem, size = 0x12000, scoped, tag = 'internal scratch']
  %s0 = inlined_call_operand.vmem [shape: f32[16,32], index: 0, kind: input, shape index: {}]
  %s1 = inlined_call_operand.vmem [shape: f32[16,16], index: 1, kind: input, shape index: {}]
  %s2 = inlined_call_operand.vmem [shape: f32[1,32], index: 2, kind: input, shape index: {}]
  %s3 = inlined_call_operand.vmem [shape: f32[1,32], index: 3, kind: input, shape index: {}]
  %s4 = inlined_call_operand.vmem [shape: bf16[2,32,128], index: 4, kind: input, shape index: {}]
  %s5 = inlined_call_operand.vmem [shape: bf16[2,64,16], index: 5, kind: input, shape index: {}]
  %s6 = inlined_call_operand.vmem [shape: bf16[2,4,8,32], index: 6, kind: input, shape index: {}]
  %s7 = inlined_call_operand.vmem [shape: bf16[2,32,64], index: 7, kind: input, shape index: {}]
  %s8 = inlined_call_operand.vmem [shape: bf16[2,64,32], index: 8, kind: input, shape index: {}]
  %s9 = inlined_call_operand.vmem [shape: f32[2,8,128], index: 9, kind: input, shape index: {}]
  %s10 = inlined_call_operand.vmem [shape: bf16[32,128], index: 10, kind: input, shape index: {}]
  %s11 = inlined_call_operand.vmem [shape: f32[1,128], index: 11, kind: input, shape index: {}]
  %s12 = inlined_call_operand.hbm [shape: f32[2,128], index: 12, kind: output, shape index: {}]
  %s13 = sld [smem:[#allocation0]]
  $region58: #{tpu_custom_call.1} parent=0
    _
  %s15 = ssub.s32 1, %s13
  %s16 = scalar_select 0, %s15, %s13
  $region1: #{tpu_custom_call.1} parent=0
    #allocation2 [shape = 'u8[1024]{0}', space=vmem, size = 0x400, scoped, tag = 'output window, operand 0, single buffered']
    #allocation3 [shape = 's32[1]{0}', space=sflag, size = 0x4, scoped, tag = 'scoped memory for tpu_custom_call.1']
    %17 = vsyncpa [#allocation3], 0
    // Predicated region
    $region2: #{tpu_custom_call.1} parent=1 // pred_check
      _
    $region3: #{tpu_custom_call.1} parent=1 // pred_check_branch
      %19 = sbr.rel (0) target = $region5
    $region4: #{tpu_custom_call.1} parent=1 // pred_region
      _
    $region5: #{tpu_custom_call.1} parent=1 // pred_fallthru
      _
    // Predicated region
    $region6: #{tpu_custom_call.1} parent=1 // pred_check
      _
    $region7: #{tpu_custom_call.1} parent=1 // pred_check_branch
      %21 = sbr.rel (0) target = $region9
    $region8: #{tpu_custom_call.1} parent=1 // pred_region
      _
    $region9: #{tpu_custom_call.1} parent=1 // pred_fallthru
      _
    // Predicated region
    $region10: #{tpu_custom_call.1} parent=1 // pred_check
      _
    $region11: #{tpu_custom_call.1} parent=1 // pred_check_branch
      %23 = sbr.rel (0) target = $region13
    $region12: #{tpu_custom_call.1} parent=1 // pred_region
      _
    $region13: #{tpu_custom_call.1} parent=1 // pred_fallthru
      _
    // Predicated region
    $region14: #{tpu_custom_call.1} parent=1 // pred_check
      _
    $region15: #{tpu_custom_call.1} parent=1 // pred_check_branch
      %25 = sbr.rel (0) target = $region17
    $region16: #{tpu_custom_call.1} parent=1 // pred_region
      _
    $region17: #{tpu_custom_call.1} parent=1 // pred_fallthru
      _
    // Predicated region
    $region18: #{tpu_custom_call.1} parent=1 // pred_check
      _
    $region19: #{tpu_custom_call.1} parent=1 // pred_check_branch
      %27 = sbr.rel (0) target = $region21
    $region20: #{tpu_custom_call.1} parent=1 // pred_region
      _
    $region21: #{tpu_custom_call.1} parent=1 // pred_fallthru
      _
    // Predicated region
    $region22: #{tpu_custom_call.1} parent=1 // pred_check
      _
    $region23: #{tpu_custom_call.1} parent=1 // pred_check_branch
      %29 = sbr.rel (0) target = $region25
    $region24: #{tpu_custom_call.1} parent=1 // pred_region
      _
    $region25: #{tpu_custom_call.1} parent=1 // pred_fallthru
      _
    // Predicated region
    $region26: #{tpu_custom_call.1} parent=1 // pred_check
      _
    $region27: #{tpu_custom_call.1} parent=1 // pred_check_branch
      %31 = sbr.rel (0) target = $region29
    $region28: #{tpu_custom_call.1} parent=1 // pred_region
      _
    $region29: #{tpu_custom_call.1} parent=1 // pred_fallthru
      _
    // Predicated region
    $region30: #{tpu_custom_call.1} parent=1 // pred_check
      _
    $region31: #{tpu_custom_call.1} parent=1 // pred_check_branch
      %33 = sbr.rel (0) target = $region33
    $region32: #{tpu_custom_call.1} parent=1 // pred_region
      _
    $region33: #{tpu_custom_call.1} parent=1 // pred_fallthru
      _
    // Predicated region
    $region34: #{tpu_custom_call.1} parent=1 // pred_check
      _
    $region35: #{tpu_custom_call.1} parent=1 // pred_check_branch
      %35 = sbr.rel (0) target = $region37
    $region36: #{tpu_custom_call.1} parent=1 // pred_region
      _
    $region37: #{tpu_custom_call.1} parent=1 // pred_fallthru
      _
    // Predicated region
    $region38: #{tpu_custom_call.1} parent=1 // pred_check
      _
    $region39: #{tpu_custom_call.1} parent=1 // pred_check_branch
      %37 = sbr.rel (0) target = $region41
    $region40: #{tpu_custom_call.1} parent=1 // pred_region
      _
    $region41: #{tpu_custom_call.1} parent=1 // pred_fallthru
      _
    // Predicated region
    $region42: #{tpu_custom_call.1} parent=1 // pred_check
      _
    $region43: #{tpu_custom_call.1} parent=1 // pred_check_branch
      %39 = sbr.rel (0) target = $region45
    $region44: #{tpu_custom_call.1} parent=1 // pred_region
      _
    $region45: #{tpu_custom_call.1} parent=1 // pred_fallthru
      _
    // Predicated region
    $region46: #{tpu_custom_call.1} parent=1 // pred_check
      _
    $region47: #{tpu_custom_call.1} parent=1 // pred_check_branch
      %41 = sbr.rel (0) target = $region49
    $region48: #{tpu_custom_call.1} parent=1 // pred_region
      _
    $region49: #{tpu_custom_call.1} parent=1 // pred_fallthru
      _
    %v43 = vld [vmem:[%s1] sm:$0xff]
    %v44 = vld [vmem:[%s1 + $0x8] sm:$0xff]
    %v45 = vld [vmem:[%s0] sm:$0xff]
    %v46 = vld [vmem:[%s0 + $0x8] sm:$0xff]
    %v47 = vld [vmem:[%s2] sm:$0x1]
    %v48 = vld [vmem:[%s3] sm:$0x1]
    %vm49 = vcmask 261120
    %v50 = vsel %vm49, %v45, 0.0
    %51 = vadd.xlane.f32.xlu0 %v50
    %v52 = vpop.xlane.xlu0 %51
    %v53 = vsel %vm49, %v46, 0.0
    %54 = vadd.xlane.f32.xlu0 %v53
    %v55 = vpop.xlane.xlu0 %54
    %v56 = vrcp.pop 32.0
    %v57 = vmul.f32 %v52, %v56
    %v58 = vmul.f32 %v55, %v56
    %v59 = vsub.f32 %v45, %v57
    %v60 = vsub.f32 %v46, %v58
    %v61 = vmul.f32 %v59, %v59
    %v62 = vmul.f32 %v60, %v60
    %v63 = vsel %vm49, %v61, 0.0
    %64 = vadd.xlane.f32.xlu0 %v63
    %v65 = vpop.xlane.xlu0 %64
    %v66 = vsel %vm49, %v62, 0.0
    %67 = vadd.xlane.f32.xlu0 %v66
    %v68 = vpop.xlane.xlu0 %67
    %v69 = vmul.f32 %v65, %v56
    %v70 = vmul.f32 %v68, %v56
    %v71 = vadd.f32 %v69, 1e-12
    %v72 = vadd.f32 %v70, 1e-12
    %v73 = vrsqrt.pop %v71
    %v74 = vrsqrt.pop %v72
    %v75 = vmul.f32 %v59, %v73
    %v76 = vmul.f32 %v60, %v74
    %v78 = vlaneseq
    %v79 = vshrl.u32 %v78, 7
    %v80 = vsub.s32 0, %v79
    %v81 = vrot.slane %v47, %v80
    %v83 = vmul.f32 %v75, %v81
    %v84 = vmul.f32 %v76, %v81
    %v86 = vlaneseq
    %v87 = vshrl.u32 %v86, 7
    %v88 = vsub.s32 0, %v87
    %v89 = vrot.slane %v48, %v88
    %v91 = vadd.f32 %v83, %v89
    %v92 = vadd.f32 %v84, %v89
    %v93 = vld [vmem:[%s9] sm:$0xff]
    %v94 = vpack.c.bf16 %v92, %v91
    %v95 = vld [vmem:[%s4] sm:$0xf]
    %v96 = vld [vmem:[%s4 + $0x4] sm:$0xf]
    %v97 = vld [vmem:[%s4 + $0x8] sm:$0xf]
    %v98 = vld [vmem:[%s4 + $0xc] sm:$0xf]
    %v99 = vlaneseq
    %v100 = vshrl.u32 %v99, 7
    %v101 = vsub.s32 0, %v100
    %v102 = vrot.slane %v93, %v101
    %v107 = vunpack.c.l.b16 %v95
    %v108 = vunpack.c.l.b16 %v96
    %v109 = vunpack.c.l.b16 %v97
    %v110 = vunpack.c.l.b16 %v98
    %v111 = vpack.c.b16 %v108, %v107
    %v112 = vpack.c.b16 %v110, %v109
    %v116 = vsel %vm49, %v94, 0
    %118 = vmatprep.subr.bf16.mxu0 0
    %119 = vmatpush1.bf16.msra.mxu0 %v111
    %120 = vmatprep.subr.bf16.mxu0 0
    %121 = vmatpush1.bf16.msra.mxu0 %v112
    %122 = vmatprep.subr.bf16.mxu0 0
    %123 = vmatpush1.bf16.msra.mxu0 0
    %124 = vmatprep.subr.bf16.mxu0 0
    %125 = vmatpush1.bf16.msra.mxu0 0
    %126 = vmatprep.subr.bf16.mxu0 0
    %127 = vmatpush1.bf16.msra.mxu0 0
    %128 = vmatprep.subr.bf16.mxu0 0
    %129 = vmatpush1.bf16.msra.mxu0 0
    %130 = vmatprep.subr.bf16.mxu0 0
    %131 = vmatpush1.bf16.msra.mxu0 0
    %132 = vmatprep.subr.bf16.mxu0 0
    %133 = vmatpush1.bf16.msra.mxu0 0
    %134 = vmatprep.subr.bf16.mxu0 0
    %135 = vmatpush1.bf16.msra.mxu0 0
    %136 = vmatprep.subr.bf16.mxu0 0
    %137 = vmatpush1.bf16.msra.mxu0 0
    %138 = vmatprep.subr.bf16.mxu0 0
    %139 = vmatpush1.bf16.msra.mxu0 0
    %140 = vmatprep.subr.bf16.mxu0 0
    %141 = vmatpush1.bf16.msra.mxu0 0
    %142 = vmatprep.subr.bf16.mxu0 0
    %143 = vmatpush1.bf16.msra.mxu0 0
    %144 = vmatprep.subr.bf16.mxu0 0
    %145 = vmatpush1.bf16.msra.mxu0 0
    %146 = vmatprep.subr.bf16.mxu0 0
    %147 = vmatpush1.bf16.msra.mxu0 0
    %148 = vmatprep.subr.bf16.mxu0 0
    %149 = vmatpush1.bf16.msra.mxu0 0
    %150 = vmatprep.mubr.bf16.mxu0 0
    %151 = vmatmul.mubr.bf16.gmra.mrb[0].mxu0 %v116
    %v152 = vpop.f32.mrb[0].mxu0
    %v153 = vadd.f32 %v102, %v152
    %v154 = vpop.f32.mrb[0].mxu0
    %v155 = vpop.f32.mrb[0].mxu0
    %v156 = vadd.f32 %v102, %v155
    %v157 = vpop.f32.mrb[0].mxu0
    %158 = vdwg.mxu0
    %159 = vxpose.xlu0.b32.start [1/16] %v153, 128
    %160 = vxpose.xlu0.b32.cont [2/16] %v156, 128
    %161 = vxpose.xlu0.b32.cont [3/16] 0.0, 128
    %162 = vxpose.xlu0.b32.cont [4/16] 0.0, 128
    %163 = vxpose.xlu0.b32.cont [5/16] 0.0, 128
    %164 = vxpose.xlu0.b32.cont [6/16] 0.0, 128
    %165 = vxpose.xlu0.b32.cont [7/16] 0.0, 128
    %166 = vxpose.xlu0.b32.cont [8/16] 0.0, 128
    %167 = vxpose.xlu0.b32.cont [9/16] 0.0, 128
    %168 = vxpose.xlu0.b32.cont [10/16] 0.0, 128
    %169 = vxpose.xlu0.b32.cont [11/16] 0.0, 128
    %170 = vxpose.xlu0.b32.cont [12/16] 0.0, 128
    %171 = vxpose.xlu0.b32.cont [13/16] 0.0, 128
    %172 = vxpose.xlu0.b32.cont [14/16] 0.0, 128
    %173 = vxpose.xlu0.b32.cont [15/16] 0.0, 128
    %174 = vxpose.xlu0.b32.end [16/16] 0.0, 128
    %v175 = vpop.trf.xlu0
    %v176 = vpop.trf.xlu0
    %v177 = vpop.trf.xlu0
    %v178 = vpop.trf.xlu0
    %v179 = vpop.trf.xlu0
    %v180 = vpop.trf.xlu0
    %v181 = vpop.trf.xlu0
    %v182 = vpop.trf.xlu0
    %v183 = vpop.trf.xlu0
    %v184 = vpop.trf.xlu0
    %v185 = vpop.trf.xlu0
    %v186 = vpop.trf.xlu0
    %v187 = vpop.trf.xlu0
    %v188 = vpop.trf.xlu0
    %v189 = vpop.trf.xlu0
    %v190 = vpop.trf.xlu0
    %v191 = vld [vmem:[%s5] sm:$0xf]
    %v192 = vld [vmem:[%s5 + $0x4] sm:$0xf]
    %v193 = vld [vmem:[%s5 + $0x8] sm:$0xf]
    %v194 = vld [vmem:[%s5 + $0xc] sm:$0xf]
    %v195 = vld [vmem:[%s5 + $0x10] sm:$0xf]
    %v196 = vld [vmem:[%s5 + $0x14] sm:$0xf]
    %v197 = vld [vmem:[%s5 + $0x18] sm:$0xf]
    %v198 = vld [vmem:[%s5 + $0x1c] sm:$0xf]
    %v199 = vpack.c.bf16 %v188, %v187
    %v208 = vunpack.c.l.b16 %v191
    %v209 = vunpack.c.l.b16 %v192
    %v210 = vunpack.c.l.b16 %v193
    %v211 = vunpack.c.l.b16 %v194
    %v212 = vunpack.c.l.b16 %v195
    %v213 = vunpack.c.l.b16 %v196
    %v214 = vunpack.c.l.b16 %v197
    %v215 = vunpack.c.l.b16 %v198
    %v216 = vpack.c.b16 %v209, %v208
    %v217 = vpack.c.b16 %v211, %v210
    %v218 = vpack.c.b16 %v213, %v212
    %v219 = vpack.c.b16 %v215, %v214
    %vm220 = vcmask 130048
    %v222 = vsel %vm220, %v216, 0
    %v225 = vsel %vm220, %v217, 0
    %v228 = vsel %vm220, %v218, 0
    %v231 = vsel %vm220, %v219, 0
    %233 = vmatprep.subr.bf16.mxu0 0
    %234 = vmatpush1.bf16.msra.mxu0 %v199
    %235 = vmatprep.subr.bf16.mxu0 0
    %236 = vmatpush1.bf16.msra.mxu0 0
    %237 = vmatprep.subr.bf16.mxu0 0
    %238 = vmatpush1.bf16.msra.mxu0 0
    %239 = vmatprep.subr.bf16.mxu0 0
    %240 = vmatpush1.bf16.msra.mxu0 0
    %241 = vmatprep.subr.bf16.mxu0 0
    %242 = vmatpush1.bf16.msra.mxu0 0
    %243 = vmatprep.subr.bf16.mxu0 0
    %244 = vmatpush1.bf16.msra.mxu0 0
    %245 = vmatprep.subr.bf16.mxu0 0
    %246 = vmatpush1.bf16.msra.mxu0 0
    %247 = vmatprep.subr.bf16.mxu0 0
    %248 = vmatpush1.bf16.msra.mxu0 0
    %249 = vmatprep.subr.bf16.mxu0 0
    %250 = vmatpush1.bf16.msra.mxu0 0
    %251 = vmatprep.subr.bf16.mxu0 0
    %252 = vmatpush1.bf16.msra.mxu0 0
    %253 = vmatprep.subr.bf16.mxu0 0
    %254 = vmatpush1.bf16.msra.mxu0 0
    %255 = vmatprep.subr.bf16.mxu0 0
    %256 = vmatpush1.bf16.msra.mxu0 0
    %257 = vmatprep.subr.bf16.mxu0 0
    %258 = vmatpush1.bf16.msra.mxu0 0
    %259 = vmatprep.subr.bf16.mxu0 0
    %260 = vmatpush1.bf16.msra.mxu0 0
    %261 = vmatprep.subr.bf16.mxu0 0
    %262 = vmatpush1.bf16.msra.mxu0 0
    %263 = vmatprep.subr.bf16.mxu0 0
    %264 = vmatpush1.bf16.msra.mxu0 0
    %265 = vmatprep.mubr.bf16.mxu0 0
    %266 = vmatmul.mubr.bf16.gmra.mrb[0].mxu0 %v222
    %v267 = vpop.f32.mrb[0].mxu0
    %v268 = vadd.f32 0.0, %v267
    %v269 = vpop.f32.mrb[0].mxu0
    %v270 = vpop.f32.mrb[0].mxu0
    %v271 = vadd.f32 0.0, %v270
    %v272 = vpop.f32.mrb[0].mxu0
    %273 = vmatprep.mubr.bf16.mxu0 0
    %274 = vmatmul.mubr.bf16.gmra.mrb[0].mxu0 %v225
    %v275 = vpop.f32.mrb[0].mxu0
    %v276 = vadd.f32 0.0, %v275
    %v277 = vpop.f32.mrb[0].mxu0
    %v278 = vpop.f32.mrb[0].mxu0
    %v279 = vadd.f32 0.0, %v278
    %v280 = vpop.f32.mrb[0].mxu0
    %281 = vmatprep.mubr.bf16.mxu0 0
    %282 = vmatmul.mubr.bf16.gmra.mrb[0].mxu0 %v228
    %v283 = vpop.f32.mrb[0].mxu0
    %v284 = vadd.f32 0.0, %v283
    %v285 = vpop.f32.mrb[0].mxu0
    %v286 = vpop.f32.mrb[0].mxu0
    %v287 = vadd.f32 0.0, %v286
    %v288 = vpop.f32.mrb[0].mxu0
    %289 = vmatprep.mubr.bf16.mxu0 0
    %290 = vmatmul.mubr.bf16.gmra.mrb[0].mxu0 %v231
    %v291 = vpop.f32.mrb[0].mxu0
    %v292 = vadd.f32 0.0, %v291
    %v293 = vpop.f32.mrb[0].mxu0
    %v294 = vpop.f32.mrb[0].mxu0
    %v295 = vadd.f32 0.0, %v294
    %v296 = vpop.f32.mrb[0].mxu0
    %297 = vdwg.mxu0
    %v298 = vmul.f32 %v268, 2.0
    %v299 = vmul.f32 %v271, 2.0
    %v300 = vmul.f32 %v276, 2.0
    %v301 = vmul.f32 %v279, 2.0
    %v302 = vmul.f32 %v284, 2.0
    %v303 = vmul.f32 %v287, 2.0
    %v304 = vmul.f32 %v292, 2.0
    %v305 = vmul.f32 %v295, 2.0
    %v306 = vadd.f32 %v175, %v298
    %v307 = vadd.f32 %v176, %v299
    %v308 = vadd.f32 %v177, %v300
    %v309 = vadd.f32 %v178, %v301
    %v310 = vadd.f32 %v183, %v302
    %v311 = vadd.f32 %v184, %v303
    %v312 = vadd.f32 %v185, %v304
    %v313 = vadd.f32 %v186, %v305
    %314 = vxpose.xlu0.b32.start [1/16] %v306, 128
    %315 = vxpose.xlu0.b32.cont [2/16] 0.0, 128
    %316 = vxpose.xlu0.b32.cont [3/16] 0.0, 128
    %317 = vxpose.xlu0.b32.cont [4/16] 0.0, 128
    %318 = vxpose.xlu0.b32.cont [5/16] 0.0, 128
    %319 = vxpose.xlu0.b32.cont [6/16] 0.0, 128
    %320 = vxpose.xlu0.b32.cont [7/16] 0.0, 128
    %321 = vxpose.xlu0.b32.cont [8/16] 0.0, 128
    %322 = vxpose.xlu0.b32.cont [9/16] 0.0, 128
    %323 = vxpose.xlu0.b32.cont [10/16] 0.0, 128
    %324 = vxpose.xlu0.b32.cont [11/16] 0.0, 128
    %325 = vxpose.xlu0.b32.cont [12/16] 0.0, 128
    %326 = vxpose.xlu0.b32.cont [13/16] 0.0, 128
    %327 = vxpose.xlu0.b32.cont [14/16] 0.0, 128
    %328 = vxpose.xlu0.b32.cont [15/16] 0.0, 128
    %329 = vxpose.xlu0.b32.end [16/16] 0.0, 128
    %v330 = vpop.trf.xlu0
    %v331 = vpop.trf.xlu0
    %v332 = vpop.trf.xlu0
    %v333 = vpop.trf.xlu0
    %v334 = vpop.trf.xlu0
    %v335 = vpop.trf.xlu0
    %v336 = vpop.trf.xlu0
    %v337 = vpop.trf.xlu0
    %v338 = vpop.trf.xlu0
    %v339 = vpop.trf.xlu0
    %v340 = vpop.trf.xlu0
    %v341 = vpop.trf.xlu0
    %v342 = vpop.trf.xlu0
    %v343 = vpop.trf.xlu0
    %v344 = vpop.trf.xlu0
    %v345 = vpop.trf.xlu0
    %346 = vxpose.xlu0.b32.start [1/16] %v307, 128
    %347 = vxpose.xlu0.b32.cont [2/16] 0.0, 128
    %348 = vxpose.xlu0.b32.cont [3/16] 0.0, 128
    %349 = vxpose.xlu0.b32.cont [4/16] 0.0, 128
    %350 = vxpose.xlu0.b32.cont [5/16] 0.0, 128
    %351 = vxpose.xlu0.b32.cont [6/16] 0.0, 128
    %352 = vxpose.xlu0.b32.cont [7/16] 0.0, 128
    %353 = vxpose.xlu0.b32.cont [8/16] 0.0, 128
    %354 = vxpose.xlu0.b32.cont [9/16] 0.0, 128
    %355 = vxpose.xlu0.b32.cont [10/16] 0.0, 128
    %356 = vxpose.xlu0.b32.cont [11/16] 0.0, 128
    %357 = vxpose.xlu0.b32.cont [12/16] 0.0, 128
    %358 = vxpose.xlu0.b32.cont [13/16] 0.0, 128
    %359 = vxpose.xlu0.b32.cont [14/16] 0.0, 128
    %360 = vxpose.xlu0.b32.cont [15/16] 0.0, 128
    %361 = vxpose.xlu0.b32.end [16/16] 0.0, 128
    %v362 = vpop.trf.xlu0
    %v363 = vpop.trf.xlu0
    %v364 = vpop.trf.xlu0
    %v365 = vpop.trf.xlu0
    %v366 = vpop.trf.xlu0
    %v367 = vpop.trf.xlu0
    %v368 = vpop.trf.xlu0
    %v369 = vpop.trf.xlu0
    %v370 = vpop.trf.xlu0
    %v371 = vpop.trf.xlu0
    %v372 = vpop.trf.xlu0
    %v373 = vpop.trf.xlu0
    %v374 = vpop.trf.xlu0
    %v375 = vpop.trf.xlu0
    %v376 = vpop.trf.xlu0
    %v377 = vpop.trf.xlu0
    %378 = vxpose.xlu0.b32.start [1/16] %v308, 128
    %379 = vxpose.xlu0.b32.cont [2/16] 0.0, 128
    %380 = vxpose.xlu0.b32.cont [3/16] 0.0, 128
    %381 = vxpose.xlu0.b32.cont [4/16] 0.0, 128
    %382 = vxpose.xlu0.b32.cont [5/16] 0.0, 128
    %383 = vxpose.xlu0.b32.cont [6/16] 0.0, 128
    %384 = vxpose.xlu0.b32.cont [7/16] 0.0, 128
    %385 = vxpose.xlu0.b32.cont [8/16] 0.0, 128
    %386 = vxpose.xlu0.b32.cont [9/16] 0.0, 128
    %387 = vxpose.xlu0.b32.cont [10/16] 0.0, 128
    %388 = vxpose.xlu0.b32.cont [11/16] 0.0, 128
    %389 = vxpose.xlu0.b32.cont [12/16] 0.0, 128
    %390 = vxpose.xlu0.b32.cont [13/16] 0.0, 128
    %391 = vxpose.xlu0.b32.cont [14/16] 0.0, 128
    %392 = vxpose.xlu0.b32.cont [15/16] 0.0, 128
    %393 = vxpose.xlu0.b32.end [16/16] 0.0, 128
    %v394 = vpop.trf.xlu0
    %v395 = vpop.trf.xlu0
    %v396 = vpop.trf.xlu0
    %v397 = vpop.trf.xlu0
    %v398 = vpop.trf.xlu0
    %v399 = vpop.trf.xlu0
    %v400 = vpop.trf.xlu0
    %v401 = vpop.trf.xlu0
    %v402 = vpop.trf.xlu0
    %v403 = vpop.trf.xlu0
    %v404 = vpop.trf.xlu0
    %v405 = vpop.trf.xlu0
    %v406 = vpop.trf.xlu0
    %v407 = vpop.trf.xlu0
    %v408 = vpop.trf.xlu0
    %v409 = vpop.trf.xlu0
    %410 = vxpose.xlu0.b32.start [1/16] %v309, 128
    %411 = vxpose.xlu0.b32.cont [2/16] 0.0, 128
    %412 = vxpose.xlu0.b32.cont [3/16] 0.0, 128
    %413 = vxpose.xlu0.b32.cont [4/16] 0.0, 128
    %414 = vxpose.xlu0.b32.cont [5/16] 0.0, 128
    %415 = vxpose.xlu0.b32.cont [6/16] 0.0, 128
    %416 = vxpose.xlu0.b32.cont [7/16] 0.0, 128
    %417 = vxpose.xlu0.b32.cont [8/16] 0.0, 128
    %418 = vxpose.xlu0.b32.cont [9/16] 0.0, 128
    %419 = vxpose.xlu0.b32.cont [10/16] 0.0, 128
    %420 = vxpose.xlu0.b32.cont [11/16] 0.0, 128
    %421 = vxpose.xlu0.b32.cont [12/16] 0.0, 128
    %422 = vxpose.xlu0.b32.cont [13/16] 0.0, 128
    %423 = vxpose.xlu0.b32.cont [14/16] 0.0, 128
    %424 = vxpose.xlu0.b32.cont [15/16] 0.0, 128
    %425 = vxpose.xlu0.b32.end [16/16] 0.0, 128
    %v426 = vpop.trf.xlu0
    %v427 = vpop.trf.xlu0
    %v428 = vpop.trf.xlu0
    %v429 = vpop.trf.xlu0
    %v430 = vpop.trf.xlu0
    %v431 = vpop.trf.xlu0
    %v432 = vpop.trf.xlu0
    %v433 = vpop.trf.xlu0
    %v434 = vpop.trf.xlu0
    %v435 = vpop.trf.xlu0
    %v436 = vpop.trf.xlu0
    %v437 = vpop.trf.xlu0
    %v438 = vpop.trf.xlu0
    %v439 = vpop.trf.xlu0
    %v440 = vpop.trf.xlu0
    %v441 = vpop.trf.xlu0
    %v442 = vpack.c.bf16 %v331, %v330
    %v443 = vpack.c.bf16 %v363, %v362
    %v444 = vpack.c.bf16 %v395, %v394
    %v445 = vpack.c.bf16 %v427, %v426
    %v446 = vpack.c.bf16 %v179, %v179
    %v447 = vpack.c.bf16 %v180, %v180
    %v448 = vpack.c.bf16 %v181, %v181
    %v449 = vpack.c.bf16 %v182, %v182
    %vm450 = vcmask 64512
    %v452 = vsel %vm450, %v442, 0
    %vm454 = vcmask 1043456
    %v456 = vsel %vm454, %v446, 0
    %458 = vmatprep.subr.bf16.mxu0 0
    %459 = vmatpush1.bf16.msra.mxu0 %v456
    %460 = vmatprep.subr.bf16.mxu0 0
    %461 = vmatpush1.bf16.msra.mxu0 0
    %462 = vmatprep.subr.bf16.mxu0 0
    %463 = vmatpush1.bf16.msra.mxu0 0
    %464 = vmatprep.subr.bf16.mxu0 0
    %465 = vmatpush1.bf16.msra.mxu0 0
    %466 = vmatprep.subr.bf16.mxu0 0
    %467 = vmatpush1.bf16.msra.mxu0 0
    %468 = vmatprep.subr.bf16.mxu0 0
    %469 = vmatpush1.bf16.msra.mxu0 0
    %470 = vmatprep.subr.bf16.mxu0 0
    %471 = vmatpush1.bf16.msra.mxu0 0
    %472 = vmatprep.subr.bf16.mxu0 0
    %473 = vmatpush1.bf16.msra.mxu0 0
    %474 = vmatprep.subr.bf16.mxu0 0
    %475 = vmatpush1.bf16.msra.mxu0 0
    %476 = vmatprep.subr.bf16.mxu0 0
    %477 = vmatpush1.bf16.msra.mxu0 0
    %478 = vmatprep.subr.bf16.mxu0 0
    %479 = vmatpush1.bf16.msra.mxu0 0
    %480 = vmatprep.subr.bf16.mxu0 0
    %481 = vmatpush1.bf16.msra.mxu0 0
    %482 = vmatprep.subr.bf16.mxu0 0
    %483 = vmatpush1.bf16.msra.mxu0 0
    %484 = vmatprep.subr.bf16.mxu0 0
    %485 = vmatpush1.bf16.msra.mxu0 0
    %486 = vmatprep.subr.bf16.mxu0 0
    %487 = vmatpush1.bf16.msra.mxu0 0
    %488 = vmatprep.subr.bf16.mxu0 0
    %489 = vmatpush1.bf16.msra.mxu0 0
    %490 = vmatprep.mubr.bf16.mxu0 0
    %491 = vmatmul.mubr.bf16.gmra.mrb[0].mxu0 %v452
    %v492 = vpop.f32.mrb[0].mxu0
    %v493 = vadd.f32 0.0, %v492
    %v494 = vpop.f32.mrb[0].mxu0
    %v495 = vpop.f32.mrb[0].mxu0
    %v496 = vadd.f32 0.0, %v495
    %v497 = vpop.f32.mrb[0].mxu0
    %498 = vdwg.mxu0
    %v500 = vsel %vm450, %v443, 0
    %v503 = vsel %vm454, %v447, 0
    %505 = vmatprep.subr.bf16.mxu0 0
    %506 = vmatpush1.bf16.msra.mxu0 %v503
    %507 = vmatprep.subr.bf16.mxu0 0
    %508 = vmatpush1.bf16.msra.mxu0 0
    %509 = vmatprep.subr.bf16.mxu0 0
    %510 = vmatpush1.bf16.msra.mxu0 0
    %511 = vmatprep.subr.bf16.mxu0 0
    %512 = vmatpush1.bf16.msra.mxu0 0
    %513 = vmatprep.subr.bf16.mxu0 0
    %514 = vmatpush1.bf16.msra.mxu0 0
    %515 = vmatprep.subr.bf16.mxu0 0
    %516 = vmatpush1.bf16.msra.mxu0 0
    %517 = vmatprep.subr.bf16.mxu0 0
    %518 = vmatpush1.bf16.msra.mxu0 0
    %519 = vmatprep.subr.bf16.mxu0 0
    %520 = vmatpush1.bf16.msra.mxu0 0
    %521 = vmatprep.subr.bf16.mxu0 0
    %522 = vmatpush1.bf16.msra.mxu0 0
    %523 = vmatprep.subr.bf16.mxu0 0
    %524 = vmatpush1.bf16.msra.mxu0 0
    %525 = vmatprep.subr.bf16.mxu0 0
    %526 = vmatpush1.bf16.msra.mxu0 0
    %527 = vmatprep.subr.bf16.mxu0 0
    %528 = vmatpush1.bf16.msra.mxu0 0
    %529 = vmatprep.subr.bf16.mxu0 0
    %530 = vmatpush1.bf16.msra.mxu0 0
    %531 = vmatprep.subr.bf16.mxu0 0
    %532 = vmatpush1.bf16.msra.mxu0 0
    %533 = vmatprep.subr.bf16.mxu0 0
    %534 = vmatpush1.bf16.msra.mxu0 0
    %535 = vmatprep.subr.bf16.mxu0 0
    %536 = vmatpush1.bf16.msra.mxu0 0
    %537 = vmatprep.mubr.bf16.mxu0 0
    %538 = vmatmul.mubr.bf16.gmra.mrb[0].mxu0 %v500
    %v539 = vpop.f32.mrb[0].mxu0
    %v540 = vadd.f32 0.0, %v539
    %v541 = vpop.f32.mrb[0].mxu0
    %v542 = vpop.f32.mrb[0].mxu0
    %v543 = vadd.f32 0.0, %v542
    %v544 = vpop.f32.mrb[0].mxu0
    %545 = vdwg.mxu0
    %v547 = vsel %vm450, %v444, 0
    %v550 = vsel %vm454, %v448, 0
    %552 = vmatprep.subr.bf16.mxu0 0
    %553 = vmatpush1.bf16.msra.mxu0 %v550
    %554 = vmatprep.subr.bf16.mxu0 0
    %555 = vmatpush1.bf16.msra.mxu0 0
    %556 = vmatprep.subr.bf16.mxu0 0
    %557 = vmatpush1.bf16.msra.mxu0 0
    %558 = vmatprep.subr.bf16.mxu0 0
    %559 = vmatpush1.bf16.msra.mxu0 0
    %560 = vmatprep.subr.bf16.mxu0 0
    %561 = vmatpush1.bf16.msra.mxu0 0
    %562 = vmatprep.subr.bf16.mxu0 0
    %563 = vmatpush1.bf16.msra.mxu0 0
    %564 = vmatprep.subr.bf16.mxu0 0
    %565 = vmatpush1.bf16.msra.mxu0 0
    %566 = vmatprep.subr.bf16.mxu0 0
    %567 = vmatpush1.bf16.msra.mxu0 0
    %568 = vmatprep.subr.bf16.mxu0 0
    %569 = vmatpush1.bf16.msra.mxu0 0
    %570 = vmatprep.subr.bf16.mxu0 0
    %571 = vmatpush1.bf16.msra.mxu0 0
    %572 = vmatprep.subr.bf16.mxu0 0
    %573 = vmatpush1.bf16.msra.mxu0 0
    %574 = vmatprep.subr.bf16.mxu0 0
    %575 = vmatpush1.bf16.msra.mxu0 0
    %576 = vmatprep.subr.bf16.mxu0 0
    %577 = vmatpush1.bf16.msra.mxu0 0
    %578 = vmatprep.subr.bf16.mxu0 0
    %579 = vmatpush1.bf16.msra.mxu0 0
    %580 = vmatprep.subr.bf16.mxu0 0
    %581 = vmatpush1.bf16.msra.mxu0 0
    %582 = vmatprep.subr.bf16.mxu0 0
    %583 = vmatpush1.bf16.msra.mxu0 0
    %584 = vmatprep.mubr.bf16.mxu0 0
    %585 = vmatmul.mubr.bf16.gmra.mrb[0].mxu0 %v547
    %v586 = vpop.f32.mrb[0].mxu0
    %v587 = vadd.f32 0.0, %v586
    %v588 = vpop.f32.mrb[0].mxu0
    %v589 = vpop.f32.mrb[0].mxu0
    %v590 = vadd.f32 0.0, %v589
    %v591 = vpop.f32.mrb[0].mxu0
    %592 = vdwg.mxu0
    %v594 = vsel %vm450, %v445, 0
    %v597 = vsel %vm454, %v449, 0
    %599 = vmatprep.subr.bf16.mxu0 0
    %600 = vmatpush1.bf16.msra.mxu0 %v597
    %601 = vmatprep.subr.bf16.mxu0 0
    %602 = vmatpush1.bf16.msra.mxu0 0
    %603 = vmatprep.subr.bf16.mxu0 0
    %604 = vmatpush1.bf16.msra.mxu0 0
    %605 = vmatprep.subr.bf16.mxu0 0
    %606 = vmatpush1.bf16.msra.mxu0 0
    %607 = vmatprep.subr.bf16.mxu0 0
    %608 = vmatpush1.bf16.msra.mxu0 0
    %609 = vmatprep.subr.bf16.mxu0 0
    %610 = vmatpush1.bf16.msra.mxu0 0
    %611 = vmatprep.subr.bf16.mxu0 0
    %612 = vmatpush1.bf16.msra.mxu0 0
    %613 = vmatprep.subr.bf16.mxu0 0
    %614 = vmatpush1.bf16.msra.mxu0 0
    %615 = vmatprep.subr.bf16.mxu0 0
    %616 = vmatpush1.bf16.msra.mxu0 0
    %617 = vmatprep.subr.bf16.mxu0 0
    %618 = vmatpush1.bf16.msra.mxu0 0
    %619 = vmatprep.subr.bf16.mxu0 0
    %620 = vmatpush1.bf16.msra.mxu0 0
    %621 = vmatprep.subr.bf16.mxu0 0
    %622 = vmatpush1.bf16.msra.mxu0 0
    %623 = vmatprep.subr.bf16.mxu0 0
    %624 = vmatpush1.bf16.msra.mxu0 0
    %625 = vmatprep.subr.bf16.mxu0 0
    %626 = vmatpush1.bf16.msra.mxu0 0
    %627 = vmatprep.subr.bf16.mxu0 0
    %628 = vmatpush1.bf16.msra.mxu0 0
    %629 = vmatprep.subr.bf16.mxu0 0
    %630 = vmatpush1.bf16.msra.mxu0 0
    %631 = vmatprep.mubr.bf16.mxu0 0
    %632 = vmatmul.mubr.bf16.gmra.mrb[0].mxu0 %v594
    %v633 = vpop.f32.mrb[0].mxu0
    %v634 = vadd.f32 0.0, %v633
    %v635 = vpop.f32.mrb[0].mxu0
    %v636 = vpop.f32.mrb[0].mxu0
    %v637 = vadd.f32 0.0, %v636
    %v638 = vpop.f32.mrb[0].mxu0
    %639 = vdwg.mxu0
    %v640 = vmul.f32 %v493, 0.35355338
    %v641 = vmul.f32 %v496, 0.35355338
    %v642 = vmul.f32 %v540, 0.35355338
    %v643 = vmul.f32 %v543, 0.35355338
    %v644 = vmul.f32 %v587, 0.35355338
    %v645 = vmul.f32 %v590, 0.35355338
    %v646 = vmul.f32 %v634, 0.35355338
    %v647 = vmul.f32 %v637, 0.35355338
    %v648 = vadd.f32 %v640, %v43
    %v649 = vadd.f32 %v641, %v44
    %v650 = vadd.f32 %v642, %v43
    %v651 = vadd.f32 %v643, %v44
    %v652 = vadd.f32 %v644, %v43
    %v653 = vadd.f32 %v645, %v44
    %v654 = vadd.f32 %v646, %v43
    %v655 = vadd.f32 %v647, %v44
    %v656 = vsel %vm220, %v648, -inf
    %657 = vmax.xlane.f32.xlu0 %v656
    %v658 = vpop.xlane.xlu0 %657
    %v659 = vsel %vm220, %v649, -inf
    %660 = vmax.xlane.f32.xlu0 %v659
    %v661 = vpop.xlane.xlu0 %660
    %v662 = vsel %vm220, %v650, -inf
    %663 = vmax.xlane.f32.xlu0 %v662
    %v664 = vpop.xlane.xlu0 %663
    %v665 = vsel %vm220, %v651, -inf
    %666 = vmax.xlane.f32.xlu0 %v665
    %v667 = vpop.xlane.xlu0 %666
    %v668 = vsel %vm220, %v652, -inf
    %669 = vmax.xlane.f32.xlu0 %v668
    %v670 = vpop.xlane.xlu0 %669
    %v671 = vsel %vm220, %v653, -inf
    %672 = vmax.xlane.f32.xlu0 %v671
    %v673 = vpop.xlane.xlu0 %672
    %v674 = vsel %vm220, %v654, -inf
    %675 = vmax.xlane.f32.xlu0 %v674
    %v676 = vpop.xlane.xlu0 %675
    %v677 = vsel %vm220, %v655, -inf
    %678 = vmax.xlane.f32.xlu0 %v677
    %v679 = vpop.xlane.xlu0 %678
    %v680 = vsub.f32 %v648, %v658
    %v681 = vsub.f32 %v649, %v661
    %v682 = vsub.f32 %v650, %v664
    %v683 = vsub.f32 %v651, %v667
    %v684 = vsub.f32 %v652, %v670
    %v685 = vsub.f32 %v653, %v673
    %v686 = vsub.f32 %v654, %v676
    %v687 = vsub.f32 %v655, %v679
    %v688 = vmul.f32 %v680, 1.442695
    %v689 = vpow.pop %v688
    %v690 = vmul.f32 %v681, 1.442695
    %v691 = vpow.pop %v690
    %v692 = vmul.f32 %v682, 1.442695
    %v693 = vpow.pop %v692
    %v694 = vmul.f32 %v683, 1.442695
    %v695 = vpow.pop %v694
    %v696 = vmul.f32 %v684, 1.442695
    %v697 = vpow.pop %v696
    %v698 = vmul.f32 %v685, 1.442695
    %v699 = vpow.pop %v698
    %v700 = vmul.f32 %v686, 1.442695
    %v701 = vpow.pop %v700
    %v702 = vmul.f32 %v687, 1.442695
    %v703 = vpow.pop %v702
    %v704 = vsel %vm220, %v689, 0.0
    %705 = vadd.xlane.f32.xlu0 %v704
    %v706 = vpop.xlane.xlu0 %705
    %v707 = vsel %vm220, %v691, 0.0
    %708 = vadd.xlane.f32.xlu0 %v707
    %v709 = vpop.xlane.xlu0 %708
    %v710 = vsel %vm220, %v693, 0.0
    %711 = vadd.xlane.f32.xlu0 %v710
    %v712 = vpop.xlane.xlu0 %711
    %v713 = vsel %vm220, %v695, 0.0
    %714 = vadd.xlane.f32.xlu0 %v713
    %v715 = vpop.xlane.xlu0 %714
    %v716 = vsel %vm220, %v697, 0.0
    %717 = vadd.xlane.f32.xlu0 %v716
    %v718 = vpop.xlane.xlu0 %717
    %v719 = vsel %vm220, %v699, 0.0
    %720 = vadd.xlane.f32.xlu0 %v719
    %v721 = vpop.xlane.xlu0 %720
    %v722 = vsel %vm220, %v701, 0.0
    %723 = vadd.xlane.f32.xlu0 %v722
    %v724 = vpop.xlane.xlu0 %723
    %v725 = vsel %vm220, %v703, 0.0
    %726 = vadd.xlane.f32.xlu0 %v725
    %v727 = vpop.xlane.xlu0 %726
    %v728 = vrcp.pop %v706
    %v729 = vrcp.pop %v709
    %v730 = vrcp.pop %v712
    %v731 = vrcp.pop %v715
    %v732 = vrcp.pop %v718
    %v733 = vrcp.pop %v721
    %v734 = vrcp.pop %v724
    %v735 = vrcp.pop %v727
    %v736 = vmul.f32 %v689, %v728
    %v737 = vmul.f32 %v691, %v729
    %v738 = vmul.f32 %v693, %v730
    %v739 = vmul.f32 %v695, %v731
    %v740 = vmul.f32 %v697, %v732
    %v741 = vmul.f32 %v699, %v733
    %v742 = vmul.f32 %v701, %v734
    %v743 = vmul.f32 %v703, %v735
    %v744 = vpack.c.bf16 %v737, %v736
    %v745 = vpack.c.bf16 %v739, %v738
    %v746 = vpack.c.bf16 %v741, %v740
    %v747 = vpack.c.bf16 %v743, %v742
    %v748 = vpack.c.bf16 %v310, %v310
    %v749 = vpack.c.bf16 %v311, %v311
    %v750 = vpack.c.bf16 %v312, %v312
    %v751 = vpack.c.bf16 %v313, %v313
    %v753 = vsel %vm220, %v744, 0
    %v756 = vsel %vm220, %v748, 0
    %758 = vmatprep.subr.bf16.mxu0 0
    %759 = vmatpush1.bf16.xpose.msra.mxu0 %v756
    %760 = vmatprep.subr.bf16.mxu0 0
    %761 = vmatpush1.bf16.xpose.msra.mxu0 0
    %762 = vmatprep.subr.bf16.mxu0 0
    %763 = vmatpush1.bf16.xpose.msra.mxu0 0
    %764 = vmatprep.subr.bf16.mxu0 0
    %765 = vmatpush1.bf16.xpose.msra.mxu0 0
    %766 = vmatprep.subr.bf16.mxu0 0
    %767 = vmatpush1.bf16.xpose.msra.mxu0 0
    %768 = vmatprep.subr.bf16.mxu0 0
    %769 = vmatpush1.bf16.xpose.msra.mxu0 0
    %770 = vmatprep.subr.bf16.mxu0 0
    %771 = vmatpush1.bf16.xpose.msra.mxu0 0
    %772 = vmatprep.subr.bf16.mxu0 0
    %773 = vmatpush1.bf16.xpose.msra.mxu0 0
    %774 = vmatprep.subr.bf16.mxu0 0
    %775 = vmatpush1.bf16.xpose.msra.mxu0 0
    %776 = vmatprep.subr.bf16.mxu0 0
    %777 = vmatpush1.bf16.xpose.msra.mxu0 0
    %778 = vmatprep.subr.bf16.mxu0 0
    %779 = vmatpush1.bf16.xpose.msra.mxu0 0
    %780 = vmatprep.subr.bf16.mxu0 0
    %781 = vmatpush1.bf16.xpose.msra.mxu0 0
    %782 = vmatprep.subr.bf16.mxu0 0
    %783 = vmatpush1.bf16.xpose.msra.mxu0 0
    %784 = vmatprep.subr.bf16.mxu0 0
    %785 = vmatpush1.bf16.xpose.msra.mxu0 0
    %786 = vmatprep.subr.bf16.mxu0 0
    %787 = vmatpush1.bf16.xpose.msra.mxu0 0
    %788 = vmatprep.subr.bf16.mxu0 0
    %789 = vmatpush1.bf16.xpose.msra.mxu0 0
    %790 = vmatprep.mubr.bf16.mxu0 0
    %791 = vmatmul.mubr.bf16.gmra.mrb[0].mxu0 %v753
    %v792 = vpop.f32.mrb[0].mxu0
    %v793 = vadd.f32 0.0, %v792
    %v794 = vpop.f32.mrb[0].mxu0
    %v795 = vpop.f32.mrb[0].mxu0
    %v796 = vadd.f32 0.0, %v795
    %v797 = vpop.f32.mrb[0].mxu0
    %798 = vdwg.mxu0
    %v800 = vsel %vm220, %v745, 0
    %v803 = vsel %vm220, %v749, 0
    %805 = vmatprep.subr.bf16.mxu0 0
    %806 = vmatpush1.bf16.xpose.msra.mxu0 %v803
    %807 = vmatprep.subr.bf16.mxu0 0
    %808 = vmatpush1.bf16.xpose.msra.mxu0 0
    %809 = vmatprep.subr.bf16.mxu0 0
    %810 = vmatpush1.bf16.xpose.msra.mxu0 0
    %811 = vmatprep.subr.bf16.mxu0 0
    %812 = vmatpush1.bf16.xpose.msra.mxu0 0
    %813 = vmatprep.subr.bf16.mxu0 0
    %814 = vmatpush1.bf16.xpose.msra.mxu0 0
    %815 = vmatprep.subr.bf16.mxu0 0
    %816 = vmatpush1.bf16.xpose.msra.mxu0 0
    %817 = vmatprep.subr.bf16.mxu0 0
    %818 = vmatpush1.bf16.xpose.msra.mxu0 0
    %819 = vmatprep.subr.bf16.mxu0 0
    %820 = vmatpush1.bf16.xpose.msra.mxu0 0
    %821 = vmatprep.subr.bf16.mxu0 0
    %822 = vmatpush1.bf16.xpose.msra.mxu0 0
    %823 = vmatprep.subr.bf16.mxu0 0
    %824 = vmatpush1.bf16.xpose.msra.mxu0 0
    %825 = vmatprep.subr.bf16.mxu0 0
    %826 = vmatpush1.bf16.xpose.msra.mxu0 0
    %827 = vmatprep.subr.bf16.mxu0 0
    %828 = vmatpush1.bf16.xpose.msra.mxu0 0
    %829 = vmatprep.subr.bf16.mxu0 0
    %830 = vmatpush1.bf16.xpose.msra.mxu0 0
    %831 = vmatprep.subr.bf16.mxu0 0
    %832 = vmatpush1.bf16.xpose.msra.mxu0 0
    %833 = vmatprep.subr.bf16.mxu0 0
    %834 = vmatpush1.bf16.xpose.msra.mxu0 0
    %835 = vmatprep.subr.bf16.mxu0 0
    %836 = vmatpush1.bf16.xpose.msra.mxu0 0
    %837 = vmatprep.mubr.bf16.mxu0 0
    %838 = vmatmul.mubr.bf16.gmra.mrb[0].mxu0 %v800
    %v839 = vpop.f32.mrb[0].mxu0
    %v840 = vadd.f32 0.0, %v839
    %v841 = vpop.f32.mrb[0].mxu0
    %v842 = vpop.f32.mrb[0].mxu0
    %v843 = vadd.f32 0.0, %v842
    %v844 = vpop.f32.mrb[0].mxu0
    %845 = vdwg.mxu0
    %v847 = vsel %vm220, %v746, 0
    %v850 = vsel %vm220, %v750, 0
    %852 = vmatprep.subr.bf16.mxu0 0
    %853 = vmatpush1.bf16.xpose.msra.mxu0 %v850
    %854 = vmatprep.subr.bf16.mxu0 0
    %855 = vmatpush1.bf16.xpose.msra.mxu0 0
    %856 = vmatprep.subr.bf16.mxu0 0
    %857 = vmatpush1.bf16.xpose.msra.mxu0 0
    %858 = vmatprep.subr.bf16.mxu0 0
    %859 = vmatpush1.bf16.xpose.msra.mxu0 0
    %860 = vmatprep.subr.bf16.mxu0 0
    %861 = vmatpush1.bf16.xpose.msra.mxu0 0
    %862 = vmatprep.subr.bf16.mxu0 0
    %863 = vmatpush1.bf16.xpose.msra.mxu0 0
    %864 = vmatprep.subr.bf16.mxu0 0
    %865 = vmatpush1.bf16.xpose.msra.mxu0 0
    %866 = vmatprep.subr.bf16.mxu0 0
    %867 = vmatpush1.bf16.xpose.msra.mxu0 0
    %868 = vmatprep.subr.bf16.mxu0 0
    %869 = vmatpush1.bf16.xpose.msra.mxu0 0
    %870 = vmatprep.subr.bf16.mxu0 0
    %871 = vmatpush1.bf16.xpose.msra.mxu0 0
    %872 = vmatprep.subr.bf16.mxu0 0
    %873 = vmatpush1.bf16.xpose.msra.mxu0 0
    %874 = vmatprep.subr.bf16.mxu0 0
    %875 = vmatpush1.bf16.xpose.msra.mxu0 0
    %876 = vmatprep.subr.bf16.mxu0 0
    %877 = vmatpush1.bf16.xpose.msra.mxu0 0
    %878 = vmatprep.subr.bf16.mxu0 0
    %879 = vmatpush1.bf16.xpose.msra.mxu0 0
    %880 = vmatprep.subr.bf16.mxu0 0
    %881 = vmatpush1.bf16.xpose.msra.mxu0 0
    %882 = vmatprep.subr.bf16.mxu0 0
    %883 = vmatpush1.bf16.xpose.msra.mxu0 0
    %884 = vmatprep.mubr.bf16.mxu0 0
    %885 = vmatmul.mubr.bf16.gmra.mrb[0].mxu0 %v847
    %v886 = vpop.f32.mrb[0].mxu0
    %v887 = vadd.f32 0.0, %v886
    %v888 = vpop.f32.mrb[0].mxu0
    %v889 = vpop.f32.mrb[0].mxu0
    %v890 = vadd.f32 0.0, %v889
    %v891 = vpop.f32.mrb[0].mxu0
    %892 = vdwg.mxu0
    %v894 = vsel %vm220, %v747, 0
    %v897 = vsel %vm220, %v751, 0
    %899 = vmatprep.subr.bf16.mxu0 0
    %900 = vmatpush1.bf16.xpose.msra.mxu0 %v897
    %901 = vmatprep.subr.bf16.mxu0 0
    %902 = vmatpush1.bf16.xpose.msra.mxu0 0
    %903 = vmatprep.subr.bf16.mxu0 0
    %904 = vmatpush1.bf16.xpose.msra.mxu0 0
    %905 = vmatprep.subr.bf16.mxu0 0
    %906 = vmatpush1.bf16.xpose.msra.mxu0 0
    %907 = vmatprep.subr.bf16.mxu0 0
    %908 = vmatpush1.bf16.xpose.msra.mxu0 0
    %909 = vmatprep.subr.bf16.mxu0 0
    %910 = vmatpush1.bf16.xpose.msra.mxu0 0
    %911 = vmatprep.subr.bf16.mxu0 0
    %912 = vmatpush1.bf16.xpose.msra.mxu0 0
    %913 = vmatprep.subr.bf16.mxu0 0
    %914 = vmatpush1.bf16.xpose.msra.mxu0 0
    %915 = vmatprep.subr.bf16.mxu0 0
    %916 = vmatpush1.bf16.xpose.msra.mxu0 0
    %917 = vmatprep.subr.bf16.mxu0 0
    %918 = vmatpush1.bf16.xpose.msra.mxu0 0
    %919 = vmatprep.subr.bf16.mxu0 0
    %920 = vmatpush1.bf16.xpose.msra.mxu0 0
    %921 = vmatprep.subr.bf16.mxu0 0
    %922 = vmatpush1.bf16.xpose.msra.mxu0 0
    %923 = vmatprep.subr.bf16.mxu0 0
    %924 = vmatpush1.bf16.xpose.msra.mxu0 0
    %925 = vmatprep.subr.bf16.mxu0 0
    %926 = vmatpush1.bf16.xpose.msra.mxu0 0
    %927 = vmatprep.subr.bf16.mxu0 0
    %928 = vmatpush1.bf16.xpose.msra.mxu0 0
    %929 = vmatprep.subr.bf16.mxu0 0
    %930 = vmatpush1.bf16.xpose.msra.mxu0 0
    %931 = vmatprep.mubr.bf16.mxu0 0
    %932 = vmatmul.mubr.bf16.gmra.mrb[0].mxu0 %v894
    %v933 = vpop.f32.mrb[0].mxu0
    %v934 = vadd.f32 0.0, %v933
    %v935 = vpop.f32.mrb[0].mxu0
    %v936 = vpop.f32.mrb[0].mxu0
    %v937 = vadd.f32 0.0, %v936
    %v938 = vpop.f32.mrb[0].mxu0
    %939 = vdwg.mxu0
    %v940 = vpack.c.bf16 %v796, %v793
    %v941 = vpack.c.bf16 %v843, %v840
    %v942 = vpack.c.bf16 %v890, %v887
    %v943 = vpack.c.bf16 %v937, %v934
    %v944 = vld [vmem:[%s6] sm:$0xf]
    %v945 = vld [vmem:[%s6 + $0x4] sm:$0xf]
    %v946 = vld [vmem:[%s6 + $0x8] sm:$0xf]
    %v947 = vld [vmem:[%s6 + $0xc] sm:$0xf]
    %v949 = vsel %vm450, %v940, 0
    %v952 = vsel %vm454, %v944, 0
    %954 = vmatprep.subr.bf16.mxu0 0
    %955 = vmatpush1.bf16.msra.mxu0 %v952
    %956 = vmatprep.subr.bf16.mxu0 0
    %957 = vmatpush1.bf16.msra.mxu0 0
    %958 = vmatprep.subr.bf16.mxu0 0
    %959 = vmatpush1.bf16.msra.mxu0 0
    %960 = vmatprep.subr.bf16.mxu0 0
    %961 = vmatpush1.bf16.msra.mxu0 0
    %962 = vmatprep.subr.bf16.mxu0 0
    %963 = vmatpush1.bf16.msra.mxu0 0
    %964 = vmatprep.subr.bf16.mxu0 0
    %965 = vmatpush1.bf16.msra.mxu0 0
    %966 = vmatprep.subr.bf16.mxu0 0
    %967 = vmatpush1.bf16.msra.mxu0 0
    %968 = vmatprep.subr.bf16.mxu0 0
    %969 = vmatpush1.bf16.msra.mxu0 0
    %970 = vmatprep.subr.bf16.mxu0 0
    %971 = vmatpush1.bf16.msra.mxu0 0
    %972 = vmatprep.subr.bf16.mxu0 0
    %973 = vmatpush1.bf16.msra.mxu0 0
    %974 = vmatprep.subr.bf16.mxu0 0
    %975 = vmatpush1.bf16.msra.mxu0 0
    %976 = vmatprep.subr.bf16.mxu0 0
    %977 = vmatpush1.bf16.msra.mxu0 0
    %978 = vmatprep.subr.bf16.mxu0 0
    %979 = vmatpush1.bf16.msra.mxu0 0
    %980 = vmatprep.subr.bf16.mxu0 0
    %981 = vmatpush1.bf16.msra.mxu0 0
    %982 = vmatprep.subr.bf16.mxu0 0
    %983 = vmatpush1.bf16.msra.mxu0 0
    %984 = vmatprep.subr.bf16.mxu0 0
    %985 = vmatpush1.bf16.msra.mxu0 0
    %986 = vmatprep.mubr.bf16.mxu0 0
    %987 = vmatmul.mubr.bf16.gmra.mrb[0].mxu0 %v949
    %v988 = vpop.f32.mrb[0].mxu0
    %v989 = vadd.f32 0.0, %v988
    %v990 = vpop.f32.mrb[0].mxu0
    %v991 = vpop.f32.mrb[0].mxu0
    %v992 = vadd.f32 0.0, %v991
    %v993 = vpop.f32.mrb[0].mxu0
    %994 = vdwg.mxu0
    %v996 = vsel %vm450, %v941, 0
    %v999 = vsel %vm454, %v945, 0
    %1001 = vmatprep.subr.bf16.mxu0 0
    %1002 = vmatpush1.bf16.msra.mxu0 %v999
    %1003 = vmatprep.subr.bf16.mxu0 0
    %1004 = vmatpush1.bf16.msra.mxu0 0
    %1005 = vmatprep.subr.bf16.mxu0 0
    %1006 = vmatpush1.bf16.msra.mxu0 0
    %1007 = vmatprep.subr.bf16.mxu0 0
    %1008 = vmatpush1.bf16.msra.mxu0 0
    %1009 = vmatprep.subr.bf16.mxu0 0
    %1010 = vmatpush1.bf16.msra.mxu0 0
    %1011 = vmatprep.subr.bf16.mxu0 0
    %1012 = vmatpush1.bf16.msra.mxu0 0
    %1013 = vmatprep.subr.bf16.mxu0 0
    %1014 = vmatpush1.bf16.msra.mxu0 0
    %1015 = vmatprep.subr.bf16.mxu0 0
    %1016 = vmatpush1.bf16.msra.mxu0 0
    %1017 = vmatprep.subr.bf16.mxu0 0
    %1018 = vmatpush1.bf16.msra.mxu0 0
    %1019 = vmatprep.subr.bf16.mxu0 0
    %1020 = vmatpush1.bf16.msra.mxu0 0
    %1021 = vmatprep.subr.bf16.mxu0 0
    %1022 = vmatpush1.bf16.msra.mxu0 0
    %1023 = vmatprep.subr.bf16.mxu0 0
    %1024 = vmatpush1.bf16.msra.mxu0 0
    %1025 = vmatprep.subr.bf16.mxu0 0
    %1026 = vmatpush1.bf16.msra.mxu0 0
    %1027 = vmatprep.subr.bf16.mxu0 0
    %1028 = vmatpush1.bf16.msra.mxu0 0
    %1029 = vmatprep.subr.bf16.mxu0 0
    %1030 = vmatpush1.bf16.msra.mxu0 0
    %1031 = vmatprep.subr.bf16.mxu0 0
    %1032 = vmatpush1.bf16.msra.mxu0 0
    %1033 = vmatprep.mubr.bf16.mxu0 0
    %1034 = vmatmul.mubr.bf16.gmra.mrb[0].mxu0 %v996
    %v1035 = vpop.f32.mrb[0].mxu0
    %v1036 = vadd.f32 0.0, %v1035
    %v1037 = vpop.f32.mrb[0].mxu0
    %v1038 = vpop.f32.mrb[0].mxu0
    %v1039 = vadd.f32 0.0, %v1038
    %v1040 = vpop.f32.mrb[0].mxu0
    %1041 = vdwg.mxu0
    %v1043 = vsel %vm450, %v942, 0
    %v1046 = vsel %vm454, %v946, 0
    %1048 = vmatprep.subr.bf16.mxu0 0
    %1049 = vmatpush1.bf16.msra.mxu0 %v1046
    %1050 = vmatprep.subr.bf16.mxu0 0
    %1051 = vmatpush1.bf16.msra.mxu0 0
    %1052 = vmatprep.subr.bf16.mxu0 0
    %1053 = vmatpush1.bf16.msra.mxu0 0
    %1054 = vmatprep.subr.bf16.mxu0 0
    %1055 = vmatpush1.bf16.msra.mxu0 0
    %1056 = vmatprep.subr.bf16.mxu0 0
    %1057 = vmatpush1.bf16.msra.mxu0 0
    %1058 = vmatprep.subr.bf16.mxu0 0
    %1059 = vmatpush1.bf16.msra.mxu0 0
    %1060 = vmatprep.subr.bf16.mxu0 0
    %1061 = vmatpush1.bf16.msra.mxu0 0
    %1062 = vmatprep.subr.bf16.mxu0 0
    %1063 = vmatpush1.bf16.msra.mxu0 0
    %1064 = vmatprep.subr.bf16.mxu0 0
    %1065 = vmatpush1.bf16.msra.mxu0 0
    %1066 = vmatprep.subr.bf16.mxu0 0
    %1067 = vmatpush1.bf16.msra.mxu0 0
    %1068 = vmatprep.subr.bf16.mxu0 0
    %1069 = vmatpush1.bf16.msra.mxu0 0
    %1070 = vmatprep.subr.bf16.mxu0 0
    %1071 = vmatpush1.bf16.msra.mxu0 0
    %1072 = vmatprep.subr.bf16.mxu0 0
    %1073 = vmatpush1.bf16.msra.mxu0 0
    %1074 = vmatprep.subr.bf16.mxu0 0
    %1075 = vmatpush1.bf16.msra.mxu0 0
    %1076 = vmatprep.subr.bf16.mxu0 0
    %1077 = vmatpush1.bf16.msra.mxu0 0
    %1078 = vmatprep.subr.bf16.mxu0 0
    %1079 = vmatpush1.bf16.msra.mxu0 0
    %1080 = vmatprep.mubr.bf16.mxu0 0
    %1081 = vmatmul.mubr.bf16.gmra.mrb[0].mxu0 %v1043
    %v1082 = vpop.f32.mrb[0].mxu0
    %v1083 = vadd.f32 0.0, %v1082
    %v1084 = vpop.f32.mrb[0].mxu0
    %v1085 = vpop.f32.mrb[0].mxu0
    %v1086 = vadd.f32 0.0, %v1085
    %v1087 = vpop.f32.mrb[0].mxu0
    %1088 = vdwg.mxu0
    %v1090 = vsel %vm450, %v943, 0
    %v1093 = vsel %vm454, %v947, 0
    %1095 = vmatprep.subr.bf16.mxu0 0
    %1096 = vmatpush1.bf16.msra.mxu0 %v1093
    %1097 = vmatprep.subr.bf16.mxu0 0
    %1098 = vmatpush1.bf16.msra.mxu0 0
    %1099 = vmatprep.subr.bf16.mxu0 0
    %1100 = vmatpush1.bf16.msra.mxu0 0
    %1101 = vmatprep.subr.bf16.mxu0 0
    %1102 = vmatpush1.bf16.msra.mxu0 0
    %1103 = vmatprep.subr.bf16.mxu0 0
    %1104 = vmatpush1.bf16.msra.mxu0 0
    %1105 = vmatprep.subr.bf16.mxu0 0
    %1106 = vmatpush1.bf16.msra.mxu0 0
    %1107 = vmatprep.subr.bf16.mxu0 0
    %1108 = vmatpush1.bf16.msra.mxu0 0
    %1109 = vmatprep.subr.bf16.mxu0 0
    %1110 = vmatpush1.bf16.msra.mxu0 0
    %1111 = vmatprep.subr.bf16.mxu0 0
    %1112 = vmatpush1.bf16.msra.mxu0 0
    %1113 = vmatprep.subr.bf16.mxu0 0
    %1114 = vmatpush1.bf16.msra.mxu0 0
    %1115 = vmatprep.subr.bf16.mxu0 0
    %1116 = vmatpush1.bf16.msra.mxu0 0
    %1117 = vmatprep.subr.bf16.mxu0 0
    %1118 = vmatpush1.bf16.msra.mxu0 0
    %1119 = vmatprep.subr.bf16.mxu0 0
    %1120 = vmatpush1.bf16.msra.mxu0 0
    %1121 = vmatprep.subr.bf16.mxu0 0
    %1122 = vmatpush1.bf16.msra.mxu0 0
    %1123 = vmatprep.subr.bf16.mxu0 0
    %1124 = vmatpush1.bf16.msra.mxu0 0
    %1125 = vmatprep.subr.bf16.mxu0 0
    %1126 = vmatpush1.bf16.msra.mxu0 0
    %1127 = vmatprep.mubr.bf16.mxu0 0
    %1128 = vmatmul.mubr.bf16.gmra.mrb[0].mxu0 %v1090
    %v1129 = vpop.f32.mrb[0].mxu0
    %v1130 = vadd.f32 0.0, %v1129
    %v1131 = vpop.f32.mrb[0].mxu0
    %v1132 = vpop.f32.mrb[0].mxu0
    %v1133 = vadd.f32 0.0, %v1132
    %v1134 = vpop.f32.mrb[0].mxu0
    %1135 = vdwg.mxu0
    %v1136 = vsel %vm49, %v989, 0.0
    %v1137 = vsel %vm49, %v1036, 0.0
    %v1138 = vadd.f32 %v1136, %v1137
    %v1139 = vsel %vm49, %v1083, 0.0
    %v1140 = vadd.f32 %v1138, %v1139
    %v1141 = vsel %vm49, %v1130, 0.0
    %v1142 = vadd.f32 %v1140, %v1141
    %v1143 = vsel %vm49, %v992, 0.0
    %v1144 = vsel %vm49, %v1039, 0.0
    %v1145 = vadd.f32 %v1143, %v1144
    %v1146 = vsel %vm49, %v1086, 0.0
    %v1147 = vadd.f32 %v1145, %v1146
    %v1148 = vsel %vm49, %v1133, 0.0
    %v1149 = vadd.f32 %v1147, %v1148
    %v1150 = vlaneseq
    %v1151 = vshrl.u32 %v1150, 7
    %v1152 = vsub.s32 1, %v1151
    %v1153 = vrot.slane %v93, %v1152
    %v1154 = vadd.f32 %v1142, %v1153
    %v1155 = vadd.f32 %v1149, %v1153
    %v1156 = vadd.f32 %v1154, %v91
    %v1157 = vadd.f32 %v1155, %v92
    %v1158 = vsel %vm49, %v1156, 0.0
    %1159 = vadd.xlane.f32.xlu0 %v1158
    %v1160 = vpop.xlane.xlu0 %1159
    %v1161 = vsel %vm49, %v1157, 0.0
    %1162 = vadd.xlane.f32.xlu0 %v1161
    %v1163 = vpop.xlane.xlu0 %1162
    %v1164 = vmul.f32 %v1160, %v56
    %v1165 = vmul.f32 %v1163, %v56
    %v1166 = vsub.f32 %v1156, %v1164
    %v1167 = vsub.f32 %v1157, %v1165
    %v1168 = vmul.f32 %v1166, %v1166
    %v1169 = vmul.f32 %v1167, %v1167
    %v1170 = vsel %vm49, %v1168, 0.0
    %1171 = vadd.xlane.f32.xlu0 %v1170
    %v1172 = vpop.xlane.xlu0 %1171
    %v1173 = vsel %vm49, %v1169, 0.0
    %1174 = vadd.xlane.f32.xlu0 %v1173
    %v1175 = vpop.xlane.xlu0 %1174
    %v1176 = vmul.f32 %v1172, %v56
    %v1177 = vmul.f32 %v1175, %v56
    %v1178 = vadd.f32 %v1176, 1e-12
    %v1179 = vadd.f32 %v1177, 1e-12
    %v1180 = vrsqrt.pop %v1178
    %v1181 = vrsqrt.pop %v1179
    %v1182 = vmul.f32 %v1166, %v1180
    %v1183 = vmul.f32 %v1167, %v1181
    %v1184 = vlaneseq
    %v1185 = vshrl.u32 %v1184, 7
    %v1186 = vsub.s32 2, %v1185
    %v1187 = vrot.slane %v93, %v1186
    %v1188 = vmul.f32 %v1182, %v1187
    %v1189 = vmul.f32 %v1183, %v1187
    %v1190 = vlaneseq
    %v1191 = vshrl.u32 %v1190, 7
    %v1192 = vsub.s32 3, %v1191
    %v1193 = vrot.slane %v93, %v1192
    %v1194 = vadd.f32 %v1188, %v1193
    %v1195 = vadd.f32 %v1189, %v1193
    %v1196 = vpack.c.bf16 %v1195, %v1194
    %v1197 = vld [vmem:[%s7] sm:$0xf]
    %v1198 = vld [vmem:[%s7 + $0x4] sm:$0xf]
    %v1199 = vld [vmem:[%s7 + $0x8] sm:$0xf]
    %v1200 = vld [vmem:[%s7 + $0xc] sm:$0xf]
    %v1201 = vlaneseq
    %v1202 = vshrl.u32 %v1201, 7
    %v1203 = vsub.s32 4, %v1202
    %v1204 = vrot.slane %v93, %v1203
    %v1209 = vunpack.c.l.b16 %v1197
    %v1210 = vunpack.c.l.b16 %v1198
    %v1211 = vunpack.c.l.b16 %v1199
    %v1212 = vunpack.c.l.b16 %v1200
    %v1213 = vpack.c.b16 %v1210, %v1209
    %v1214 = vpack.c.b16 %v1212, %v1211
    %v1218 = vsel %vm49, %v1196, 0
    %1220 = vmatprep.subr.bf16.mxu0 0
    %1221 = vmatpush1.bf16.msra.mxu0 %v1213
    %1222 = vmatprep.subr.bf16.mxu0 0
    %1223 = vmatpush1.bf16.msra.mxu0 %v1214
    %1224 = vmatprep.subr.bf16.mxu0 0
    %1225 = vmatpush1.bf16.msra.mxu0 0
    %1226 = vmatprep.subr.bf16.mxu0 0
    %1227 = vmatpush1.bf16.msra.mxu0 0
    %1228 = vmatprep.subr.bf16.mxu0 0
    %1229 = vmatpush1.bf16.msra.mxu0 0
    %1230 = vmatprep.subr.bf16.mxu0 0
    %1231 = vmatpush1.bf16.msra.mxu0 0
    %1232 = vmatprep.subr.bf16.mxu0 0
    %1233 = vmatpush1.bf16.msra.mxu0 0
    %1234 = vmatprep.subr.bf16.mxu0 0
    %1235 = vmatpush1.bf16.msra.mxu0 0
    %1236 = vmatprep.subr.bf16.mxu0 0
    %1237 = vmatpush1.bf16.msra.mxu0 0
    %1238 = vmatprep.subr.bf16.mxu0 0
    %1239 = vmatpush1.bf16.msra.mxu0 0
    %1240 = vmatprep.subr.bf16.mxu0 0
    %1241 = vmatpush1.bf16.msra.mxu0 0
    %1242 = vmatprep.subr.bf16.mxu0 0
    %1243 = vmatpush1.bf16.msra.mxu0 0
    %1244 = vmatprep.subr.bf16.mxu0 0
    %1245 = vmatpush1.bf16.msra.mxu0 0
    %1246 = vmatprep.subr.bf16.mxu0 0
    %1247 = vmatpush1.bf16.msra.mxu0 0
    %1248 = vmatprep.subr.bf16.mxu0 0
    %1249 = vmatpush1.bf16.msra.mxu0 0
    %1250 = vmatprep.subr.bf16.mxu0 0
    %1251 = vmatpush1.bf16.msra.mxu0 0
    %1252 = vmatprep.mubr.bf16.mxu0 0
    %1253 = vmatmul.mubr.bf16.gmra.mrb[0].mxu0 %v1218
    %v1254 = vpop.f32.mrb[0].mxu0
    %v1255 = vadd.f32 %v1204, %v1254
    %v1256 = vpop.f32.mrb[0].mxu0
    %v1257 = vpop.f32.mrb[0].mxu0
    %v1258 = vadd.f32 %v1204, %v1257
    %v1259 = vpop.f32.mrb[0].mxu0
    %1260 = vdwg.mxu0
    %v1261 = vmul.f32 %v1255, 0.5
    %v1262 = vmul.f32 %v1258, 0.5
    %v1263 = vmul.f32 %v1255, 0.044715
    %v1264 = vmul.f32 %v1258, 0.044715
    %v1265 = vmul.f32 %v1263, %v1255
    %v1266 = vmul.f32 %v1264, %v1258
    %v1267 = vmul.f32 %v1265, %v1255
    %v1268 = vmul.f32 %v1266, %v1258
    %v1269 = vadd.f32 %v1255, %v1267
    %v1270 = vadd.f32 %v1258, %v1268
    %v1271 = vmul.f32 %v1269, 0.7978846
    %v1272 = vmul.f32 %v1270, 0.7978846
    %v1273 = vtanh.pop %v1271
    %v1274 = vtanh.pop %v1272
    %v1275 = vadd.f32 %v1273, 1.0
    %v1276 = vadd.f32 %v1274, 1.0
    %v1277 = vmul.f32 %v1261, %v1275
    %v1278 = vmul.f32 %v1262, %v1276
    %v1279 = vpack.c.bf16 %v1278, %v1277
    %v1280 = vld [vmem:[%s8] sm:$0xf]
    %v1281 = vld [vmem:[%s8 + $0x4] sm:$0xf]
    %v1282 = vld [vmem:[%s8 + $0x8] sm:$0xf]
    %v1283 = vld [vmem:[%s8 + $0xc] sm:$0xf]
    %v1284 = vld [vmem:[%s8 + $0x10] sm:$0xf]
    %v1285 = vld [vmem:[%s8 + $0x14] sm:$0xf]
    %v1286 = vld [vmem:[%s8 + $0x18] sm:$0xf]
    %v1287 = vld [vmem:[%s8 + $0x1c] sm:$0xf]
    %v1288 = vlaneseq
    %v1289 = vshrl.u32 %v1288, 7
    %v1290 = vsub.s32 5, %v1289
    %v1291 = vrot.slane %v93, %v1290
    %v1300 = vunpack.c.l.b16 %v1280
    %v1301 = vunpack.c.l.b16 %v1281
    %v1302 = vunpack.c.l.b16 %v1282
    %v1303 = vunpack.c.l.b16 %v1283
    %v1304 = vunpack.c.l.b16 %v1284
    %v1305 = vunpack.c.l.b16 %v1285
    %v1306 = vunpack.c.l.b16 %v1286
    %v1307 = vunpack.c.l.b16 %v1287
    %v1308 = vpack.c.b16 %v1301, %v1300
    %v1309 = vpack.c.b16 %v1303, %v1302
    %v1310 = vpack.c.b16 %v1305, %v1304
    %v1311 = vpack.c.b16 %v1307, %v1306
    %vm1316 = vcmask 523264
    %v1318 = vsel %vm1316, %v1279, 0
    %1320 = vmatprep.subr.bf16.mxu0 0
    %1321 = vmatpush1.bf16.msra.mxu0 %v1308
    %1322 = vmatprep.subr.bf16.mxu0 0
    %1323 = vmatpush1.bf16.msra.mxu0 %v1309
    %1324 = vmatprep.subr.bf16.mxu0 0
    %1325 = vmatpush1.bf16.msra.mxu0 %v1310
    %1326 = vmatprep.subr.bf16.mxu0 0
    %1327 = vmatpush1.bf16.msra.mxu0 %v1311
    %1328 = vmatprep.subr.bf16.mxu0 0
    %1329 = vmatpush1.bf16.msra.mxu0 0
    %1330 = vmatprep.subr.bf16.mxu0 0
    %1331 = vmatpush1.bf16.msra.mxu0 0
    %1332 = vmatprep.subr.bf16.mxu0 0
    %1333 = vmatpush1.bf16.msra.mxu0 0
    %1334 = vmatprep.subr.bf16.mxu0 0
    %1335 = vmatpush1.bf16.msra.mxu0 0
    %1336 = vmatprep.subr.bf16.mxu0 0
    %1337 = vmatpush1.bf16.msra.mxu0 0
    %1338 = vmatprep.subr.bf16.mxu0 0
    %1339 = vmatpush1.bf16.msra.mxu0 0
    %1340 = vmatprep.subr.bf16.mxu0 0
    %1341 = vmatpush1.bf16.msra.mxu0 0
    %1342 = vmatprep.subr.bf16.mxu0 0
    %1343 = vmatpush1.bf16.msra.mxu0 0
    %1344 = vmatprep.subr.bf16.mxu0 0
    %1345 = vmatpush1.bf16.msra.mxu0 0
    %1346 = vmatprep.subr.bf16.mxu0 0
    %1347 = vmatpush1.bf16.msra.mxu0 0
    %1348 = vmatprep.subr.bf16.mxu0 0
    %1349 = vmatpush1.bf16.msra.mxu0 0
    %1350 = vmatprep.subr.bf16.mxu0 0
    %1351 = vmatpush1.bf16.msra.mxu0 0
    %1352 = vmatprep.mubr.bf16.mxu0 0
    %1353 = vmatmul.mubr.bf16.gmra.mrb[0].mxu0 %v1318
    %v1354 = vpop.f32.mrb[0].mxu0
    %v1355 = vadd.f32 %v1291, %v1354
    %v1356 = vpop.f32.mrb[0].mxu0
    %v1357 = vpop.f32.mrb[0].mxu0
    %v1358 = vadd.f32 %v1291, %v1357
    %v1359 = vpop.f32.mrb[0].mxu0
    %1360 = vdwg.mxu0
    %v1361 = vadd.f32 %v1355, %v1194
    %v1362 = vadd.f32 %v1358, %v1195
    %v1363 = vsel %vm49, %v1361, 0.0
    %1364 = vadd.xlane.f32.xlu0 %v1363
    %v1365 = vpop.xlane.xlu0 %1364
    %v1366 = vsel %vm49, %v1362, 0.0
    %1367 = vadd.xlane.f32.xlu0 %v1366
    %v1368 = vpop.xlane.xlu0 %1367
    %v1369 = vmul.f32 %v1365, %v56
    %v1370 = vmul.f32 %v1368, %v56
    %v1371 = vsub.f32 %v1361, %v1369
    %v1372 = vsub.f32 %v1362, %v1370
    %v1373 = vmul.f32 %v1371, %v1371
    %v1374 = vmul.f32 %v1372, %v1372
    %v1375 = vsel %vm49, %v1373, 0.0
    %1376 = vadd.xlane.f32.xlu0 %v1375
    %v1377 = vpop.xlane.xlu0 %1376
    %v1378 = vsel %vm49, %v1374, 0.0
    %1379 = vadd.xlane.f32.xlu0 %v1378
    %v1380 = vpop.xlane.xlu0 %1379
    %v1381 = vmul.f32 %v1377, %v56
    %v1382 = vmul.f32 %v1380, %v56
    %v1383 = vadd.f32 %v1381, 1e-12
    %v1384 = vadd.f32 %v1382, 1e-12
    %v1385 = vrsqrt.pop %v1383
    %v1386 = vrsqrt.pop %v1384
    %v1387 = vmul.f32 %v1371, %v1385
    %v1388 = vmul.f32 %v1372, %v1386
    %v1389 = vlaneseq
    %v1390 = vshrl.u32 %v1389, 7
    %v1391 = vsub.s32 6, %v1390
    %v1392 = vrot.slane %v93, %v1391
    %v1393 = vmul.f32 %v1387, %v1392
    %v1394 = vmul.f32 %v1388, %v1392
    %v1395 = vlaneseq
    %v1396 = vshrl.u32 %v1395, 7
    %v1397 = vsub.s32 7, %v1396
    %v1398 = vrot.slane %v93, %v1397
    %v1399 = vadd.f32 %v1393, %v1398
    %v1400 = vadd.f32 %v1394, %v1398
    %s1401 = scalar_lea.vmem %s9, 8
    %v1402 = vld [vmem:[%s1401] sm:$0xff]
    %v1403 = vpack.c.bf16 %v1400, %v1399
    %s1404 = scalar_lea.vmem %s4, 16
    %v1405 = vld [vmem:[%s1404] sm:$0xf]
    %v1406 = vld [vmem:[%s1404 + $0x4] sm:$0xf]
    %v1407 = vld [vmem:[%s1404 + $0x8] sm:$0xf]
    %v1408 = vld [vmem:[%s1404 + $0xc] sm:$0xf]
    %v1409 = vlaneseq
    %v1410 = vshrl.u32 %v1409, 7
    %v1411 = vsub.s32 0, %v1410
    %v1412 = vrot.slane %v1402, %v1411
    %v1417 = vunpack.c.l.b16 %v1405
    %v1418 = vunpack.c.l.b16 %v1406
    %v1419 = vunpack.c.l.b16 %v1407
    %v1420 = vunpack.c.l.b16 %v1408
    %v1421 = vpack.c.b16 %v1418, %v1417
    %v1422 = vpack.c.b16 %v1420, %v1419
    %v1426 = vsel %vm49, %v1403, 0
    %1428 = vmatprep.subr.bf16.mxu0 0
    %1429 = vmatpush1.bf16.msra.mxu0 %v1421
    %1430 = vmatprep.subr.bf16.mxu0 0
    %1431 = vmatpush1.bf16.msra.mxu0 %v1422
    %1432 = vmatprep.subr.bf16.mxu0 0
    %1433 = vmatpush1.bf16.msra.mxu0 0
    %1434 = vmatprep.subr.bf16.mxu0 0
    %1435 = vmatpush1.bf16.msra.mxu0 0
    %1436 = vmatprep.subr.bf16.mxu0 0
    %1437 = vmatpush1.bf16.msra.mxu0 0
    %1438 = vmatprep.subr.bf16.mxu0 0
    %1439 = vmatpush1.bf16.msra.mxu0 0
    %1440 = vmatprep.subr.bf16.mxu0 0
    %1441 = vmatpush1.bf16.msra.mxu0 0
    %1442 = vmatprep.subr.bf16.mxu0 0
    %1443 = vmatpush1.bf16.msra.mxu0 0
    %1444 = vmatprep.subr.bf16.mxu0 0
    %1445 = vmatpush1.bf16.msra.mxu0 0
    %1446 = vmatprep.subr.bf16.mxu0 0
    %1447 = vmatpush1.bf16.msra.mxu0 0
    %1448 = vmatprep.subr.bf16.mxu0 0
    %1449 = vmatpush1.bf16.msra.mxu0 0
    %1450 = vmatprep.subr.bf16.mxu0 0
    %1451 = vmatpush1.bf16.msra.mxu0 0
    %1452 = vmatprep.subr.bf16.mxu0 0
    %1453 = vmatpush1.bf16.msra.mxu0 0
    %1454 = vmatprep.subr.bf16.mxu0 0
    %1455 = vmatpush1.bf16.msra.mxu0 0
    %1456 = vmatprep.subr.bf16.mxu0 0
    %1457 = vmatpush1.bf16.msra.mxu0 0
    %1458 = vmatprep.subr.bf16.mxu0 0
    %1459 = vmatpush1.bf16.msra.mxu0 0
    %1460 = vmatprep.mubr.bf16.mxu0 0
    %1461 = vmatmul.mubr.bf16.gmra.mrb[0].mxu0 %v1426
    %v1462 = vpop.f32.mrb[0].mxu0
    %v1463 = vadd.f32 %v1412, %v1462
    %v1464 = vpop.f32.mrb[0].mxu0
    %v1465 = vpop.f32.mrb[0].mxu0
    %v1466 = vadd.f32 %v1412, %v1465
    %v1467 = vpop.f32.mrb[0].mxu0
    %1468 = vdwg.mxu0
    %1469 = vxpose.xlu0.b32.start [1/16] %v1463, 128
    %1470 = vxpose.xlu0.b32.cont [2/16] %v1466, 128
    %1471 = vxpose.xlu0.b32.cont [3/16] 0.0, 128
    %1472 = vxpose.xlu0.b32.cont [4/16] 0.0, 128
    %1473 = vxpose.xlu0.b32.cont [5/16] 0.0, 128
    %1474 = vxpose.xlu0.b32.cont [6/16] 0.0, 128
    %1475 = vxpose.xlu0.b32.cont [7/16] 0.0, 128
    %1476 = vxpose.xlu0.b32.cont [8/16] 0.0, 128
    %1477 = vxpose.xlu0.b32.cont [9/16] 0.0, 128
    %1478 = vxpose.xlu0.b32.cont [10/16] 0.0, 128
    %1479 = vxpose.xlu0.b32.cont [11/16] 0.0, 128
    %1480 = vxpose.xlu0.b32.cont [12/16] 0.0, 128
    %1481 = vxpose.xlu0.b32.cont [13/16] 0.0, 128
    %1482 = vxpose.xlu0.b32.cont [14/16] 0.0, 128
    %1483 = vxpose.xlu0.b32.cont [15/16] 0.0, 128
    %1484 = vxpose.xlu0.b32.end [16/16] 0.0, 128
    %v1485 = vpop.trf.xlu0
    %v1486 = vpop.trf.xlu0
    %v1487 = vpop.trf.xlu0
    %v1488 = vpop.trf.xlu0
    %v1489 = vpop.trf.xlu0
    %v1490 = vpop.trf.xlu0
    %v1491 = vpop.trf.xlu0
    %v1492 = vpop.trf.xlu0
    %v1493 = vpop.trf.xlu0
    %v1494 = vpop.trf.xlu0
    %v1495 = vpop.trf.xlu0
    %v1496 = vpop.trf.xlu0
    %v1497 = vpop.trf.xlu0
    %v1498 = vpop.trf.xlu0
    %v1499 = vpop.trf.xlu0
    %v1500 = vpop.trf.xlu0
    %s1501 = scalar_lea.vmem %s5, 32
    %v1502 = vld [vmem:[%s1501] sm:$0xf]
    %v1503 = vld [vmem:[%s1501 + $0x4] sm:$0xf]
    %v1504 = vld [vmem:[%s1501 + $0x8] sm:$0xf]
    %v1505 = vld [vmem:[%s1501 + $0xc] sm:$0xf]
    %v1506 = vld [vmem:[%s1501 + $0x10] sm:$0xf]
    %v1507 = vld [vmem:[%s1501 + $0x14] sm:$0xf]
    %v1508 = vld [vmem:[%s1501 + $0x18] sm:$0xf]
    %v1509 = vld [vmem:[%s1501 + $0x1c] sm:$0xf]
    %v1510 = vpack.c.bf16 %v1498, %v1497
    %v1519 = vunpack.c.l.b16 %v1502
    %v1520 = vunpack.c.l.b16 %v1503
    %v1521 = vunpack.c.l.b16 %v1504
    %v1522 = vunpack.c.l.b16 %v1505
    %v1523 = vunpack.c.l.b16 %v1506
    %v1524 = vunpack.c.l.b16 %v1507
    %v1525 = vunpack.c.l.b16 %v1508
    %v1526 = vunpack.c.l.b16 %v1509
    %v1527 = vpack.c.b16 %v1520, %v1519
    %v1528 = vpack.c.b16 %v1522, %v1521
    %v1529 = vpack.c.b16 %v1524, %v1523
    %v1530 = vpack.c.b16 %v1526, %v1525
    %v1532 = vsel %vm220, %v1527, 0
    %v1535 = vsel %vm220, %v1528, 0
    %v1538 = vsel %vm220, %v1529, 0
    %v1541 = vsel %vm220, %v1530, 0
    %1543 = vmatprep.subr.bf16.mxu0 0
    %1544 = vmatpush1.bf16.msra.mxu0 %v1510
    %1545 = vmatprep.subr.bf16.mxu0 0
    %1546 = vmatpush1.bf16.msra.mxu0 0
    %1547 = vmatprep.subr.bf16.mxu0 0
    %1548 = vmatpush1.bf16.msra.mxu0 0
    %1549 = vmatprep.subr.bf16.mxu0 0
    %1550 = vmatpush1.bf16.msra.mxu0 0
    %1551 = vmatprep.subr.bf16.mxu0 0
    %1552 = vmatpush1.bf16.msra.mxu0 0
    %1553 = vmatprep.subr.bf16.mxu0 0
    %1554 = vmatpush1.bf16.msra.mxu0 0
    %1555 = vmatprep.subr.bf16.mxu0 0
    %1556 = vmatpush1.bf16.msra.mxu0 0
    %1557 = vmatprep.subr.bf16.mxu0 0
    %1558 = vmatpush1.bf16.msra.mxu0 0
    %1559 = vmatprep.subr.bf16.mxu0 0
    %1560 = vmatpush1.bf16.msra.mxu0 0
    %1561 = vmatprep.subr.bf16.mxu0 0
    %1562 = vmatpush1.bf16.msra.mxu0 0
    %1563 = vmatprep.subr.bf16.mxu0 0
    %1564 = vmatpush1.bf16.msra.mxu0 0
    %1565 = vmatprep.subr.bf16.mxu0 0
    %1566 = vmatpush1.bf16.msra.mxu0 0
    %1567 = vmatprep.subr.bf16.mxu0 0
    %1568 = vmatpush1.bf16.msra.mxu0 0
    %1569 = vmatprep.subr.bf16.mxu0 0
    %1570 = vmatpush1.bf16.msra.mxu0 0
    %1571 = vmatprep.subr.bf16.mxu0 0
    %1572 = vmatpush1.bf16.msra.mxu0 0
    %1573 = vmatprep.subr.bf16.mxu0 0
    %1574 = vmatpush1.bf16.msra.mxu0 0
    %1575 = vmatprep.mubr.bf16.mxu0 0
    %1576 = vmatmul.mubr.bf16.gmra.mrb[0].mxu0 %v1532
    %v1577 = vpop.f32.mrb[0].mxu0
    %v1578 = vadd.f32 0.0, %v1577
    %v1579 = vpop.f32.mrb[0].mxu0
    %v1580 = vpop.f32.mrb[0].mxu0
    %v1581 = vadd.f32 0.0, %v1580
    %v1582 = vpop.f32.mrb[0].mxu0
    %1583 = vmatprep.mubr.bf16.mxu0 0
    %1584 = vmatmul.mubr.bf16.gmra.mrb[0].mxu0 %v1535
    %v1585 = vpop.f32.mrb[0].mxu0
    %v1586 = vadd.f32 0.0, %v1585
    %v1587 = vpop.f32.mrb[0].mxu0
    %v1588 = vpop.f32.mrb[0].mxu0
    %v1589 = vadd.f32 0.0, %v1588
    %v1590 = vpop.f32.mrb[0].mxu0
    %1591 = vmatprep.mubr.bf16.mxu0 0
    %1592 = vmatmul.mubr.bf16.gmra.mrb[0].mxu0 %v1538
    %v1593 = vpop.f32.mrb[0].mxu0
    %v1594 = vadd.f32 0.0, %v1593
    %v1595 = vpop.f32.mrb[0].mxu0
    %v1596 = vpop.f32.mrb[0].mxu0
    %v1597 = vadd.f32 0.0, %v1596
    %v1598 = vpop.f32.mrb[0].mxu0
    %1599 = vmatprep.mubr.bf16.mxu0 0
    %1600 = vmatmul.mubr.bf16.gmra.mrb[0].mxu0 %v1541
    %v1601 = vpop.f32.mrb[0].mxu0
    %v1602 = vadd.f32 0.0, %v1601
    %v1603 = vpop.f32.mrb[0].mxu0
    %v1604 = vpop.f32.mrb[0].mxu0
    %v1605 = vadd.f32 0.0, %v1604
    %v1606 = vpop.f32.mrb[0].mxu0
    %1607 = vdwg.mxu0
    %v1608 = vmul.f32 %v1578, 2.0
    %v1609 = vmul.f32 %v1581, 2.0
    %v1610 = vmul.f32 %v1586, 2.0
    %v1611 = vmul.f32 %v1589, 2.0
    %v1612 = vmul.f32 %v1594, 2.0
    %v1613 = vmul.f32 %v1597, 2.0
    %v1614 = vmul.f32 %v1602, 2.0
    %v1615 = vmul.f32 %v1605, 2.0
    %v1616 = vadd.f32 %v1485, %v1608
    %v1617 = vadd.f32 %v1486, %v1609
    %v1618 = vadd.f32 %v1487, %v1610
    %v1619 = vadd.f32 %v1488, %v1611
    %v1620 = vadd.f32 %v1493, %v1612
    %v1621 = vadd.f32 %v1494, %v1613
    %v1622 = vadd.f32 %v1495, %v1614
    %v1623 = vadd.f32 %v1496, %v1615
    %1624 = vxpose.xlu0.b32.start [1/16] %v1616, 128
    %1625 = vxpose.xlu0.b32.cont [2/16] 0.0, 128
    %1626 = vxpose.xlu0.b32.cont [3/16] 0.0, 128
    %1627 = vxpose.xlu0.b32.cont [4/16] 0.0, 128
    %1628 = vxpose.xlu0.b32.cont [5/16] 0.0, 128
    %1629 = vxpose.xlu0.b32.cont [6/16] 0.0, 128
    %1630 = vxpose.xlu0.b32.cont [7/16] 0.0, 128
    %1631 = vxpose.xlu0.b32.cont [8/16] 0.0, 128
    %1632 = vxpose.xlu0.b32.cont [9/16] 0.0, 128
    %1633 = vxpose.xlu0.b32.cont [10/16] 0.0, 128
    %1634 = vxpose.xlu0.b32.cont [11/16] 0.0, 128
    %1635 = vxpose.xlu0.b32.cont [12/16] 0.0, 128
    %1636 = vxpose.xlu0.b32.cont [13/16] 0.0, 128
    %1637 = vxpose.xlu0.b32.cont [14/16] 0.0, 128
    %1638 = vxpose.xlu0.b32.cont [15/16] 0.0, 128
    %1639 = vxpose.xlu0.b32.end [16/16] 0.0, 128
    %v1640 = vpop.trf.xlu0
    %v1641 = vpop.trf.xlu0
    %v1642 = vpop.trf.xlu0
    %v1643 = vpop.trf.xlu0
    %v1644 = vpop.trf.xlu0
    %v1645 = vpop.trf.xlu0
    %v1646 = vpop.trf.xlu0
    %v1647 = vpop.trf.xlu0
    %v1648 = vpop.trf.xlu0
    %v1649 = vpop.trf.xlu0
    %v1650 = vpop.trf.xlu0
    %v1651 = vpop.trf.xlu0
    %v1652 = vpop.trf.xlu0
    %v1653 = vpop.trf.xlu0
    %v1654 = vpop.trf.xlu0
    %v1655 = vpop.trf.xlu0
    %1656 = vxpose.xlu0.b32.start [1/16] %v1617, 128
    %1657 = vxpose.xlu0.b32.cont [2/16] 0.0, 128
    %1658 = vxpose.xlu0.b32.cont [3/16] 0.0, 128
    %1659 = vxpose.xlu0.b32.cont [4/16] 0.0, 128
    %1660 = vxpose.xlu0.b32.cont [5/16] 0.0, 128
    %1661 = vxpose.xlu0.b32.cont [6/16] 0.0, 128
    %1662 = vxpose.xlu0.b32.cont [7/16] 0.0, 128
    %1663 = vxpose.xlu0.b32.cont [8/16] 0.0, 128
    %1664 = vxpose.xlu0.b32.cont [9/16] 0.0, 128
    %1665 = vxpose.xlu0.b32.cont [10/16] 0.0, 128
    %1666 = vxpose.xlu0.b32.cont [11/16] 0.0, 128
    %1667 = vxpose.xlu0.b32.cont [12/16] 0.0, 128
    %1668 = vxpose.xlu0.b32.cont [13/16] 0.0, 128
    %1669 = vxpose.xlu0.b32.cont [14/16] 0.0, 128
    %1670 = vxpose.xlu0.b32.cont [15/16] 0.0, 128
    %1671 = vxpose.xlu0.b32.end [16/16] 0.0, 128
    %v1672 = vpop.trf.xlu0
    %v1673 = vpop.trf.xlu0
    %v1674 = vpop.trf.xlu0
    %v1675 = vpop.trf.xlu0
    %v1676 = vpop.trf.xlu0
    %v1677 = vpop.trf.xlu0
    %v1678 = vpop.trf.xlu0
    %v1679 = vpop.trf.xlu0
    %v1680 = vpop.trf.xlu0
    %v1681 = vpop.trf.xlu0
    %v1682 = vpop.trf.xlu0
    %v1683 = vpop.trf.xlu0
    %v1684 = vpop.trf.xlu0
    %v1685 = vpop.trf.xlu0
    %v1686 = vpop.trf.xlu0
    %v1687 = vpop.trf.xlu0
    %1688 = vxpose.xlu0.b32.start [1/16] %v1618, 128
    %1689 = vxpose.xlu0.b32.cont [2/16] 0.0, 128
    %1690 = vxpose.xlu0.b32.cont [3/16] 0.0, 128
    %1691 = vxpose.xlu0.b32.cont [4/16] 0.0, 128
    %1692 = vxpose.xlu0.b32.cont [5/16] 0.0, 128
    %1693 = vxpose.xlu0.b32.cont [6/16] 0.0, 128
    %1694 = vxpose.xlu0.b32.cont [7/16] 0.0, 128
    %1695 = vxpose.xlu0.b32.cont [8/16] 0.0, 128
    %1696 = vxpose.xlu0.b32.cont [9/16] 0.0, 128
    %1697 = vxpose.xlu0.b32.cont [10/16] 0.0, 128
    %1698 = vxpose.xlu0.b32.cont [11/16] 0.0, 128
    %1699 = vxpose.xlu0.b32.cont [12/16] 0.0, 128
    %1700 = vxpose.xlu0.b32.cont [13/16] 0.0, 128
    %1701 = vxpose.xlu0.b32.cont [14/16] 0.0, 128
    %1702 = vxpose.xlu0.b32.cont [15/16] 0.0, 128
    %1703 = vxpose.xlu0.b32.end [16/16] 0.0, 128
    %v1704 = vpop.trf.xlu0
    %v1705 = vpop.trf.xlu0
    %v1706 = vpop.trf.xlu0
    %v1707 = vpop.trf.xlu0
    %v1708 = vpop.trf.xlu0
    %v1709 = vpop.trf.xlu0
    %v1710 = vpop.trf.xlu0
    %v1711 = vpop.trf.xlu0
    %v1712 = vpop.trf.xlu0
    %v1713 = vpop.trf.xlu0
    %v1714 = vpop.trf.xlu0
    %v1715 = vpop.trf.xlu0
    %v1716 = vpop.trf.xlu0
    %v1717 = vpop.trf.xlu0
    %v1718 = vpop.trf.xlu0
    %v1719 = vpop.trf.xlu0
    %1720 = vxpose.xlu0.b32.start [1/16] %v1619, 128
    %1721 = vxpose.xlu0.b32.cont [2/16] 0.0, 128
    %1722 = vxpose.xlu0.b32.cont [3/16] 0.0, 128
    %1723 = vxpose.xlu0.b32.cont [4/16] 0.0, 128
    %1724 = vxpose.xlu0.b32.cont [5/16] 0.0, 128
    %1725 = vxpose.xlu0.b32.cont [6/16] 0.0, 128
    %1726 = vxpose.xlu0.b32.cont [7/16] 0.0, 128
    %1727 = vxpose.xlu0.b32.cont [8/16] 0.0, 128
    %1728 = vxpose.xlu0.b32.cont [9/16] 0.0, 128
    %1729 = vxpose.xlu0.b32.cont [10/16] 0.0, 128
    %1730 = vxpose.xlu0.b32.cont [11/16] 0.0, 128
    %1731 = vxpose.xlu0.b32.cont [12/16] 0.0, 128
    %1732 = vxpose.xlu0.b32.cont [13/16] 0.0, 128
    %1733 = vxpose.xlu0.b32.cont [14/16] 0.0, 128
    %1734 = vxpose.xlu0.b32.cont [15/16] 0.0, 128
    %1735 = vxpose.xlu0.b32.end [16/16] 0.0, 128
    %v1736 = vpop.trf.xlu0
    %v1737 = vpop.trf.xlu0
    %v1738 = vpop.trf.xlu0
    %v1739 = vpop.trf.xlu0
    %v1740 = vpop.trf.xlu0
    %v1741 = vpop.trf.xlu0
    %v1742 = vpop.trf.xlu0
    %v1743 = vpop.trf.xlu0
    %v1744 = vpop.trf.xlu0
    %v1745 = vpop.trf.xlu0
    %v1746 = vpop.trf.xlu0
    %v1747 = vpop.trf.xlu0
    %v1748 = vpop.trf.xlu0
    %v1749 = vpop.trf.xlu0
    %v1750 = vpop.trf.xlu0
    %v1751 = vpop.trf.xlu0
    %v1752 = vpack.c.bf16 %v1641, %v1640
    %v1753 = vpack.c.bf16 %v1673, %v1672
    %v1754 = vpack.c.bf16 %v1705, %v1704
    %v1755 = vpack.c.bf16 %v1737, %v1736
    %v1756 = vpack.c.bf16 %v1489, %v1489
    %v1757 = vpack.c.bf16 %v1490, %v1490
    %v1758 = vpack.c.bf16 %v1491, %v1491
    %v1759 = vpack.c.bf16 %v1492, %v1492
    %v1761 = vsel %vm450, %v1752, 0
    %v1764 = vsel %vm454, %v1756, 0
    %1766 = vmatprep.subr.bf16.mxu0 0
    %1767 = vmatpush1.bf16.msra.mxu0 %v1764
    %1768 = vmatprep.subr.bf16.mxu0 0
    %1769 = vmatpush1.bf16.msra.mxu0 0
    %1770 = vmatprep.subr.bf16.mxu0 0
    %1771 = vmatpush1.bf16.msra.mxu0 0
    %1772 = vmatprep.subr.bf16.mxu0 0
    %1773 = vmatpush1.bf16.msra.mxu0 0
    %1774 = vmatprep.subr.bf16.mxu0 0
    %1775 = vmatpush1.bf16.msra.mxu0 0
    %1776 = vmatprep.subr.bf16.mxu0 0
    %1777 = vmatpush1.bf16.msra.mxu0 0
    %1778 = vmatprep.subr.bf16.mxu0 0
    %1779 = vmatpush1.bf16.msra.mxu0 0
    %1780 = vmatprep.subr.bf16.mxu0 0
    %1781 = vmatpush1.bf16.msra.mxu0 0
    %1782 = vmatprep.subr.bf16.mxu0 0
    %1783 = vmatpush1.bf16.msra.mxu0 0
    %1784 = vmatprep.subr.bf16.mxu0 0
    %1785 = vmatpush1.bf16.msra.mxu0 0
    %1786 = vmatprep.subr.bf16.mxu0 0
    %1787 = vmatpush1.bf16.msra.mxu0 0
    %1788 = vmatprep.subr.bf16.mxu0 0
    %1789 = vmatpush1.bf16.msra.mxu0 0
    %1790 = vmatprep.subr.bf16.mxu0 0
    %1791 = vmatpush1.bf16.msra.mxu0 0
    %1792 = vmatprep.subr.bf16.mxu0 0
    %1793 = vmatpush1.bf16.msra.mxu0 0
    %1794 = vmatprep.subr.bf16.mxu0 0
    %1795 = vmatpush1.bf16.msra.mxu0 0
    %1796 = vmatprep.subr.bf16.mxu0 0
    %1797 = vmatpush1.bf16.msra.mxu0 0
    %1798 = vmatprep.mubr.bf16.mxu0 0
    %1799 = vmatmul.mubr.bf16.gmra.mrb[0].mxu0 %v1761
    %v1800 = vpop.f32.mrb[0].mxu0
    %v1801 = vadd.f32 0.0, %v1800
    %v1802 = vpop.f32.mrb[0].mxu0
    %v1803 = vpop.f32.mrb[0].mxu0
    %v1804 = vadd.f32 0.0, %v1803
    %v1805 = vpop.f32.mrb[0].mxu0
    %1806 = vdwg.mxu0
    %v1808 = vsel %vm450, %v1753, 0
    %v1811 = vsel %vm454, %v1757, 0
    %1813 = vmatprep.subr.bf16.mxu0 0
    %1814 = vmatpush1.bf16.msra.mxu0 %v1811
    %1815 = vmatprep.subr.bf16.mxu0 0
    %1816 = vmatpush1.bf16.msra.mxu0 0
    %1817 = vmatprep.subr.bf16.mxu0 0
    %1818 = vmatpush1.bf16.msra.mxu0 0
    %1819 = vmatprep.subr.bf16.mxu0 0
    %1820 = vmatpush1.bf16.msra.mxu0 0
    %1821 = vmatprep.subr.bf16.mxu0 0
    %1822 = vmatpush1.bf16.msra.mxu0 0
    %1823 = vmatprep.subr.bf16.mxu0 0
    %1824 = vmatpush1.bf16.msra.mxu0 0
    %1825 = vmatprep.subr.bf16.mxu0 0
    %1826 = vmatpush1.bf16.msra.mxu0 0
    %1827 = vmatprep.subr.bf16.mxu0 0
    %1828 = vmatpush1.bf16.msra.mxu0 0
    %1829 = vmatprep.subr.bf16.mxu0 0
    %1830 = vmatpush1.bf16.msra.mxu0 0
    %1831 = vmatprep.subr.bf16.mxu0 0
    %1832 = vmatpush1.bf16.msra.mxu0 0
    %1833 = vmatprep.subr.bf16.mxu0 0
    %1834 = vmatpush1.bf16.msra.mxu0 0
    %1835 = vmatprep.subr.bf16.mxu0 0
    %1836 = vmatpush1.bf16.msra.mxu0 0
    %1837 = vmatprep.subr.bf16.mxu0 0
    %1838 = vmatpush1.bf16.msra.mxu0 0
    %1839 = vmatprep.subr.bf16.mxu0 0
    %1840 = vmatpush1.bf16.msra.mxu0 0
    %1841 = vmatprep.subr.bf16.mxu0 0
    %1842 = vmatpush1.bf16.msra.mxu0 0
    %1843 = vmatprep.subr.bf16.mxu0 0
    %1844 = vmatpush1.bf16.msra.mxu0 0
    %1845 = vmatprep.mubr.bf16.mxu0 0
    %1846 = vmatmul.mubr.bf16.gmra.mrb[0].mxu0 %v1808
    %v1847 = vpop.f32.mrb[0].mxu0
    %v1848 = vadd.f32 0.0, %v1847
    %v1849 = vpop.f32.mrb[0].mxu0
    %v1850 = vpop.f32.mrb[0].mxu0
    %v1851 = vadd.f32 0.0, %v1850
    %v1852 = vpop.f32.mrb[0].mxu0
    %1853 = vdwg.mxu0
    %v1855 = vsel %vm450, %v1754, 0
    %v1858 = vsel %vm454, %v1758, 0
    %1860 = vmatprep.subr.bf16.mxu0 0
    %1861 = vmatpush1.bf16.msra.mxu0 %v1858
    %1862 = vmatprep.subr.bf16.mxu0 0
    %1863 = vmatpush1.bf16.msra.mxu0 0
    %1864 = vmatprep.subr.bf16.mxu0 0
    %1865 = vmatpush1.bf16.msra.mxu0 0
    %1866 = vmatprep.subr.bf16.mxu0 0
    %1867 = vmatpush1.bf16.msra.mxu0 0
    %1868 = vmatprep.subr.bf16.mxu0 0
    %1869 = vmatpush1.bf16.msra.mxu0 0
    %1870 = vmatprep.subr.bf16.mxu0 0
    %1871 = vmatpush1.bf16.msra.mxu0 0
    %1872 = vmatprep.subr.bf16.mxu0 0
    %1873 = vmatpush1.bf16.msra.mxu0 0
    %1874 = vmatprep.subr.bf16.mxu0 0
    %1875 = vmatpush1.bf16.msra.mxu0 0
    %1876 = vmatprep.subr.bf16.mxu0 0
    %1877 = vmatpush1.bf16.msra.mxu0 0
    %1878 = vmatprep.subr.bf16.mxu0 0
    %1879 = vmatpush1.bf16.msra.mxu0 0
    %1880 = vmatprep.subr.bf16.mxu0 0
    %1881 = vmatpush1.bf16.msra.mxu0 0
    %1882 = vmatprep.subr.bf16.mxu0 0
    %1883 = vmatpush1.bf16.msra.mxu0 0
    %1884 = vmatprep.subr.bf16.mxu0 0
    %1885 = vmatpush1.bf16.msra.mxu0 0
    %1886 = vmatprep.subr.bf16.mxu0 0
    %1887 = vmatpush1.bf16.msra.mxu0 0
    %1888 = vmatprep.subr.bf16.mxu0 0
    %1889 = vmatpush1.bf16.msra.mxu0 0
    %1890 = vmatprep.subr.bf16.mxu0 0
    %1891 = vmatpush1.bf16.msra.mxu0 0
    %1892 = vmatprep.mubr.bf16.mxu0 0
    %1893 = vmatmul.mubr.bf16.gmra.mrb[0].mxu0 %v1855
    %v1894 = vpop.f32.mrb[0].mxu0
    %v1895 = vadd.f32 0.0, %v1894
    %v1896 = vpop.f32.mrb[0].mxu0
    %v1897 = vpop.f32.mrb[0].mxu0
    %v1898 = vadd.f32 0.0, %v1897
    %v1899 = vpop.f32.mrb[0].mxu0
    %1900 = vdwg.mxu0
    %v1902 = vsel %vm450, %v1755, 0
    %v1905 = vsel %vm454, %v1759, 0
    %1907 = vmatprep.subr.bf16.mxu0 0
    %1908 = vmatpush1.bf16.msra.mxu0 %v1905
    %1909 = vmatprep.subr.bf16.mxu0 0
    %1910 = vmatpush1.bf16.msra.mxu0 0
    %1911 = vmatprep.subr.bf16.mxu0 0
    %1912 = vmatpush1.bf16.msra.mxu0 0
    %1913 = vmatprep.subr.bf16.mxu0 0
    %1914 = vmatpush1.bf16.msra.mxu0 0
    %1915 = vmatprep.subr.bf16.mxu0 0
    %1916 = vmatpush1.bf16.msra.mxu0 0
    %1917 = vmatprep.subr.bf16.mxu0 0
    %1918 = vmatpush1.bf16.msra.mxu0 0
    %1919 = vmatprep.subr.bf16.mxu0 0
    %1920 = vmatpush1.bf16.msra.mxu0 0
    %1921 = vmatprep.subr.bf16.mxu0 0
    %1922 = vmatpush1.bf16.msra.mxu0 0
    %1923 = vmatprep.subr.bf16.mxu0 0
    %1924 = vmatpush1.bf16.msra.mxu0 0
    %1925 = vmatprep.subr.bf16.mxu0 0
    %1926 = vmatpush1.bf16.msra.mxu0 0
    %1927 = vmatprep.subr.bf16.mxu0 0
    %1928 = vmatpush1.bf16.msra.mxu0 0
    %1929 = vmatprep.subr.bf16.mxu0 0
    %1930 = vmatpush1.bf16.msra.mxu0 0
    %1931 = vmatprep.subr.bf16.mxu0 0
    %1932 = vmatpush1.bf16.msra.mxu0 0
    %1933 = vmatprep.subr.bf16.mxu0 0
    %1934 = vmatpush1.bf16.msra.mxu0 0
    %1935 = vmatprep.subr.bf16.mxu0 0
    %1936 = vmatpush1.bf16.msra.mxu0 0
    %1937 = vmatprep.subr.bf16.mxu0 0
    %1938 = vmatpush1.bf16.msra.mxu0 0
    %1939 = vmatprep.mubr.bf16.mxu0 0
    %1940 = vmatmul.mubr.bf16.gmra.mrb[0].mxu0 %v1902
    %v1941 = vpop.f32.mrb[0].mxu0
    %v1942 = vadd.f32 0.0, %v1941
    %v1943 = vpop.f32.mrb[0].mxu0
    %v1944 = vpop.f32.mrb[0].mxu0
    %v1945 = vadd.f32 0.0, %v1944
    %v1946 = vpop.f32.mrb[0].mxu0
    %1947 = vdwg.mxu0
    %v1948 = vmul.f32 %v1801, 0.35355338
    %v1949 = vmul.f32 %v1804, 0.35355338
    %v1950 = vmul.f32 %v1848, 0.35355338
    %v1951 = vmul.f32 %v1851, 0.35355338
    %v1952 = vmul.f32 %v1895, 0.35355338
    %v1953 = vmul.f32 %v1898, 0.35355338
    %v1954 = vmul.f32 %v1942, 0.35355338
    %v1955 = vmul.f32 %v1945, 0.35355338
    %v1956 = vadd.f32 %v1948, %v43
    %v1957 = vadd.f32 %v1949, %v44
    %v1958 = vadd.f32 %v1950, %v43
    %v1959 = vadd.f32 %v1951, %v44
    %v1960 = vadd.f32 %v1952, %v43
    %v1961 = vadd.f32 %v1953, %v44
    %v1962 = vadd.f32 %v1954, %v43
    %v1963 = vadd.f32 %v1955, %v44
    %v1964 = vsel %vm220, %v1956, -inf
    %1965 = vmax.xlane.f32.xlu0 %v1964
    %v1966 = vpop.xlane.xlu0 %1965
    %v1967 = vsel %vm220, %v1957, -inf
    %1968 = vmax.xlane.f32.xlu0 %v1967
    %v1969 = vpop.xlane.xlu0 %1968
    %v1970 = vsel %vm220, %v1958, -inf
    %1971 = vmax.xlane.f32.xlu0 %v1970
    %v1972 = vpop.xlane.xlu0 %1971
    %v1973 = vsel %vm220, %v1959, -inf
    %1974 = vmax.xlane.f32.xlu0 %v1973
    %v1975 = vpop.xlane.xlu0 %1974
    %v1976 = vsel %vm220, %v1960, -inf
    %1977 = vmax.xlane.f32.xlu0 %v1976
    %v1978 = vpop.xlane.xlu0 %1977
    %v1979 = vsel %vm220, %v1961, -inf
    %1980 = vmax.xlane.f32.xlu0 %v1979
    %v1981 = vpop.xlane.xlu0 %1980
    %v1982 = vsel %vm220, %v1962, -inf
    %1983 = vmax.xlane.f32.xlu0 %v1982
    %v1984 = vpop.xlane.xlu0 %1983
    %v1985 = vsel %vm220, %v1963, -inf
    %1986 = vmax.xlane.f32.xlu0 %v1985
    %v1987 = vpop.xlane.xlu0 %1986
    %v1988 = vsub.f32 %v1956, %v1966
    %v1989 = vsub.f32 %v1957, %v1969
    %v1990 = vsub.f32 %v1958, %v1972
    %v1991 = vsub.f32 %v1959, %v1975
    %v1992 = vsub.f32 %v1960, %v1978
    %v1993 = vsub.f32 %v1961, %v1981
    %v1994 = vsub.f32 %v1962, %v1984
    %v1995 = vsub.f32 %v1963, %v1987
    %v1996 = vmul.f32 %v1988, 1.442695
    %v1997 = vpow.pop %v1996
    %v1998 = vmul.f32 %v1989, 1.442695
    %v1999 = vpow.pop %v1998
    %v2000 = vmul.f32 %v1990, 1.442695
    %v2001 = vpow.pop %v2000
    %v2002 = vmul.f32 %v1991, 1.442695
    %v2003 = vpow.pop %v2002
    %v2004 = vmul.f32 %v1992, 1.442695
    %v2005 = vpow.pop %v2004
    %v2006 = vmul.f32 %v1993, 1.442695
    %v2007 = vpow.pop %v2006
    %v2008 = vmul.f32 %v1994, 1.442695
    %v2009 = vpow.pop %v2008
    %v2010 = vmul.f32 %v1995, 1.442695
    %v2011 = vpow.pop %v2010
    %v2012 = vsel %vm220, %v1997, 0.0
    %2013 = vadd.xlane.f32.xlu0 %v2012
    %v2014 = vpop.xlane.xlu0 %2013
    %v2015 = vsel %vm220, %v1999, 0.0
    %2016 = vadd.xlane.f32.xlu0 %v2015
    %v2017 = vpop.xlane.xlu0 %2016
    %v2018 = vsel %vm220, %v2001, 0.0
    %2019 = vadd.xlane.f32.xlu0 %v2018
    %v2020 = vpop.xlane.xlu0 %2019
    %v2021 = vsel %vm220, %v2003, 0.0
    %2022 = vadd.xlane.f32.xlu0 %v2021
    %v2023 = vpop.xlane.xlu0 %2022
    %v2024 = vsel %vm220, %v2005, 0.0
    %2025 = vadd.xlane.f32.xlu0 %v2024
    %v2026 = vpop.xlane.xlu0 %2025
    %v2027 = vsel %vm220, %v2007, 0.0
    %2028 = vadd.xlane.f32.xlu0 %v2027
    %v2029 = vpop.xlane.xlu0 %2028
    %v2030 = vsel %vm220, %v2009, 0.0
    %2031 = vadd.xlane.f32.xlu0 %v2030
    %v2032 = vpop.xlane.xlu0 %2031
    %v2033 = vsel %vm220, %v2011, 0.0
    %2034 = vadd.xlane.f32.xlu0 %v2033
    %v2035 = vpop.xlane.xlu0 %2034
    %v2036 = vrcp.pop %v2014
    %v2037 = vrcp.pop %v2017
    %v2038 = vrcp.pop %v2020
    %v2039 = vrcp.pop %v2023
    %v2040 = vrcp.pop %v2026
    %v2041 = vrcp.pop %v2029
    %v2042 = vrcp.pop %v2032
    %v2043 = vrcp.pop %v2035
    %v2044 = vmul.f32 %v1997, %v2036
    %v2045 = vmul.f32 %v1999, %v2037
    %v2046 = vmul.f32 %v2001, %v2038
    %v2047 = vmul.f32 %v2003, %v2039
    %v2048 = vmul.f32 %v2005, %v2040
    %v2049 = vmul.f32 %v2007, %v2041
    %v2050 = vmul.f32 %v2009, %v2042
    %v2051 = vmul.f32 %v2011, %v2043
    %v2052 = vpack.c.bf16 %v2045, %v2044
    %v2053 = vpack.c.bf16 %v2047, %v2046
    %v2054 = vpack.c.bf16 %v2049, %v2048
    %v2055 = vpack.c.bf16 %v2051, %v2050
    %v2056 = vpack.c.bf16 %v1620, %v1620
    %v2057 = vpack.c.bf16 %v1621, %v1621
    %v2058 = vpack.c.bf16 %v1622, %v1622
    %v2059 = vpack.c.bf16 %v1623, %v1623
    %v2061 = vsel %vm220, %v2052, 0
    %v2064 = vsel %vm220, %v2056, 0
    %2066 = vmatprep.subr.bf16.mxu0 0
    %2067 = vmatpush1.bf16.xpose.msra.mxu0 %v2064
    %2068 = vmatprep.subr.bf16.mxu0 0
    %2069 = vmatpush1.bf16.xpose.msra.mxu0 0
    %2070 = vmatprep.subr.bf16.mxu0 0
    %2071 = vmatpush1.bf16.xpose.msra.mxu0 0
    %2072 = vmatprep.subr.bf16.mxu0 0
    %2073 = vmatpush1.bf16.xpose.msra.mxu0 0
    %2074 = vmatprep.subr.bf16.mxu0 0
    %2075 = vmatpush1.bf16.xpose.msra.mxu0 0
    %2076 = vmatprep.subr.bf16.mxu0 0
    %2077 = vmatpush1.bf16.xpose.msra.mxu0 0
    %2078 = vmatprep.subr.bf16.mxu0 0
    %2079 = vmatpush1.bf16.xpose.msra.mxu0 0
    %2080 = vmatprep.subr.bf16.mxu0 0
    %2081 = vmatpush1.bf16.xpose.msra.mxu0 0
    %2082 = vmatprep.subr.bf16.mxu0 0
    %2083 = vmatpush1.bf16.xpose.msra.mxu0 0
    %2084 = vmatprep.subr.bf16.mxu0 0
    %2085 = vmatpush1.bf16.xpose.msra.mxu0 0
    %2086 = vmatprep.subr.bf16.mxu0 0
    %2087 = vmatpush1.bf16.xpose.msra.mxu0 0
    %2088 = vmatprep.subr.bf16.mxu0 0
    %2089 = vmatpush1.bf16.xpose.msra.mxu0 0
    %2090 = vmatprep.subr.bf16.mxu0 0
    %2091 = vmatpush1.bf16.xpose.msra.mxu0 0
    %2092 = vmatprep.subr.bf16.mxu0 0
    %2093 = vmatpush1.bf16.xpose.msra.mxu0 0
    %2094 = vmatprep.subr.bf16.mxu0 0
    %2095 = vmatpush1.bf16.xpose.msra.mxu0 0
    %2096 = vmatprep.subr.bf16.mxu0 0
    %2097 = vmatpush1.bf16.xpose.msra.mxu0 0
    %2098 = vmatprep.mubr.bf16.mxu0 0
    %2099 = vmatmul.mubr.bf16.gmra.mrb[0].mxu0 %v2061
    %v2100 = vpop.f32.mrb[0].mxu0
    %v2101 = vadd.f32 0.0, %v2100
    %v2102 = vpop.f32.mrb[0].mxu0
    %v2103 = vpop.f32.mrb[0].mxu0
    %v2104 = vadd.f32 0.0, %v2103
    %v2105 = vpop.f32.mrb[0].mxu0
    %2106 = vdwg.mxu0
    %v2108 = vsel %vm220, %v2053, 0
    %v2111 = vsel %vm220, %v2057, 0
    %2113 = vmatprep.subr.bf16.mxu0 0
    %2114 = vmatpush1.bf16.xpose.msra.mxu0 %v2111
    %2115 = vmatprep.subr.bf16.mxu0 0
    %2116 = vmatpush1.bf16.xpose.msra.mxu0 0
    %2117 = vmatprep.subr.bf16.mxu0 0
    %2118 = vmatpush1.bf16.xpose.msra.mxu0 0
    %2119 = vmatprep.subr.bf16.mxu0 0
    %2120 = vmatpush1.bf16.xpose.msra.mxu0 0
    %2121 = vmatprep.subr.bf16.mxu0 0
    %2122 = vmatpush1.bf16.xpose.msra.mxu0 0
    %2123 = vmatprep.subr.bf16.mxu0 0
    %2124 = vmatpush1.bf16.xpose.msra.mxu0 0
    %2125 = vmatprep.subr.bf16.mxu0 0
    %2126 = vmatpush1.bf16.xpose.msra.mxu0 0
    %2127 = vmatprep.subr.bf16.mxu0 0
    %2128 = vmatpush1.bf16.xpose.msra.mxu0 0
    %2129 = vmatprep.subr.bf16.mxu0 0
    %2130 = vmatpush1.bf16.xpose.msra.mxu0 0
    %2131 = vmatprep.subr.bf16.mxu0 0
    %2132 = vmatpush1.bf16.xpose.msra.mxu0 0
    %2133 = vmatprep.subr.bf16.mxu0 0
    %2134 = vmatpush1.bf16.xpose.msra.mxu0 0
    %2135 = vmatprep.subr.bf16.mxu0 0
    %2136 = vmatpush1.bf16.xpose.msra.mxu0 0
    %2137 = vmatprep.subr.bf16.mxu0 0
    %2138 = vmatpush1.bf16.xpose.msra.mxu0 0
    %2139 = vmatprep.subr.bf16.mxu0 0
    %2140 = vmatpush1.bf16.xpose.msra.mxu0 0
    %2141 = vmatprep.subr.bf16.mxu0 0
    %2142 = vmatpush1.bf16.xpose.msra.mxu0 0
    %2143 = vmatprep.subr.bf16.mxu0 0
    %2144 = vmatpush1.bf16.xpose.msra.mxu0 0
    %2145 = vmatprep.mubr.bf16.mxu0 0
    %2146 = vmatmul.mubr.bf16.gmra.mrb[0].mxu0 %v2108
    %v2147 = vpop.f32.mrb[0].mxu0
    %v2148 = vadd.f32 0.0, %v2147
    %v2149 = vpop.f32.mrb[0].mxu0
    %v2150 = vpop.f32.mrb[0].mxu0
    %v2151 = vadd.f32 0.0, %v2150
    %v2152 = vpop.f32.mrb[0].mxu0
    %2153 = vdwg.mxu0
    %v2155 = vsel %vm220, %v2054, 0
    %v2158 = vsel %vm220, %v2058, 0
    %2160 = vmatprep.subr.bf16.mxu0 0
    %2161 = vmatpush1.bf16.xpose.msra.mxu0 %v2158
    %2162 = vmatprep.subr.bf16.mxu0 0
    %2163 = vmatpush1.bf16.xpose.msra.mxu0 0
    %2164 = vmatprep.subr.bf16.mxu0 0
    %2165 = vmatpush1.bf16.xpose.msra.mxu0 0
    %2166 = vmatprep.subr.bf16.mxu0 0
    %2167 = vmatpush1.bf16.xpose.msra.mxu0 0
    %2168 = vmatprep.subr.bf16.mxu0 0
    %2169 = vmatpush1.bf16.xpose.msra.mxu0 0
    %2170 = vmatprep.subr.bf16.mxu0 0
    %2171 = vmatpush1.bf16.xpose.msra.mxu0 0
    %2172 = vmatprep.subr.bf16.mxu0 0
    %2173 = vmatpush1.bf16.xpose.msra.mxu0 0
    %2174 = vmatprep.subr.bf16.mxu0 0
    %2175 = vmatpush1.bf16.xpose.msra.mxu0 0
    %2176 = vmatprep.subr.bf16.mxu0 0
    %2177 = vmatpush1.bf16.xpose.msra.mxu0 0
    %2178 = vmatprep.subr.bf16.mxu0 0
    %2179 = vmatpush1.bf16.xpose.msra.mxu0 0
    %2180 = vmatprep.subr.bf16.mxu0 0
    %2181 = vmatpush1.bf16.xpose.msra.mxu0 0
    %2182 = vmatprep.subr.bf16.mxu0 0
    %2183 = vmatpush1.bf16.xpose.msra.mxu0 0
    %2184 = vmatprep.subr.bf16.mxu0 0
    %2185 = vmatpush1.bf16.xpose.msra.mxu0 0
    %2186 = vmatprep.subr.bf16.mxu0 0
    %2187 = vmatpush1.bf16.xpose.msra.mxu0 0
    %2188 = vmatprep.subr.bf16.mxu0 0
    %2189 = vmatpush1.bf16.xpose.msra.mxu0 0
    %2190 = vmatprep.subr.bf16.mxu0 0
    %2191 = vmatpush1.bf16.xpose.msra.mxu0 0
    %2192 = vmatprep.mubr.bf16.mxu0 0
    %2193 = vmatmul.mubr.bf16.gmra.mrb[0].mxu0 %v2155
    %v2194 = vpop.f32.mrb[0].mxu0
    %v2195 = vadd.f32 0.0, %v2194
    %v2196 = vpop.f32.mrb[0].mxu0
    %v2197 = vpop.f32.mrb[0].mxu0
    %v2198 = vadd.f32 0.0, %v2197
    %v2199 = vpop.f32.mrb[0].mxu0
    %2200 = vdwg.mxu0
    %v2202 = vsel %vm220, %v2055, 0
    %v2205 = vsel %vm220, %v2059, 0
    %2207 = vmatprep.subr.bf16.mxu0 0
    %2208 = vmatpush1.bf16.xpose.msra.mxu0 %v2205
    %2209 = vmatprep.subr.bf16.mxu0 0
    %2210 = vmatpush1.bf16.xpose.msra.mxu0 0
    %2211 = vmatprep.subr.bf16.mxu0 0
    %2212 = vmatpush1.bf16.xpose.msra.mxu0 0
    %2213 = vmatprep.subr.bf16.mxu0 0
    %2214 = vmatpush1.bf16.xpose.msra.mxu0 0
    %2215 = vmatprep.subr.bf16.mxu0 0
    %2216 = vmatpush1.bf16.xpose.msra.mxu0 0
    %2217 = vmatprep.subr.bf16.mxu0 0
    %2218 = vmatpush1.bf16.xpose.msra.mxu0 0
    %2219 = vmatprep.subr.bf16.mxu0 0
    %2220 = vmatpush1.bf16.xpose.msra.mxu0 0
    %2221 = vmatprep.subr.bf16.mxu0 0
    %2222 = vmatpush1.bf16.xpose.msra.mxu0 0
    %2223 = vmatprep.subr.bf16.mxu0 0
    %2224 = vmatpush1.bf16.xpose.msra.mxu0 0
    %2225 = vmatprep.subr.bf16.mxu0 0
    %2226 = vmatpush1.bf16.xpose.msra.mxu0 0
    %2227 = vmatprep.subr.bf16.mxu0 0
    %2228 = vmatpush1.bf16.xpose.msra.mxu0 0
    %2229 = vmatprep.subr.bf16.mxu0 0
    %2230 = vmatpush1.bf16.xpose.msra.mxu0 0
    %2231 = vmatprep.subr.bf16.mxu0 0
    %2232 = vmatpush1.bf16.xpose.msra.mxu0 0
    %2233 = vmatprep.subr.bf16.mxu0 0
    %2234 = vmatpush1.bf16.xpose.msra.mxu0 0
    %2235 = vmatprep.subr.bf16.mxu0 0
    %2236 = vmatpush1.bf16.xpose.msra.mxu0 0
    %2237 = vmatprep.subr.bf16.mxu0 0
    %2238 = vmatpush1.bf16.xpose.msra.mxu0 0
    %2239 = vmatprep.mubr.bf16.mxu0 0
    %2240 = vmatmul.mubr.bf16.gmra.mrb[0].mxu0 %v2202
    %v2241 = vpop.f32.mrb[0].mxu0
    %v2242 = vadd.f32 0.0, %v2241
    %v2243 = vpop.f32.mrb[0].mxu0
    %v2244 = vpop.f32.mrb[0].mxu0
    %v2245 = vadd.f32 0.0, %v2244
    %v2246 = vpop.f32.mrb[0].mxu0
    %2247 = vdwg.mxu0
    %v2248 = vpack.c.bf16 %v2104, %v2101
    %v2249 = vpack.c.bf16 %v2151, %v2148
    %v2250 = vpack.c.bf16 %v2198, %v2195
    %v2251 = vpack.c.bf16 %v2245, %v2242
    %s2252 = scalar_lea.vmem %s6, 16
    %v2253 = vld [vmem:[%s2252] sm:$0xf]
    %v2254 = vld [vmem:[%s2252 + $0x4] sm:$0xf]
    %v2255 = vld [vmem:[%s2252 + $0x8] sm:$0xf]
    %v2256 = vld [vmem:[%s2252 + $0xc] sm:$0xf]
    %v2258 = vsel %vm450, %v2248, 0
    %v2261 = vsel %vm454, %v2253, 0
    %2263 = vmatprep.subr.bf16.mxu0 0
    %2264 = vmatpush1.bf16.msra.mxu0 %v2261
    %2265 = vmatprep.subr.bf16.mxu0 0
    %2266 = vmatpush1.bf16.msra.mxu0 0
    %2267 = vmatprep.subr.bf16.mxu0 0
    %2268 = vmatpush1.bf16.msra.mxu0 0
    %2269 = vmatprep.subr.bf16.mxu0 0
    %2270 = vmatpush1.bf16.msra.mxu0 0
    %2271 = vmatprep.subr.bf16.mxu0 0
    %2272 = vmatpush1.bf16.msra.mxu0 0
    %2273 = vmatprep.subr.bf16.mxu0 0
    %2274 = vmatpush1.bf16.msra.mxu0 0
    %2275 = vmatprep.subr.bf16.mxu0 0
    %2276 = vmatpush1.bf16.msra.mxu0 0
    %2277 = vmatprep.subr.bf16.mxu0 0
    %2278 = vmatpush1.bf16.msra.mxu0 0
    %2279 = vmatprep.subr.bf16.mxu0 0
    %2280 = vmatpush1.bf16.msra.mxu0 0
    %2281 = vmatprep.subr.bf16.mxu0 0
    %2282 = vmatpush1.bf16.msra.mxu0 0
    %2283 = vmatprep.subr.bf16.mxu0 0
    %2284 = vmatpush1.bf16.msra.mxu0 0
    %2285 = vmatprep.subr.bf16.mxu0 0
    %2286 = vmatpush1.bf16.msra.mxu0 0
    %2287 = vmatprep.subr.bf16.mxu0 0
    %2288 = vmatpush1.bf16.msra.mxu0 0
    %2289 = vmatprep.subr.bf16.mxu0 0
    %2290 = vmatpush1.bf16.msra.mxu0 0
    %2291 = vmatprep.subr.bf16.mxu0 0
    %2292 = vmatpush1.bf16.msra.mxu0 0
    %2293 = vmatprep.subr.bf16.mxu0 0
    %2294 = vmatpush1.bf16.msra.mxu0 0
    %2295 = vmatprep.mubr.bf16.mxu0 0
    %2296 = vmatmul.mubr.bf16.gmra.mrb[0].mxu0 %v2258
    %v2297 = vpop.f32.mrb[0].mxu0
    %v2298 = vadd.f32 0.0, %v2297
    %v2299 = vpop.f32.mrb[0].mxu0
    %v2300 = vpop.f32.mrb[0].mxu0
    %v2301 = vadd.f32 0.0, %v2300
    %v2302 = vpop.f32.mrb[0].mxu0
    %2303 = vdwg.mxu0
    %v2305 = vsel %vm450, %v2249, 0
    %v2308 = vsel %vm454, %v2254, 0
    %2310 = vmatprep.subr.bf16.mxu0 0
    %2311 = vmatpush1.bf16.msra.mxu0 %v2308
    %2312 = vmatprep.subr.bf16.mxu0 0
    %2313 = vmatpush1.bf16.msra.mxu0 0
    %2314 = vmatprep.subr.bf16.mxu0 0
    %2315 = vmatpush1.bf16.msra.mxu0 0
    %2316 = vmatprep.subr.bf16.mxu0 0
    %2317 = vmatpush1.bf16.msra.mxu0 0
    %2318 = vmatprep.subr.bf16.mxu0 0
    %2319 = vmatpush1.bf16.msra.mxu0 0
    %2320 = vmatprep.subr.bf16.mxu0 0
    %2321 = vmatpush1.bf16.msra.mxu0 0
    %2322 = vmatprep.subr.bf16.mxu0 0
    %2323 = vmatpush1.bf16.msra.mxu0 0
    %2324 = vmatprep.subr.bf16.mxu0 0
    %2325 = vmatpush1.bf16.msra.mxu0 0
    %2326 = vmatprep.subr.bf16.mxu0 0
    %2327 = vmatpush1.bf16.msra.mxu0 0
    %2328 = vmatprep.subr.bf16.mxu0 0
    %2329 = vmatpush1.bf16.msra.mxu0 0
    %2330 = vmatprep.subr.bf16.mxu0 0
    %2331 = vmatpush1.bf16.msra.mxu0 0
    %2332 = vmatprep.subr.bf16.mxu0 0
    %2333 = vmatpush1.bf16.msra.mxu0 0
    %2334 = vmatprep.subr.bf16.mxu0 0
    %2335 = vmatpush1.bf16.msra.mxu0 0
    %2336 = vmatprep.subr.bf16.mxu0 0
    %2337 = vmatpush1.bf16.msra.mxu0 0
    %2338 = vmatprep.subr.bf16.mxu0 0
    %2339 = vmatpush1.bf16.msra.mxu0 0
    %2340 = vmatprep.subr.bf16.mxu0 0
    %2341 = vmatpush1.bf16.msra.mxu0 0
    %2342 = vmatprep.mubr.bf16.mxu0 0
    %2343 = vmatmul.mubr.bf16.gmra.mrb[0].mxu0 %v2305
    %v2344 = vpop.f32.mrb[0].mxu0
    %v2345 = vadd.f32 0.0, %v2344
    %v2346 = vpop.f32.mrb[0].mxu0
    %v2347 = vpop.f32.mrb[0].mxu0
    %v2348 = vadd.f32 0.0, %v2347
    %v2349 = vpop.f32.mrb[0].mxu0
    %2350 = vdwg.mxu0
    %v2352 = vsel %vm450, %v2250, 0
    %v2355 = vsel %vm454, %v2255, 0
    %2357 = vmatprep.subr.bf16.mxu0 0
    %2358 = vmatpush1.bf16.msra.mxu0 %v2355
    %2359 = vmatprep.subr.bf16.mxu0 0
    %2360 = vmatpush1.bf16.msra.mxu0 0
    %2361 = vmatprep.subr.bf16.mxu0 0
    %2362 = vmatpush1.bf16.msra.mxu0 0
    %2363 = vmatprep.subr.bf16.mxu0 0
    %2364 = vmatpush1.bf16.msra.mxu0 0
    %2365 = vmatprep.subr.bf16.mxu0 0
    %2366 = vmatpush1.bf16.msra.mxu0 0
    %2367 = vmatprep.subr.bf16.mxu0 0
    %2368 = vmatpush1.bf16.msra.mxu0 0
    %2369 = vmatprep.subr.bf16.mxu0 0
    %2370 = vmatpush1.bf16.msra.mxu0 0
    %2371 = vmatprep.subr.bf16.mxu0 0
    %2372 = vmatpush1.bf16.msra.mxu0 0
    %2373 = vmatprep.subr.bf16.mxu0 0
    %2374 = vmatpush1.bf16.msra.mxu0 0
    %2375 = vmatprep.subr.bf16.mxu0 0
    %2376 = vmatpush1.bf16.msra.mxu0 0
    %2377 = vmatprep.subr.bf16.mxu0 0
    %2378 = vmatpush1.bf16.msra.mxu0 0
    %2379 = vmatprep.subr.bf16.mxu0 0
    %2380 = vmatpush1.bf16.msra.mxu0 0
    %2381 = vmatprep.subr.bf16.mxu0 0
    %2382 = vmatpush1.bf16.msra.mxu0 0
    %2383 = vmatprep.subr.bf16.mxu0 0
    %2384 = vmatpush1.bf16.msra.mxu0 0
    %2385 = vmatprep.subr.bf16.mxu0 0
    %2386 = vmatpush1.bf16.msra.mxu0 0
    %2387 = vmatprep.subr.bf16.mxu0 0
    %2388 = vmatpush1.bf16.msra.mxu0 0
    %2389 = vmatprep.mubr.bf16.mxu0 0
    %2390 = vmatmul.mubr.bf16.gmra.mrb[0].mxu0 %v2352
    %v2391 = vpop.f32.mrb[0].mxu0
    %v2392 = vadd.f32 0.0, %v2391
    %v2393 = vpop.f32.mrb[0].mxu0
    %v2394 = vpop.f32.mrb[0].mxu0
    %v2395 = vadd.f32 0.0, %v2394
    %v2396 = vpop.f32.mrb[0].mxu0
    %2397 = vdwg.mxu0
    %v2399 = vsel %vm450, %v2251, 0
    %v2402 = vsel %vm454, %v2256, 0
    %2404 = vmatprep.subr.bf16.mxu0 0
    %2405 = vmatpush1.bf16.msra.mxu0 %v2402
    %2406 = vmatprep.subr.bf16.mxu0 0
    %2407 = vmatpush1.bf16.msra.mxu0 0
    %2408 = vmatprep.subr.bf16.mxu0 0
    %2409 = vmatpush1.bf16.msra.mxu0 0
    %2410 = vmatprep.subr.bf16.mxu0 0
    %2411 = vmatpush1.bf16.msra.mxu0 0
    %2412 = vmatprep.subr.bf16.mxu0 0
    %2413 = vmatpush1.bf16.msra.mxu0 0
    %2414 = vmatprep.subr.bf16.mxu0 0
    %2415 = vmatpush1.bf16.msra.mxu0 0
    %2416 = vmatprep.subr.bf16.mxu0 0
    %2417 = vmatpush1.bf16.msra.mxu0 0
    %2418 = vmatprep.subr.bf16.mxu0 0
    %2419 = vmatpush1.bf16.msra.mxu0 0
    %2420 = vmatprep.subr.bf16.mxu0 0
    %2421 = vmatpush1.bf16.msra.mxu0 0
    %2422 = vmatprep.subr.bf16.mxu0 0
    %2423 = vmatpush1.bf16.msra.mxu0 0
    %2424 = vmatprep.subr.bf16.mxu0 0
    %2425 = vmatpush1.bf16.msra.mxu0 0
    %2426 = vmatprep.subr.bf16.mxu0 0
    %2427 = vmatpush1.bf16.msra.mxu0 0
    %2428 = vmatprep.subr.bf16.mxu0 0
    %2429 = vmatpush1.bf16.msra.mxu0 0
    %2430 = vmatprep.subr.bf16.mxu0 0
    %2431 = vmatpush1.bf16.msra.mxu0 0
    %2432 = vmatprep.subr.bf16.mxu0 0
    %2433 = vmatpush1.bf16.msra.mxu0 0
    %2434 = vmatprep.subr.bf16.mxu0 0
    %2435 = vmatpush1.bf16.msra.mxu0 0
    %2436 = vmatprep.mubr.bf16.mxu0 0
    %2437 = vmatmul.mubr.bf16.gmra.mrb[0].mxu0 %v2399
    %v2438 = vpop.f32.mrb[0].mxu0
    %v2439 = vadd.f32 0.0, %v2438
    %v2440 = vpop.f32.mrb[0].mxu0
    %v2441 = vpop.f32.mrb[0].mxu0
    %v2442 = vadd.f32 0.0, %v2441
    %v2443 = vpop.f32.mrb[0].mxu0
    %2444 = vdwg.mxu0
    %v2445 = vsel %vm49, %v2298, 0.0
    %v2446 = vsel %vm49, %v2345, 0.0
    %v2447 = vadd.f32 %v2445, %v2446
    %v2448 = vsel %vm49, %v2392, 0.0
    %v2449 = vadd.f32 %v2447, %v2448
    %v2450 = vsel %vm49, %v2439, 0.0
    %v2451 = vadd.f32 %v2449, %v2450
    %v2452 = vsel %vm49, %v2301, 0.0
    %v2453 = vsel %vm49, %v2348, 0.0
    %v2454 = vadd.f32 %v2452, %v2453
    %v2455 = vsel %vm49, %v2395, 0.0
    %v2456 = vadd.f32 %v2454, %v2455
    %v2457 = vsel %vm49, %v2442, 0.0
    %v2458 = vadd.f32 %v2456, %v2457
    %v2459 = vlaneseq
    %v2460 = vshrl.u32 %v2459, 7
    %v2461 = vsub.s32 1, %v2460
    %v2462 = vrot.slane %v1402, %v2461
    %v2463 = vadd.f32 %v2451, %v2462
    %v2464 = vadd.f32 %v2458, %v2462
    %v2465 = vadd.f32 %v2463, %v1399
    %v2466 = vadd.f32 %v2464, %v1400
    %v2467 = vsel %vm49, %v2465, 0.0
    %2468 = vadd.xlane.f32.xlu0 %v2467
    %v2469 = vpop.xlane.xlu0 %2468
    %v2470 = vsel %vm49, %v2466, 0.0
    %2471 = vadd.xlane.f32.xlu0 %v2470
    %v2472 = vpop.xlane.xlu0 %2471
    %v2473 = vmul.f32 %v2469, %v56
    %v2474 = vmul.f32 %v2472, %v56
    %v2475 = vsub.f32 %v2465, %v2473
    %v2476 = vsub.f32 %v2466, %v2474
    %v2477 = vmul.f32 %v2475, %v2475
    %v2478 = vmul.f32 %v2476, %v2476
    %v2479 = vsel %vm49, %v2477, 0.0
    %2480 = vadd.xlane.f32.xlu0 %v2479
    %v2481 = vpop.xlane.xlu0 %2480
    %v2482 = vsel %vm49, %v2478, 0.0
    %2483 = vadd.xlane.f32.xlu0 %v2482
    %v2484 = vpop.xlane.xlu0 %2483
    %v2485 = vmul.f32 %v2481, %v56
    %v2486 = vmul.f32 %v2484, %v56
    %v2487 = vadd.f32 %v2485, 1e-12
    %v2488 = vadd.f32 %v2486, 1e-12
    %v2489 = vrsqrt.pop %v2487
    %v2490 = vrsqrt.pop %v2488
    %v2491 = vmul.f32 %v2475, %v2489
    %v2492 = vmul.f32 %v2476, %v2490
    %v2493 = vlaneseq
    %v2494 = vshrl.u32 %v2493, 7
    %v2495 = vsub.s32 2, %v2494
    %v2496 = vrot.slane %v1402, %v2495
    %v2497 = vmul.f32 %v2491, %v2496
    %v2498 = vmul.f32 %v2492, %v2496
    %v2499 = vlaneseq
    %v2500 = vshrl.u32 %v2499, 7
    %v2501 = vsub.s32 3, %v2500
    %v2502 = vrot.slane %v1402, %v2501
    %v2503 = vadd.f32 %v2497, %v2502
    %v2504 = vadd.f32 %v2498, %v2502
    %v2505 = vpack.c.bf16 %v2504, %v2503
    %s2506 = scalar_lea.vmem %s7, 16
    %v2507 = vld [vmem:[%s2506] sm:$0xf]
    %v2508 = vld [vmem:[%s2506 + $0x4] sm:$0xf]
    %v2509 = vld [vmem:[%s2506 + $0x8] sm:$0xf]
    %v2510 = vld [vmem:[%s2506 + $0xc] sm:$0xf]
    %v2511 = vlaneseq
    %v2512 = vshrl.u32 %v2511, 7
    %v2513 = vsub.s32 4, %v2512
    %v2514 = vrot.slane %v1402, %v2513
    %v2519 = vunpack.c.l.b16 %v2507
    %v2520 = vunpack.c.l.b16 %v2508
    %v2521 = vunpack.c.l.b16 %v2509
    %v2522 = vunpack.c.l.b16 %v2510
    %v2523 = vpack.c.b16 %v2520, %v2519
    %v2524 = vpack.c.b16 %v2522, %v2521
    %v2528 = vsel %vm49, %v2505, 0
    %2530 = vmatprep.subr.bf16.mxu0 0
    %2531 = vmatpush1.bf16.msra.mxu0 %v2523
    %2532 = vmatprep.subr.bf16.mxu0 0
    %2533 = vmatpush1.bf16.msra.mxu0 %v2524
    %2534 = vmatprep.subr.bf16.mxu0 0
    %2535 = vmatpush1.bf16.msra.mxu0 0
    %2536 = vmatprep.subr.bf16.mxu0 0
    %2537 = vmatpush1.bf16.msra.mxu0 0
    %2538 = vmatprep.subr.bf16.mxu0 0
    %2539 = vmatpush1.bf16.msra.mxu0 0
    %2540 = vmatprep.subr.bf16.mxu0 0
    %2541 = vmatpush1.bf16.msra.mxu0 0
    %2542 = vmatprep.subr.bf16.mxu0 0
    %2543 = vmatpush1.bf16.msra.mxu0 0
    %2544 = vmatprep.subr.bf16.mxu0 0
    %2545 = vmatpush1.bf16.msra.mxu0 0
    %2546 = vmatprep.subr.bf16.mxu0 0
    %2547 = vmatpush1.bf16.msra.mxu0 0
    %2548 = vmatprep.subr.bf16.mxu0 0
    %2549 = vmatpush1.bf16.msra.mxu0 0
    %2550 = vmatprep.subr.bf16.mxu0 0
    %2551 = vmatpush1.bf16.msra.mxu0 0
    %2552 = vmatprep.subr.bf16.mxu0 0
    %2553 = vmatpush1.bf16.msra.mxu0 0
    %2554 = vmatprep.subr.bf16.mxu0 0
    %2555 = vmatpush1.bf16.msra.mxu0 0
    %2556 = vmatprep.subr.bf16.mxu0 0
    %2557 = vmatpush1.bf16.msra.mxu0 0
    %2558 = vmatprep.subr.bf16.mxu0 0
    %2559 = vmatpush1.bf16.msra.mxu0 0
    %2560 = vmatprep.subr.bf16.mxu0 0
    %2561 = vmatpush1.bf16.msra.mxu0 0
    %2562 = vmatprep.mubr.bf16.mxu0 0
    %2563 = vmatmul.mubr.bf16.gmra.mrb[0].mxu0 %v2528
    %v2564 = vpop.f32.mrb[0].mxu0
    %v2565 = vadd.f32 %v2514, %v2564
    %v2566 = vpop.f32.mrb[0].mxu0
    %v2567 = vpop.f32.mrb[0].mxu0
    %v2568 = vadd.f32 %v2514, %v2567
    %v2569 = vpop.f32.mrb[0].mxu0
    %2570 = vdwg.mxu0
    %v2571 = vmul.f32 %v2565, 0.5
    %v2572 = vmul.f32 %v2568, 0.5
    %v2573 = vmul.f32 %v2565, 0.044715
    %v2574 = vmul.f32 %v2568, 0.044715
    %v2575 = vmul.f32 %v2573, %v2565
    %v2576 = vmul.f32 %v2574, %v2568
    %v2577 = vmul.f32 %v2575, %v2565
    %v2578 = vmul.f32 %v2576, %v2568
    %v2579 = vadd.f32 %v2565, %v2577
    %v2580 = vadd.f32 %v2568, %v2578
    %v2581 = vmul.f32 %v2579, 0.7978846
    %v2582 = vmul.f32 %v2580, 0.7978846
    %v2583 = vtanh.pop %v2581
    %v2584 = vtanh.pop %v2582
    %v2585 = vadd.f32 %v2583, 1.0
    %v2586 = vadd.f32 %v2584, 1.0
    %v2587 = vmul.f32 %v2571, %v2585
    %v2588 = vmul.f32 %v2572, %v2586
    %v2589 = vpack.c.bf16 %v2588, %v2587
    %s2590 = scalar_lea.vmem %s8, 32
    %v2591 = vld [vmem:[%s2590] sm:$0xf]
    %v2592 = vld [vmem:[%s2590 + $0x4] sm:$0xf]
    %v2593 = vld [vmem:[%s2590 + $0x8] sm:$0xf]
    %v2594 = vld [vmem:[%s2590 + $0xc] sm:$0xf]
    %v2595 = vld [vmem:[%s2590 + $0x10] sm:$0xf]
    %v2596 = vld [vmem:[%s2590 + $0x14] sm:$0xf]
    %v2597 = vld [vmem:[%s2590 + $0x18] sm:$0xf]
    %v2598 = vld [vmem:[%s2590 + $0x1c] sm:$0xf]
    %v2599 = vlaneseq
    %v2600 = vshrl.u32 %v2599, 7
    %v2601 = vsub.s32 5, %v2600
    %v2602 = vrot.slane %v1402, %v2601
    %v2611 = vunpack.c.l.b16 %v2591
    %v2612 = vunpack.c.l.b16 %v2592
    %v2613 = vunpack.c.l.b16 %v2593
    %v2614 = vunpack.c.l.b16 %v2594
    %v2615 = vunpack.c.l.b16 %v2595
    %v2616 = vunpack.c.l.b16 %v2596
    %v2617 = vunpack.c.l.b16 %v2597
    %v2618 = vunpack.c.l.b16 %v2598
    %v2619 = vpack.c.b16 %v2612, %v2611
    %v2620 = vpack.c.b16 %v2614, %v2613
    %v2621 = vpack.c.b16 %v2616, %v2615
    %v2622 = vpack.c.b16 %v2618, %v2617
    %v2628 = vsel %vm1316, %v2589, 0
    %2630 = vmatprep.subr.bf16.mxu0 0
    %2631 = vmatpush1.bf16.msra.mxu0 %v2619
    %2632 = vmatprep.subr.bf16.mxu0 0
    %2633 = vmatpush1.bf16.msra.mxu0 %v2620
    %2634 = vmatprep.subr.bf16.mxu0 0
    %2635 = vmatpush1.bf16.msra.mxu0 %v2621
    %2636 = vmatprep.subr.bf16.mxu0 0
    %2637 = vmatpush1.bf16.msra.mxu0 %v2622
    %2638 = vmatprep.subr.bf16.mxu0 0
    %2639 = vmatpush1.bf16.msra.mxu0 0
    %2640 = vmatprep.subr.bf16.mxu0 0
    %2641 = vmatpush1.bf16.msra.mxu0 0
    %2642 = vmatprep.subr.bf16.mxu0 0
    %2643 = vmatpush1.bf16.msra.mxu0 0
    %2644 = vmatprep.subr.bf16.mxu0 0
    %2645 = vmatpush1.bf16.msra.mxu0 0
    %2646 = vmatprep.subr.bf16.mxu0 0
    %2647 = vmatpush1.bf16.msra.mxu0 0
    %2648 = vmatprep.subr.bf16.mxu0 0
    %2649 = vmatpush1.bf16.msra.mxu0 0
    %2650 = vmatprep.subr.bf16.mxu0 0
    %2651 = vmatpush1.bf16.msra.mxu0 0
    %2652 = vmatprep.subr.bf16.mxu0 0
    %2653 = vmatpush1.bf16.msra.mxu0 0
    %2654 = vmatprep.subr.bf16.mxu0 0
    %2655 = vmatpush1.bf16.msra.mxu0 0
    %2656 = vmatprep.subr.bf16.mxu0 0
    %2657 = vmatpush1.bf16.msra.mxu0 0
    %2658 = vmatprep.subr.bf16.mxu0 0
    %2659 = vmatpush1.bf16.msra.mxu0 0
    %2660 = vmatprep.subr.bf16.mxu0 0
    %2661 = vmatpush1.bf16.msra.mxu0 0
    %2662 = vmatprep.mubr.bf16.mxu0 0
    %2663 = vmatmul.mubr.bf16.gmra.mrb[0].mxu0 %v2628
    %v2664 = vpop.f32.mrb[0].mxu0
    %v2665 = vadd.f32 %v2602, %v2664
    %v2666 = vpop.f32.mrb[0].mxu0
    %v2667 = vpop.f32.mrb[0].mxu0
    %v2668 = vadd.f32 %v2602, %v2667
    %v2669 = vpop.f32.mrb[0].mxu0
    %2670 = vdwg.mxu0
    %v2671 = vadd.f32 %v2665, %v2503
    %v2672 = vadd.f32 %v2668, %v2504
    %v2673 = vsel %vm49, %v2671, 0.0
    %2674 = vadd.xlane.f32.xlu0 %v2673
    %v2675 = vpop.xlane.xlu0 %2674
    %v2676 = vsel %vm49, %v2672, 0.0
    %2677 = vadd.xlane.f32.xlu0 %v2676
    %v2678 = vpop.xlane.xlu0 %2677
    %v2679 = vmul.f32 %v2675, %v56
    %v2680 = vmul.f32 %v2678, %v56
    %v2681 = vsub.f32 %v2671, %v2679
    %v2682 = vsub.f32 %v2672, %v2680
    %v2683 = vmul.f32 %v2681, %v2681
    %v2684 = vmul.f32 %v2682, %v2682
    %v2685 = vsel %vm49, %v2683, 0.0
    %2686 = vadd.xlane.f32.xlu0 %v2685
    %v2687 = vpop.xlane.xlu0 %2686
    %v2688 = vsel %vm49, %v2684, 0.0
    %2689 = vadd.xlane.f32.xlu0 %v2688
    %v2690 = vpop.xlane.xlu0 %2689
    %v2691 = vmul.f32 %v2687, %v56
    %v2692 = vmul.f32 %v2690, %v56
    %v2693 = vadd.f32 %v2691, 1e-12
    %v2694 = vadd.f32 %v2692, 1e-12
    %v2695 = vrsqrt.pop %v2693
    %v2696 = vrsqrt.pop %v2694
    %v2697 = vmul.f32 %v2681, %v2695
    %v2698 = vmul.f32 %v2682, %v2696
    %v2699 = vlaneseq
    %v2700 = vshrl.u32 %v2699, 7
    %v2701 = vsub.s32 6, %v2700
    %v2702 = vrot.slane %v1402, %v2701
    %v2703 = vmul.f32 %v2697, %v2702
    %v2704 = vmul.f32 %v2698, %v2702
    %v2705 = vlaneseq
    %v2706 = vshrl.u32 %v2705, 7
    %v2707 = vsub.s32 7, %v2706
    %v2708 = vrot.slane %v1402, %v2707
    %v2709 = vadd.f32 %v2703, %v2708
    %v2710 = vadd.f32 %v2704, %v2708
    %v2712 = vrot.slane %v2710, 7
    %vm2714 = vcmask 1040384
    %v2715 = vsel %vm2714, %v2709, %v2712
    %v2716 = vpack.c.bf16 %v2715, %v2715
    %v2717 = vld [vmem:[%s10] sm:$0xf]
    %v2718 = vld [vmem:[%s10 + $0x4] sm:$0xf]
    %v2719 = vld [vmem:[%s10 + $0x8] sm:$0xf]
    %v2720 = vld [vmem:[%s10 + $0xc] sm:$0xf]
    %v2721 = vld [vmem:[%s11] sm:$0x1]
    %v2723 = vlaneseq
    %v2724 = vshrl.u32 %v2723, 7
    %v2725 = vsub.s32 0, %v2724
    %v2726 = vrot.slane %v2721, %v2725
    %v2732 = vunpack.c.l.b16 %v2717
    %v2733 = vunpack.c.l.b16 %v2718
    %v2734 = vunpack.c.l.b16 %v2719
    %v2735 = vunpack.c.l.b16 %v2720
    %v2736 = vpack.c.b16 %v2733, %v2732
    %v2737 = vpack.c.b16 %v2735, %v2734
    %v2741 = vsel %vm49, %v2716, 0
    %2743 = vmatprep.subr.bf16.mxu0 0
    %2744 = vmatpush1.bf16.msra.mxu0 %v2736
    %2745 = vmatprep.subr.bf16.mxu0 0
    %2746 = vmatpush1.bf16.msra.mxu0 %v2737
    %2747 = vmatprep.subr.bf16.mxu0 0
    %2748 = vmatpush1.bf16.msra.mxu0 0
    %2749 = vmatprep.subr.bf16.mxu0 0
    %2750 = vmatpush1.bf16.msra.mxu0 0
    %2751 = vmatprep.subr.bf16.mxu0 0
    %2752 = vmatpush1.bf16.msra.mxu0 0
    %2753 = vmatprep.subr.bf16.mxu0 0
    %2754 = vmatpush1.bf16.msra.mxu0 0
    %2755 = vmatprep.subr.bf16.mxu0 0
    %2756 = vmatpush1.bf16.msra.mxu0 0
    %2757 = vmatprep.subr.bf16.mxu0 0
    %2758 = vmatpush1.bf16.msra.mxu0 0
    %2759 = vmatprep.subr.bf16.mxu0 0
    %2760 = vmatpush1.bf16.msra.mxu0 0
    %2761 = vmatprep.subr.bf16.mxu0 0
    %2762 = vmatpush1.bf16.msra.mxu0 0
    %2763 = vmatprep.subr.bf16.mxu0 0
    %2764 = vmatpush1.bf16.msra.mxu0 0
    %2765 = vmatprep.subr.bf16.mxu0 0
    %2766 = vmatpush1.bf16.msra.mxu0 0
    %2767 = vmatprep.subr.bf16.mxu0 0
    %2768 = vmatpush1.bf16.msra.mxu0 0
    %2769 = vmatprep.subr.bf16.mxu0 0
    %2770 = vmatpush1.bf16.msra.mxu0 0
    %2771 = vmatprep.subr.bf16.mxu0 0
    %2772 = vmatpush1.bf16.msra.mxu0 0
    %2773 = vmatprep.subr.bf16.mxu0 0
    %2774 = vmatpush1.bf16.msra.mxu0 0
    %2775 = vmatprep.mubr.bf16.mxu0 0
    %2776 = vmatmul.mubr.bf16.gmra.mrb[0].mxu0 %v2741
    %v2777 = vpop.f32.mrb[0].mxu0
    %v2778 = vadd.f32 %v2726, %v2777
    %v2779 = vpop.f32.mrb[0].mxu0
    %v2780 = vpop.f32.mrb[0].mxu0
    %v2781 = vpop.f32.mrb[0].mxu0
    %2782 = vdwg.mxu0
    %2783 = vst [vmem:[#allocation2] sm:$0x3] %v2778
    // Predicated region
    $region50: #{tpu_custom_call.1} parent=1 // pred_check
      _
    $region51: #{tpu_custom_call.1} parent=1 // pred_check_branch
      %2785 = sbr.rel (0) target = $region53
    $region52: #{tpu_custom_call.1} parent=1 // pred_region
      %s2787 = ssub.s32 32, 32
      %2788 = vsyncadd [#allocation3], %s2787
      %s2790 = sshll.u32 [#allocation2], 4
      %s2791 = int_to_ptr.vmem [resolvable:$true] %s2790
      %2793 = dma.vmem_to_hbm [thread:$0]  %s2791, 32, %s12, [#allocation3]
    $region53: #{tpu_custom_call.1} parent=1 // pred_fallthru
      _
    // Predicated region
    $region54: #{tpu_custom_call.1} parent=1 // pred_check
      _
    $region55: #{tpu_custom_call.1} parent=1 // pred_check_branch
      %2795 = sbr.rel (0) target = $region57
    $region56: #{tpu_custom_call.1} parent=1 // pred_region
      %2796 = dma.done [#allocation3], 32
    $region57: #{tpu_custom_call.1} parent=1 // pred_fallthru
      _
    %2797 = vsyncpa [#allocation3], 1

</llo_original>
